<compile_context>
chip_gen: v6e
topology: v6e:2x2x1
jax: 0.10.0
libtpu: 0.0.40
codegen_flags: <defaults>
</compile_context>

<pallas_src>
import jax
import jax.numpy as jnp
from jax.experimental import pallas as pl
from jax.experimental.pallas import tpu as pltpu

VOCAB = 50
EMBED = 16
HIDDEN = 32
OUTPUT = 4
T = 8

# f32 sublane tile; raise to 128 (v5e MXU) / 256 (v6e/v7x MXU) when batching for real.
B_TILE = 8


def textclass_kernel(ids_ref, emb_ref,
                     wih0_ref, whh0_ref, b0_ref,
                     wih1_ref, whh1_ref, b1_ref,
                     attn_w_ref, attn_b_ref,
                     fc_w_ref, fc_b_ref,
                     out_ref,
                     h1_scr):
    H = HIDDEN
    n_rows = T * B_TILE

    # ---- Embedding gather as a one-hot MXU matmul; rows are time-major (row = t*B + b).
    # TODO(synk): switch to scalar-prefetched id gathers if VOCAB or T*B_TILE grows large.
    ids = ids_ref[0]                                                      # [T*B, 1] int32
    vocab_iota = jax.lax.broadcasted_iota(jnp.int32, (n_rows, VOCAB), 1)
    onehot = (ids == vocab_iota).astype(jnp.float32)                      # [T*B, V]
    emb = jnp.dot(onehot, emb_ref[...], preferred_element_type=jnp.float32)  # [T*B, E]

    # ---- Layer-0 input projection hoisted out of the recurrence (bias folded in).
    gates_x0 = (jnp.dot(emb, wih0_ref[...], preferred_element_type=jnp.float32)
                + b0_ref[...])                                            # [T*B, 4H]

    whh0 = whh0_ref[...]                                                  # [H, 4H]
    wih1 = wih1_ref[...]                                                  # [H, 4H]
    whh1 = whh1_ref[...]                                                  # [H, 4H]
    b1 = b1_ref[...]                                                      # [1, 4H]

    # Gate order (i, f, g, o): tanh on the g block, sigmoid elsewhere.
    # Single EUP pass: tanh(x) = 2*sigmoid(2x) - 1 (mask hoisted out of the loop).
    lane = jax.lax.broadcasted_iota(jnp.int32, (B_TILE, 4 * H), 1)
    g_mask = (lane >= 2 * H) & (lane < 3 * H)

    def lstm_gates(gates, c):
        pre = jnp.where(g_mask, gates + gates, gates)
        s = jax.nn.sigmoid(pre)                                           # one EUP pass
        act = jnp.where(g_mask, s + s - 1.0, s)
        i = act[:, 0 * H:1 * H]
        f = act[:, 1 * H:2 * H]
        g = act[:, 2 * H:3 * H]
        o = act[:, 3 * H:4 * H]
        c_new = f * c + i * g
        h_new = o * jnp.tanh(c_new)
        return h_new, c_new

    h0 = jnp.zeros((B_TILE, H), jnp.float32)
    c0 = jnp.zeros((B_TILE, H), jnp.float32)
    h1 = jnp.zeros((B_TILE, H), jnp.float32)
    c1 = jnp.zeros((B_TILE, H), jnp.float32)

    # T is small & static: fully unrolled recurrence. Per-step h1 goes to VMEM scratch
    # so vreg pressure stays flat when B_TILE is raised to 128/256.
    # TODO(synk): inter-layer LSTM dropout (training-mode RNG) not implemented; eval semantics.
    for t in range(T):
        # Layer-1 recurrent term only depends on the previous h1 -> issue it first so
        # the MXU can overlap it with layer-0's gate math.
        rec1 = jnp.dot(h1, whh1, preferred_element_type=jnp.float32)      # [B, 4H]

        # Layer 0: only the recurrent (h0 @ W_hh0^T) term remains inside the loop;
        # the hoisted slice is sublane-aligned (t*B_TILE is a multiple of 8).
        gates0 = gates_x0[t * B_TILE:(t + 1) * B_TILE, :] + jnp.dot(
            h0, whh0, preferred_element_type=jnp.float32)
        h0, c0 = lstm_gates(gates0, c0)

        # Layer 1: x_t = h0 (inter-layer dropout is identity). Two K=H matmuls, no concat.
        gates1 = rec1 + jnp.dot(h0, wih1, preferred_element_type=jnp.float32) + b1
        h1, c1 = lstm_gates(gates1, c1)

        h1_scr[t * B_TILE:(t + 1) * B_TILE, :] = h1

    # ---- Attention (all outside the recurrence): one matmul produces every score.
    h1_all = h1_scr[...]                                                  # [T*B, H]
    scores = (jnp.dot(h1_all, attn_w_ref[...], preferred_element_type=jnp.float32)
              + attn_b_ref[...])                                          # [T*B, 1]

    # Softmax over T per sequence, using sublane-aligned [B, 1] slices (pure VPU).
    s_t = [scores[t * B_TILE:(t + 1) * B_TILE, :] for t in range(T)]
    m = s_t[0]
    for t in range(1, T):
        m = jnp.maximum(m, s_t[t])
    e_t = [jnp.exp(s - m) for s in s_t]
    denom = e_t[0]
    for t in range(1, T):
        denom = denom + e_t[t]
    inv = 1.0 / denom                                                     # [B, 1]

    ctx = (e_t[0] * inv) * h1_all[0:B_TILE, :]
    for t in range(1, T):
        ctx = ctx + (e_t[t] * inv) * h1_all[t * B_TILE:(t + 1) * B_TILE, :]   # [B, H]

    # Dropout == identity at inference. Final classifier (fc_w pre-transposed to [H, O]).
    out_ref[...] = (jnp.dot(ctx, fc_w_ref[...], preferred_element_type=jnp.float32)
                    + fc_b_ref[...])                                      # [B, O]


def prepare_params(params):
    """One-time host-side layout prep: all weights pre-transposed to [in, out]."""
    return {
        "embedding": params["embedding"].astype(jnp.float32),             # [V, E]
        "wih0_t": params["w_ih0"].T,                                      # [E, 4H]
        "whh0_t": params["w_hh0"].T,                                      # [H, 4H]
        "b0": params["b0"],                                               # [1, 4H] (b_ih+b_hh)
        "wih1_t": params["w_ih1"].T,                                      # [H, 4H]
        "whh1_t": params["w_hh1"].T,                                      # [H, 4H]
        "b1": params["b1"],                                               # [1, 4H]
        "attn_w_t": params["attn_w"].T,                                   # [H, 1]
        "attn_b": params["attn_b"],                                       # [1, 1]
        "fc_w_t": params["fc_w"].T,                                       # [H, O]
        "fc_b": params["fc_b"],                                           # [1, O]
    }


@jax.jit
def textclass_forward(text, prepared):
    """text: [B, T] int32 token ids. Returns [B, OUTPUT] logits."""
    bsz, seq = text.shape
    num_tiles = pl.cdiv(bsz, B_TILE)
    b_pad = num_tiles * B_TILE

    # Pad batch to a multiple of B_TILE, then lay ids out per batch tile in time-major
    # row order (row = t*B_TILE + b_local) so the hoisted layer-0 projection is sliced
    # per step with aligned sublane blocks inside the kernel.
    ids = jnp.zeros((b_pad, seq), jnp.int32).at[:bsz, :].set(text.astype(jnp.int32))
    ids_tm = ids.reshape(num_tiles, B_TILE, seq).transpose(0, 2, 1).reshape(
        num_tiles, seq * B_TILE, 1)

    def full(shape):
        return pl.BlockSpec(shape, lambda i: (0,) * len(shape))

    grid_spec = pltpu.PrefetchScalarGridSpec(
        num_scalar_prefetch=0,
        grid=(num_tiles,),
        in_specs=[
            pl.BlockSpec((1, T * B_TILE, 1), lambda i: (i, 0, 0)),        # ids (per tile)
            full((VOCAB, EMBED)),
            full((EMBED, 4 * HIDDEN)),
            full((HIDDEN, 4 * HIDDEN)),
            full((1, 4 * HIDDEN)),
            full((HIDDEN, 4 * HIDDEN)),
            full((HIDDEN, 4 * HIDDEN)),
            full((1, 4 * HIDDEN)),
            full((HIDDEN, 1)),
            full((1, 1)),
            full((HIDDEN, OUTPUT)),
            full((1, OUTPUT)),
        ],
        out_specs=pl.BlockSpec((B_TILE, OUTPUT), lambda i: (i, 0)),
        scratch_shapes=[pltpu.VMEM((T * B_TILE, HIDDEN), jnp.float32)],
    )

    # Rough advisory cost so XLA can schedule neighbors around this latency-bound call.
    flops = num_tiles * (
        2 * T * B_TILE * VOCAB * EMBED
        + 2 * T * B_TILE * EMBED * 4 * HIDDEN
        + T * 3 * 2 * B_TILE * HIDDEN * 4 * HIDDEN
        + 2 * T * B_TILE * HIDDEN
        + 2 * B_TILE * HIDDEN * OUTPUT)
    transcendentals = num_tiles * T * (2 * B_TILE * 5 * HIDDEN + B_TILE)
    bytes_accessed = 4 * (int(ids_tm.size) + VOCAB * EMBED
                          + 5 * HIDDEN * 4 * HIDDEN + b_pad * OUTPUT)

    out_pad = pl.pallas_call(
        textclass_kernel,
        out_shape=jax.ShapeDtypeStruct((b_pad, OUTPUT), jnp.float32),
        grid_spec=grid_spec,
        compiler_params=pltpu.CompilerParams(
            dimension_semantics=("parallel",)),
        cost_estimate=pl.CostEstimate(flops=flops, transcendentals=transcendentals,
                                      bytes_accessed=bytes_accessed),
    )(ids_tm, prepared["embedding"],
      prepared["wih0_t"], prepared["whh0_t"], prepared["b0"],
      prepared["wih1_t"], prepared["whh1_t"], prepared["b1"],
      prepared["attn_w_t"], prepared["attn_b"],
      prepared["fc_w_t"], prepared["fc_b"])
    return out_pad[:bsz]


def init_params(key):
    ks = jax.random.split(key, 12)
    s = 1.0 / (HIDDEN ** 0.5)

    def u(k, shape):
        return jax.random.uniform(k, shape, jnp.float32, -s, s)

    return {
        "embedding": jax.random.normal(ks[0], (VOCAB, EMBED), jnp.float32),
        # layer 0 (input = EMBED), PyTorch layout
        "w_ih0": u(ks[1], (4 * HIDDEN, EMBED)),
        "w_hh0": u(ks[2], (4 * HIDDEN, HIDDEN)),
        "b0":    u(ks[3], (1, 4 * HIDDEN)),     # b_ih + b_hh combined
        # layer 1 (input = HIDDEN), PyTorch layout
        "w_ih1": u(ks[4], (4 * HIDDEN, HIDDEN)),
        "w_hh1": u(ks[5], (4 * HIDDEN, HIDDEN)),
        "b1":    u(ks[6], (1, 4 * HIDDEN)),
        # attention: Linear(hidden_dim, 1)
        "attn_w": u(ks[7], (1, HIDDEN)),
        "attn_b": u(ks[8], (1, 1)),
        # fc: Linear(hidden_dim, output_dim)
        "fc_w": u(ks[9], (OUTPUT, HIDDEN)),
        "fc_b": u(ks[10], (1, OUTPUT)),
    }


if __name__ == "__main__":
    key = jax.random.PRNGKey(0)
    k_param, k_text = jax.random.split(key)
    params = init_params(k_param)
    B = 2
    text = jax.random.randint(k_text, (B, T), 0, VOCAB, dtype=jnp.int32)

    prepared = prepare_params(params)
    out = textclass_forward(text, prepared)
    jax.block_until_ready(out)
    assert out.shape == (B, OUTPUT)
    print("KERNEL_OK")
</pallas_src>

<mosaic_0001>
module attributes {stable_mosaic.version = 11 : i64} {
  func.func @textclass_kernel(%arg0: i32, %arg1: memref<1x64x1xi32, #tpu.memory_space<vmem>>, %arg2: memref<50x16xf32, #tpu.memory_space<vmem>>, %arg3: memref<16x128xf32, #tpu.memory_space<vmem>>, %arg4: memref<32x128xf32, #tpu.memory_space<vmem>>, %arg5: memref<1x128xf32, #tpu.memory_space<vmem>>, %arg6: memref<32x128xf32, #tpu.memory_space<vmem>>, %arg7: memref<32x128xf32, #tpu.memory_space<vmem>>, %arg8: memref<1x128xf32, #tpu.memory_space<vmem>>, %arg9: memref<32x1xf32, #tpu.memory_space<vmem>>, %arg10: memref<1x1xf32, #tpu.memory_space<vmem>>, %arg11: memref<32x4xf32, #tpu.memory_space<vmem>>, %arg12: memref<1x4xf32, #tpu.memory_space<vmem>>, %arg13: memref<8x4xf32, #tpu.memory_space<vmem>>, %arg14: memref<64x32xf32, #tpu.memory_space<vmem>>) attributes {dimension_semantics = [#tpu.dimension_semantics<parallel>], iteration_bounds = array<i64: 1>, scalar_prefetch = 0 : i64, scratch_operands = 1 : i64, tpu.core_type = #tpu.core_type<tc>, window_params = [{transform_indices = @transform_0, window_bounds = array<i64: 1, 64, 1>}, {pipeline_mode = #tpu.pipeline_mode<synchronous>, transform_indices = @transform_1, window_bounds = array<i64: 50, 16>}, {pipeline_mode = #tpu.pipeline_mode<synchronous>, transform_indices = @transform_2, window_bounds = array<i64: 16, 128>}, {pipeline_mode = #tpu.pipeline_mode<synchronous>, transform_indices = @transform_3, window_bounds = array<i64: 32, 128>}, {pipeline_mode = #tpu.pipeline_mode<synchronous>, transform_indices = @transform_4, window_bounds = array<i64: 1, 128>}, {pipeline_mode = #tpu.pipeline_mode<synchronous>, transform_indices = @transform_5, window_bounds = array<i64: 32, 128>}, {pipeline_mode = #tpu.pipeline_mode<synchronous>, transform_indices = @transform_6, window_bounds = array<i64: 32, 128>}, {pipeline_mode = #tpu.pipeline_mode<synchronous>, transform_indices = @transform_7, window_bounds = array<i64: 1, 128>}, {pipeline_mode = #tpu.pipeline_mode<synchronous>, transform_indices = @transform_8, window_bounds = array<i64: 32, 1>}, {pipeline_mode = #tpu.pipeline_mode<synchronous>, transform_indices = @transform_9, window_bounds = array<i64: 1, 1>}, {pipeline_mode = #tpu.pipeline_mode<synchronous>, transform_indices = @transform_10, window_bounds = array<i64: 32, 4>}, {pipeline_mode = #tpu.pipeline_mode<synchronous>, transform_indices = @transform_11, window_bounds = array<i64: 1, 4>}, {transform_indices = @transform_12, window_bounds = array<i64: 8, 4>}]} {
    %c0 = arith.constant 0 : index
    %c0_0 = arith.constant 0 : index
    %c0_1 = arith.constant 0 : index
    %0 = vector.load %arg1[%c0, %c0_0, %c0_1] : memref<1x64x1xi32, #tpu.memory_space<vmem>>, vector<1x64x1xi32>
    %1 = vector.shape_cast %0 : vector<1x64x1xi32> to vector<64x1xi32>
    %2 = tpu.iota {dimensions = array<i32: 1>} : vector<64x50xi32>
    %3 = vector.broadcast %1 : vector<64x1xi32> to vector<64x50xi32>
    %4 = arith.cmpi eq, %3, %2 : vector<64x50xi32>
    %5 = arith.extui %4 : vector<64x50xi1> to vector<64x50xi32>
    %6 = arith.sitofp %5 : vector<64x50xi32> to vector<64x50xf32>
    %c0_2 = arith.constant 0 : index
    %c0_3 = arith.constant 0 : index
    %7 = vector.load %arg2[%c0_2, %c0_3] : memref<50x16xf32, #tpu.memory_space<vmem>>, vector<50x16xf32>
    %cst = arith.constant dense<0.000000e+00> : vector<64x16xf32>
    %8 = tpu.matmul %6, %7, %cst {dimension_numbers = #tpu.dot_dimension_numbers<[1], [0], [0], [1], [0, 0, 1, 1], [], []>} : vector<64x50xf32>, vector<50x16xf32>, vector<64x16xf32> -> vector<64x16xf32>
    %c0_4 = arith.constant 0 : index
    %c0_5 = arith.constant 0 : index
    %9 = vector.load %arg3[%c0_4, %c0_5] : memref<16x128xf32, #tpu.memory_space<vmem>>, vector<16x128xf32>
    %cst_6 = arith.constant dense<0.000000e+00> : vector<64x128xf32>
    %10 = tpu.matmul %8, %9, %cst_6 {dimension_numbers = #tpu.dot_dimension_numbers<[1], [0], [0], [1], [0, 0, 1, 1], [], []>} : vector<64x16xf32>, vector<16x128xf32>, vector<64x128xf32> -> vector<64x128xf32>
    %c0_7 = arith.constant 0 : index
    %c0_8 = arith.constant 0 : index
    %11 = vector.load %arg5[%c0_7, %c0_8] : memref<1x128xf32, #tpu.memory_space<vmem>>, vector<1x128xf32>
    %12 = vector.broadcast %11 : vector<1x128xf32> to vector<64x128xf32>
    %13 = arith.addf %10, %12 : vector<64x128xf32>
    %c0_9 = arith.constant 0 : index
    %c0_10 = arith.constant 0 : index
    %14 = vector.load %arg4[%c0_9, %c0_10] : memref<32x128xf32, #tpu.memory_space<vmem>>, vector<32x128xf32>
    %c0_11 = arith.constant 0 : index
    %c0_12 = arith.constant 0 : index
    %15 = vector.load %arg6[%c0_11, %c0_12] : memref<32x128xf32, #tpu.memory_space<vmem>>, vector<32x128xf32>
    %c0_13 = arith.constant 0 : index
    %c0_14 = arith.constant 0 : index
    %16 = vector.load %arg7[%c0_13, %c0_14] : memref<32x128xf32, #tpu.memory_space<vmem>>, vector<32x128xf32>
    %c0_15 = arith.constant 0 : index
    %c0_16 = arith.constant 0 : index
    %17 = vector.load %arg8[%c0_15, %c0_16] : memref<1x128xf32, #tpu.memory_space<vmem>>, vector<1x128xf32>
    %18 = tpu.iota {dimensions = array<i32: 1>} : vector<8x128xi32>
    %c64_i32 = arith.constant 64 : i32
    %19 = vector.broadcast %c64_i32 : i32 to vector<8x128xi32>
    %20 = arith.cmpi sge, %18, %19 : vector<8x128xi32>
    %c96_i32 = arith.constant 96 : i32
    %21 = vector.broadcast %c96_i32 : i32 to vector<8x128xi32>
    %22 = arith.cmpi slt, %18, %21 : vector<8x128xi32>
    %23 = arith.andi %20, %22 : vector<8x128xi1>
    %cst_17 = arith.constant 0.000000e+00 : f32
    %24 = vector.broadcast %cst_17 : f32 to vector<8x32xf32>
    %cst_18 = arith.constant 0.000000e+00 : f32
    %25 = vector.broadcast %cst_18 : f32 to vector<8x32xf32>
    %cst_19 = arith.constant 0.000000e+00 : f32
    %26 = vector.broadcast %cst_19 : f32 to vector<8x32xf32>
    %cst_20 = arith.constant 0.000000e+00 : f32
    %27 = vector.broadcast %cst_20 : f32 to vector<8x32xf32>
    %cst_21 = arith.constant dense<0.000000e+00> : vector<8x128xf32>
    %28 = tpu.matmul %26, %16, %cst_21 {dimension_numbers = #tpu.dot_dimension_numbers<[1], [0], [0], [1], [0, 0, 1, 1], [], []>} : vector<8x32xf32>, vector<32x128xf32>, vector<8x128xf32> -> vector<8x128xf32>
    %29 = vector.extract_strided_slice %13 {offsets = [0, 0], sizes = [8, 128], strides = [1, 1]} : vector<64x128xf32> to vector<8x128xf32>
    %cst_22 = arith.constant dense<0.000000e+00> : vector<8x128xf32>
    %30 = tpu.matmul %24, %14, %cst_22 {dimension_numbers = #tpu.dot_dimension_numbers<[1], [0], [0], [1], [0, 0, 1, 1], [], []>} : vector<8x32xf32>, vector<32x128xf32>, vector<8x128xf32> -> vector<8x128xf32>
    %31 = arith.addf %29, %30 : vector<8x128xf32>
    %32 = arith.addf %31, %31 : vector<8x128xf32>
    %33 = arith.select %23, %32, %31 : vector<8x128xi1>, vector<8x128xf32>
    %34 = arith.negf %33 : vector<8x128xf32>
    %35 = math.exp %34 : vector<8x128xf32>
    %cst_23 = arith.constant 1.000000e+00 : f32
    %36 = vector.broadcast %cst_23 : f32 to vector<8x128xf32>
    %37 = arith.addf %36, %35 : vector<8x128xf32>
    %38 = arith.divf %36, %37 : vector<8x128xf32>
    %39 = arith.addf %38, %38 : vector<8x128xf32>
    %cst_24 = arith.constant 1.000000e+00 : f32
    %40 = vector.broadcast %cst_24 : f32 to vector<8x128xf32>
    %41 = arith.subf %39, %40 : vector<8x128xf32>
    %42 = arith.select %23, %41, %38 : vector<8x128xi1>, vector<8x128xf32>
    %43 = vector.extract_strided_slice %42 {offsets = [0, 0], sizes = [8, 32], strides = [1, 1]} : vector<8x128xf32> to vector<8x32xf32>
    %44 = vector.extract_strided_slice %42 {offsets = [0, 32], sizes = [8, 32], strides = [1, 1]} : vector<8x128xf32> to vector<8x32xf32>
    %45 = vector.extract_strided_slice %42 {offsets = [0, 64], sizes = [8, 32], strides = [1, 1]} : vector<8x128xf32> to vector<8x32xf32>
    %46 = vector.extract_strided_slice %42 {offsets = [0, 96], sizes = [8, 32], strides = [1, 1]} : vector<8x128xf32> to vector<8x32xf32>
    %47 = arith.mulf %44, %25 : vector<8x32xf32>
    %48 = arith.mulf %43, %45 : vector<8x32xf32>
    %49 = arith.addf %47, %48 : vector<8x32xf32>
    %50 = math.tanh %49 : vector<8x32xf32>
    %51 = arith.mulf %46, %50 : vector<8x32xf32>
    %cst_25 = arith.constant dense<0.000000e+00> : vector<8x128xf32>
    %52 = tpu.matmul %51, %15, %cst_25 {dimension_numbers = #tpu.dot_dimension_numbers<[1], [0], [0], [1], [0, 0, 1, 1], [], []>} : vector<8x32xf32>, vector<32x128xf32>, vector<8x128xf32> -> vector<8x128xf32>
    %53 = arith.addf %28, %52 : vector<8x128xf32>
    %54 = vector.broadcast %17 : vector<1x128xf32> to vector<8x128xf32>
    %55 = arith.addf %53, %54 : vector<8x128xf32>
    %56 = arith.addf %55, %55 : vector<8x128xf32>
    %57 = arith.select %23, %56, %55 : vector<8x128xi1>, vector<8x128xf32>
    %58 = arith.negf %57 : vector<8x128xf32>
    %59 = math.exp %58 : vector<8x128xf32>
    %cst_26 = arith.constant 1.000000e+00 : f32
    %60 = vector.broadcast %cst_26 : f32 to vector<8x128xf32>
    %61 = arith.addf %60, %59 : vector<8x128xf32>
    %62 = arith.divf %60, %61 : vector<8x128xf32>
    %63 = arith.addf %62, %62 : vector<8x128xf32>
    %cst_27 = arith.constant 1.000000e+00 : f32
    %64 = vector.broadcast %cst_27 : f32 to vector<8x128xf32>
    %65 = arith.subf %63, %64 : vector<8x128xf32>
    %66 = arith.select %23, %65, %62 : vector<8x128xi1>, vector<8x128xf32>
    %67 = vector.extract_strided_slice %66 {offsets = [0, 0], sizes = [8, 32], strides = [1, 1]} : vector<8x128xf32> to vector<8x32xf32>
    %68 = vector.extract_strided_slice %66 {offsets = [0, 32], sizes = [8, 32], strides = [1, 1]} : vector<8x128xf32> to vector<8x32xf32>
    %69 = vector.extract_strided_slice %66 {offsets = [0, 64], sizes = [8, 32], strides = [1, 1]} : vector<8x128xf32> to vector<8x32xf32>
    %70 = vector.extract_strided_slice %66 {offsets = [0, 96], sizes = [8, 32], strides = [1, 1]} : vector<8x128xf32> to vector<8x32xf32>
    %71 = arith.mulf %68, %27 : vector<8x32xf32>
    %72 = arith.mulf %67, %69 : vector<8x32xf32>
    %73 = arith.addf %71, %72 : vector<8x32xf32>
    %74 = math.tanh %73 : vector<8x32xf32>
    %75 = arith.mulf %70, %74 : vector<8x32xf32>
    %c0_28 = arith.constant 0 : index
    %c0_29 = arith.constant 0 : index
    %76 = vector.load %arg14[%c0_28, %c0_29] : memref<64x32xf32, #tpu.memory_space<vmem>>, vector<8x32xf32>
    tpu.vector_store %arg14[%c0_28, %c0_29], %75 {strides = array<i32>} : memref<64x32xf32, #tpu.memory_space<vmem>>, vector<8x32xf32>,
    %cst_30 = arith.constant dense<0.000000e+00> : vector<8x128xf32>
    %77 = tpu.matmul %75, %16, %cst_30 {dimension_numbers = #tpu.dot_dimension_numbers<[1], [0], [0], [1], [0, 0, 1, 1], [], []>} : vector<8x32xf32>, vector<32x128xf32>, vector<8x128xf32> -> vector<8x128xf32>
    %78 = vector.extract_strided_slice %13 {offsets = [8, 0], sizes = [8, 128], strides = [1, 1]} : vector<64x128xf32> to vector<8x128xf32>
    %cst_31 = arith.constant dense<0.000000e+00> : vector<8x128xf32>
    %79 = tpu.matmul %51, %14, %cst_31 {dimension_numbers = #tpu.dot_dimension_numbers<[1], [0], [0], [1], [0, 0, 1, 1], [], []>} : vector<8x32xf32>, vector<32x128xf32>, vector<8x128xf32> -> vector<8x128xf32>
    %80 = arith.addf %78, %79 : vector<8x128xf32>
    %81 = arith.addf %80, %80 : vector<8x128xf32>
    %82 = arith.select %23, %81, %80 : vector<8x128xi1>, vector<8x128xf32>
    %83 = arith.negf %82 : vector<8x128xf32>
    %84 = math.exp %83 : vector<8x128xf32>
    %cst_32 = arith.constant 1.000000e+00 : f32
    %85 = vector.broadcast %cst_32 : f32 to vector<8x128xf32>
    %86 = arith.addf %85, %84 : vector<8x128xf32>
    %87 = arith.divf %85, %86 : vector<8x128xf32>
    %88 = arith.addf %87, %87 : vector<8x128xf32>
    %cst_33 = arith.constant 1.000000e+00 : f32
    %89 = vector.broadcast %cst_33 : f32 to vector<8x128xf32>
    %90 = arith.subf %88, %89 : vector<8x128xf32>
    %91 = arith.select %23, %90, %87 : vector<8x128xi1>, vector<8x128xf32>
    %92 = vector.extract_strided_slice %91 {offsets = [0, 0], sizes = [8, 32], strides = [1, 1]} : vector<8x128xf32> to vector<8x32xf32>
    %93 = vector.extract_strided_slice %91 {offsets = [0, 32], sizes = [8, 32], strides = [1, 1]} : vector<8x128xf32> to vector<8x32xf32>
    %94 = vector.extract_strided_slice %91 {offsets = [0, 64], sizes = [8, 32], strides = [1, 1]} : vector<8x128xf32> to vector<8x32xf32>
    %95 = vector.extract_strided_slice %91 {offsets = [0, 96], sizes = [8, 32], strides = [1, 1]} : vector<8x128xf32> to vector<8x32xf32>
    %96 = arith.mulf %93, %49 : vector<8x32xf32>
    %97 = arith.mulf %92, %94 : vector<8x32xf32>
    %98 = arith.addf %96, %97 : vector<8x32xf32>
    %99 = math.tanh %98 : vector<8x32xf32>
    %100 = arith.mulf %95, %99 : vector<8x32xf32>
    %cst_34 = arith.constant dense<0.000000e+00> : vector<8x128xf32>
    %101 = tpu.matmul %100, %15, %cst_34 {dimension_numbers = #tpu.dot_dimension_numbers<[1], [0], [0], [1], [0, 0, 1, 1], [], []>} : vector<8x32xf32>, vector<32x128xf32>, vector<8x128xf32> -> vector<8x128xf32>
    %102 = arith.addf %77, %101 : vector<8x128xf32>
    %103 = vector.broadcast %17 : vector<1x128xf32> to vector<8x128xf32>
    %104 = arith.addf %102, %103 : vector<8x128xf32>
    %105 = arith.addf %104, %104 : vector<8x128xf32>
    %106 = arith.select %23, %105, %104 : vector<8x128xi1>, vector<8x128xf32>
    %107 = arith.negf %106 : vector<8x128xf32>
    %108 = math.exp %107 : vector<8x128xf32>
    %cst_35 = arith.constant 1.000000e+00 : f32
    %109 = vector.broadcast %cst_35 : f32 to vector<8x128xf32>
    %110 = arith.addf %109, %108 : vector<8x128xf32>
    %111 = arith.divf %109, %110 : vector<8x128xf32>
    %112 = arith.addf %111, %111 : vector<8x128xf32>
    %cst_36 = arith.constant 1.000000e+00 : f32
    %113 = vector.broadcast %cst_36 : f32 to vector<8x128xf32>
    %114 = arith.subf %112, %113 : vector<8x128xf32>
    %115 = arith.select %23, %114, %111 : vector<8x128xi1>, vector<8x128xf32>
    %116 = vector.extract_strided_slice %115 {offsets = [0, 0], sizes = [8, 32], strides = [1, 1]} : vector<8x128xf32> to vector<8x32xf32>
    %117 = vector.extract_strided_slice %115 {offsets = [0, 32], sizes = [8, 32], strides = [1, 1]} : vector<8x128xf32> to vector<8x32xf32>
    %118 = vector.extract_strided_slice %115 {offsets = [0, 64], sizes = [8, 32], strides = [1, 1]} : vector<8x128xf32> to vector<8x32xf32>
    %119 = vector.extract_strided_slice %115 {offsets = [0, 96], sizes = [8, 32], strides = [1, 1]} : vector<8x128xf32> to vector<8x32xf32>
    %120 = arith.mulf %117, %73 : vector<8x32xf32>
    %121 = arith.mulf %116, %118 : vector<8x32xf32>
    %122 = arith.addf %120, %121 : vector<8x32xf32>
    %123 = math.tanh %122 : vector<8x32xf32>
    %124 = arith.mulf %119, %123 : vector<8x32xf32>
    %c8 = arith.constant 8 : index
    %c0_37 = arith.constant 0 : index
    %125 = vector.load %arg14[%c8, %c0_37] : memref<64x32xf32, #tpu.memory_space<vmem>>, vector<8x32xf32>
    tpu.vector_store %arg14[%c8, %c0_37], %124 {strides = array<i32>} : memref<64x32xf32, #tpu.memory_space<vmem>>, vector<8x32xf32>,
    %cst_38 = arith.constant dense<0.000000e+00> : vector<8x128xf32>
    %126 = tpu.matmul %124, %16, %cst_38 {dimension_numbers = #tpu.dot_dimension_numbers<[1], [0], [0], [1], [0, 0, 1, 1], [], []>} : vector<8x32xf32>, vector<32x128xf32>, vector<8x128xf32> -> vector<8x128xf32>
    %127 = vector.extract_strided_slice %13 {offsets = [16, 0], sizes = [8, 128], strides = [1, 1]} : vector<64x128xf32> to vector<8x128xf32>
    %cst_39 = arith.constant dense<0.000000e+00> : vector<8x128xf32>
    %128 = tpu.matmul %100, %14, %cst_39 {dimension_numbers = #tpu.dot_dimension_numbers<[1], [0], [0], [1], [0, 0, 1, 1], [], []>} : vector<8x32xf32>, vector<32x128xf32>, vector<8x128xf32> -> vector<8x128xf32>
    %129 = arith.addf %127, %128 : vector<8x128xf32>
    %130 = arith.addf %129, %129 : vector<8x128xf32>
    %131 = arith.select %23, %130, %129 : vector<8x128xi1>, vector<8x128xf32>
    %132 = arith.negf %131 : vector<8x128xf32>
    %133 = math.exp %132 : vector<8x128xf32>
    %cst_40 = arith.constant 1.000000e+00 : f32
    %134 = vector.broadcast %cst_40 : f32 to vector<8x128xf32>
    %135 = arith.addf %134, %133 : vector<8x128xf32>
    %136 = arith.divf %134, %135 : vector<8x128xf32>
    %137 = arith.addf %136, %136 : vector<8x128xf32>
    %cst_41 = arith.constant 1.000000e+00 : f32
    %138 = vector.broadcast %cst_41 : f32 to vector<8x128xf32>
    %139 = arith.subf %137, %138 : vector<8x128xf32>
    %140 = arith.select %23, %139, %136 : vector<8x128xi1>, vector<8x128xf32>
    %141 = vector.extract_strided_slice %140 {offsets = [0, 0], sizes = [8, 32], strides = [1, 1]} : vector<8x128xf32> to vector<8x32xf32>
    %142 = vector.extract_strided_slice %140 {offsets = [0, 32], sizes = [8, 32], strides = [1, 1]} : vector<8x128xf32> to vector<8x32xf32>
    %143 = vector.extract_strided_slice %140 {offsets = [0, 64], sizes = [8, 32], strides = [1, 1]} : vector<8x128xf32> to vector<8x32xf32>
    %144 = vector.extract_strided_slice %140 {offsets = [0, 96], sizes = [8, 32], strides = [1, 1]} : vector<8x128xf32> to vector<8x32xf32>
    %145 = arith.mulf %142, %98 : vector<8x32xf32>
    %146 = arith.mulf %141, %143 : vector<8x32xf32>
    %147 = arith.addf %145, %146 : vector<8x32xf32>
    %148 = math.tanh %147 : vector<8x32xf32>
    %149 = arith.mulf %144, %148 : vector<8x32xf32>
    %cst_42 = arith.constant dense<0.000000e+00> : vector<8x128xf32>
    %150 = tpu.matmul %149, %15, %cst_42 {dimension_numbers = #tpu.dot_dimension_numbers<[1], [0], [0], [1], [0, 0, 1, 1], [], []>} : vector<8x32xf32>, vector<32x128xf32>, vector<8x128xf32> -> vector<8x128xf32>
    %151 = arith.addf %126, %150 : vector<8x128xf32>
    %152 = vector.broadcast %17 : vector<1x128xf32> to vector<8x128xf32>
    %153 = arith.addf %151, %152 : vector<8x128xf32>
    %154 = arith.addf %153, %153 : vector<8x128xf32>
    %155 = arith.select %23, %154, %153 : vector<8x128xi1>, vector<8x128xf32>
    %156 = arith.negf %155 : vector<8x128xf32>
    %157 = math.exp %156 : vector<8x128xf32>
    %cst_43 = arith.constant 1.000000e+00 : f32
    %158 = vector.broadcast %cst_43 : f32 to vector<8x128xf32>
    %159 = arith.addf %158, %157 : vector<8x128xf32>
    %160 = arith.divf %158, %159 : vector<8x128xf32>
    %161 = arith.addf %160, %160 : vector<8x128xf32>
    %cst_44 = arith.constant 1.000000e+00 : f32
    %162 = vector.broadcast %cst_44 : f32 to vector<8x128xf32>
    %163 = arith.subf %161, %162 : vector<8x128xf32>
    %164 = arith.select %23, %163, %160 : vector<8x128xi1>, vector<8x128xf32>
    %165 = vector.extract_strided_slice %164 {offsets = [0, 0], sizes = [8, 32], strides = [1, 1]} : vector<8x128xf32> to vector<8x32xf32>
    %166 = vector.extract_strided_slice %164 {offsets = [0, 32], sizes = [8, 32], strides = [1, 1]} : vector<8x128xf32> to vector<8x32xf32>
    %167 = vector.extract_strided_slice %164 {offsets = [0, 64], sizes = [8, 32], strides = [1, 1]} : vector<8x128xf32> to vector<8x32xf32>
    %168 = vector.extract_strided_slice %164 {offsets = [0, 96], sizes = [8, 32], strides = [1, 1]} : vector<8x128xf32> to vector<8x32xf32>
    %169 = arith.mulf %166, %122 : vector<8x32xf32>
    %170 = arith.mulf %165, %167 : vector<8x32xf32>
    %171 = arith.addf %169, %170 : vector<8x32xf32>
    %172 = math.tanh %171 : vector<8x32xf32>
    %173 = arith.mulf %168, %172 : vector<8x32xf32>
    %c16 = arith.constant 16 : index
    %c0_45 = arith.constant 0 : index
    %174 = vector.load %arg14[%c16, %c0_45] : memref<64x32xf32, #tpu.memory_space<vmem>>, vector<8x32xf32>
    tpu.vector_store %arg14[%c16, %c0_45], %173 {strides = array<i32>} : memref<64x32xf32, #tpu.memory_space<vmem>>, vector<8x32xf32>,
    %cst_46 = arith.constant dense<0.000000e+00> : vector<8x128xf32>
    %175 = tpu.matmul %173, %16, %cst_46 {dimension_numbers = #tpu.dot_dimension_numbers<[1], [0], [0], [1], [0, 0, 1, 1], [], []>} : vector<8x32xf32>, vector<32x128xf32>, vector<8x128xf32> -> vector<8x128xf32>
    %176 = vector.extract_strided_slice %13 {offsets = [24, 0], sizes = [8, 128], strides = [1, 1]} : vector<64x128xf32> to vector<8x128xf32>
    %cst_47 = arith.constant dense<0.000000e+00> : vector<8x128xf32>
    %177 = tpu.matmul %149, %14, %cst_47 {dimension_numbers = #tpu.dot_dimension_numbers<[1], [0], [0], [1], [0, 0, 1, 1], [], []>} : vector<8x32xf32>, vector<32x128xf32>, vector<8x128xf32> -> vector<8x128xf32>
    %178 = arith.addf %176, %177 : vector<8x128xf32>
    %179 = arith.addf %178, %178 : vector<8x128xf32>
    %180 = arith.select %23, %179, %178 : vector<8x128xi1>, vector<8x128xf32>
    %181 = arith.negf %180 : vector<8x128xf32>
    %182 = math.exp %181 : vector<8x128xf32>
    %cst_48 = arith.constant 1.000000e+00 : f32
    %183 = vector.broadcast %cst_48 : f32 to vector<8x128xf32>
    %184 = arith.addf %183, %182 : vector<8x128xf32>
    %185 = arith.divf %183, %184 : vector<8x128xf32>
    %186 = arith.addf %185, %185 : vector<8x128xf32>
    %cst_49 = arith.constant 1.000000e+00 : f32
    %187 = vector.broadcast %cst_49 : f32 to vector<8x128xf32>
    %188 = arith.subf %186, %187 : vector<8x128xf32>
    %189 = arith.select %23, %188, %185 : vector<8x128xi1>, vector<8x128xf32>
    %190 = vector.extract_strided_slice %189 {offsets = [0, 0], sizes = [8, 32], strides = [1, 1]} : vector<8x128xf32> to vector<8x32xf32>
    %191 = vector.extract_strided_slice %189 {offsets = [0, 32], sizes = [8, 32], strides = [1, 1]} : vector<8x128xf32> to vector<8x32xf32>
    %192 = vector.extract_strided_slice %189 {offsets = [0, 64], sizes = [8, 32], strides = [1, 1]} : vector<8x128xf32> to vector<8x32xf32>
    %193 = vector.extract_strided_slice %189 {offsets = [0, 96], sizes = [8, 32], strides = [1, 1]} : vector<8x128xf32> to vector<8x32xf32>
    %194 = arith.mulf %191, %147 : vector<8x32xf32>
    %195 = arith.mulf %190, %192 : vector<8x32xf32>
    %196 = arith.addf %194, %195 : vector<8x32xf32>
    %197 = math.tanh %196 : vector<8x32xf32>
    %198 = arith.mulf %193, %197 : vector<8x32xf32>
    %cst_50 = arith.constant dense<0.000000e+00> : vector<8x128xf32>
    %199 = tpu.matmul %198, %15, %cst_50 {dimension_numbers = #tpu.dot_dimension_numbers<[1], [0], [0], [1], [0, 0, 1, 1], [], []>} : vector<8x32xf32>, vector<32x128xf32>, vector<8x128xf32> -> vector<8x128xf32>
    %200 = arith.addf %175, %199 : vector<8x128xf32>
    %201 = vector.broadcast %17 : vector<1x128xf32> to vector<8x128xf32>
    %202 = arith.addf %200, %201 : vector<8x128xf32>
    %203 = arith.addf %202, %202 : vector<8x128xf32>
    %204 = arith.select %23, %203, %202 : vector<8x128xi1>, vector<8x128xf32>
    %205 = arith.negf %204 : vector<8x128xf32>
    %206 = math.exp %205 : vector<8x128xf32>
    %cst_51 = arith.constant 1.000000e+00 : f32
    %207 = vector.broadcast %cst_51 : f32 to vector<8x128xf32>
    %208 = arith.addf %207, %206 : vector<8x128xf32>
    %209 = arith.divf %207, %208 : vector<8x128xf32>
    %210 = arith.addf %209, %209 : vector<8x128xf32>
    %cst_52 = arith.constant 1.000000e+00 : f32
    %211 = vector.broadcast %cst_52 : f32 to vector<8x128xf32>
    %212 = arith.subf %210, %211 : vector<8x128xf32>
    %213 = arith.select %23, %212, %209 : vector<8x128xi1>, vector<8x128xf32>
    %214 = vector.extract_strided_slice %213 {offsets = [0, 0], sizes = [8, 32], strides = [1, 1]} : vector<8x128xf32> to vector<8x32xf32>
    %215 = vector.extract_strided_slice %213 {offsets = [0, 32], sizes = [8, 32], strides = [1, 1]} : vector<8x128xf32> to vector<8x32xf32>
    %216 = vector.extract_strided_slice %213 {offsets = [0, 64], sizes = [8, 32], strides = [1, 1]} : vector<8x128xf32> to vector<8x32xf32>
    %217 = vector.extract_strided_slice %213 {offsets = [0, 96], sizes = [8, 32], strides = [1, 1]} : vector<8x128xf32> to vector<8x32xf32>
    %218 = arith.mulf %215, %171 : vector<8x32xf32>
    %219 = arith.mulf %214, %216 : vector<8x32xf32>
    %220 = arith.addf %218, %219 : vector<8x32xf32>
    %221 = math.tanh %220 : vector<8x32xf32>
    %222 = arith.mulf %217, %221 : vector<8x32xf32>
    %c24 = arith.constant 24 : index
    %c0_53 = arith.constant 0 : index
    %223 = vector.load %arg14[%c24, %c0_53] : memref<64x32xf32, #tpu.memory_space<vmem>>, vector<8x32xf32>
    tpu.vector_store %arg14[%c24, %c0_53], %222 {strides = array<i32>} : memref<64x32xf32, #tpu.memory_space<vmem>>, vector<8x32xf32>,
    %cst_54 = arith.constant dense<0.000000e+00> : vector<8x128xf32>
    %224 = tpu.matmul %222, %16, %cst_54 {dimension_numbers = #tpu.dot_dimension_numbers<[1], [0], [0], [1], [0, 0, 1, 1], [], []>} : vector<8x32xf32>, vector<32x128xf32>, vector<8x128xf32> -> vector<8x128xf32>
    %225 = vector.extract_strided_slice %13 {offsets = [32, 0], sizes = [8, 128], strides = [1, 1]} : vector<64x128xf32> to vector<8x128xf32>
    %cst_55 = arith.constant dense<0.000000e+00> : vector<8x128xf32>
    %226 = tpu.matmul %198, %14, %cst_55 {dimension_numbers = #tpu.dot_dimension_numbers<[1], [0], [0], [1], [0, 0, 1, 1], [], []>} : vector<8x32xf32>, vector<32x128xf32>, vector<8x128xf32> -> vector<8x128xf32>
    %227 = arith.addf %225, %226 : vector<8x128xf32>
    %228 = arith.addf %227, %227 : vector<8x128xf32>
    %229 = arith.select %23, %228, %227 : vector<8x128xi1>, vector<8x128xf32>
    %230 = arith.negf %229 : vector<8x128xf32>
    %231 = math.exp %230 : vector<8x128xf32>
    %cst_56 = arith.constant 1.000000e+00 : f32
    %232 = vector.broadcast %cst_56 : f32 to vector<8x128xf32>
    %233 = arith.addf %232, %231 : vector<8x128xf32>
    %234 = arith.divf %232, %233 : vector<8x128xf32>
    %235 = arith.addf %234, %234 : vector<8x128xf32>
    %cst_57 = arith.constant 1.000000e+00 : f32
    %236 = vector.broadcast %cst_57 : f32 to vector<8x128xf32>
    %237 = arith.subf %235, %236 : vector<8x128xf32>
    %238 = arith.select %23, %237, %234 : vector<8x128xi1>, vector<8x128xf32>
    %239 = vector.extract_strided_slice %238 {offsets = [0, 0], sizes = [8, 32], strides = [1, 1]} : vector<8x128xf32> to vector<8x32xf32>
    %240 = vector.extract_strided_slice %238 {offsets = [0, 32], sizes = [8, 32], strides = [1, 1]} : vector<8x128xf32> to vector<8x32xf32>
    %241 = vector.extract_strided_slice %238 {offsets = [0, 64], sizes = [8, 32], strides = [1, 1]} : vector<8x128xf32> to vector<8x32xf32>
    %242 = vector.extract_strided_slice %238 {offsets = [0, 96], sizes = [8, 32], strides = [1, 1]} : vector<8x128xf32> to vector<8x32xf32>
    %243 = arith.mulf %240, %196 : vector<8x32xf32>
    %244 = arith.mulf %239, %241 : vector<8x32xf32>
    %245 = arith.addf %243, %244 : vector<8x32xf32>
    %246 = math.tanh %245 : vector<8x32xf32>
    %247 = arith.mulf %242, %246 : vector<8x32xf32>
    %cst_58 = arith.constant dense<0.000000e+00> : vector<8x128xf32>
    %248 = tpu.matmul %247, %15, %cst_58 {dimension_numbers = #tpu.dot_dimension_numbers<[1], [0], [0], [1], [0, 0, 1, 1], [], []>} : vector<8x32xf32>, vector<32x128xf32>, vector<8x128xf32> -> vector<8x128xf32>
    %249 = arith.addf %224, %248 : vector<8x128xf32>
    %250 = vector.broadcast %17 : vector<1x128xf32> to vector<8x128xf32>
    %251 = arith.addf %249, %250 : vector<8x128xf32>
    %252 = arith.addf %251, %251 : vector<8x128xf32>
    %253 = arith.select %23, %252, %251 : vector<8x128xi1>, vector<8x128xf32>
    %254 = arith.negf %253 : vector<8x128xf32>
    %255 = math.exp %254 : vector<8x128xf32>
    %cst_59 = arith.constant 1.000000e+00 : f32
    %256 = vector.broadcast %cst_59 : f32 to vector<8x128xf32>
    %257 = arith.addf %256, %255 : vector<8x128xf32>
    %258 = arith.divf %256, %257 : vector<8x128xf32>
    %259 = arith.addf %258, %258 : vector<8x128xf32>
    %cst_60 = arith.constant 1.000000e+00 : f32
    %260 = vector.broadcast %cst_60 : f32 to vector<8x128xf32>
    %261 = arith.subf %259, %260 : vector<8x128xf32>
    %262 = arith.select %23, %261, %258 : vector<8x128xi1>, vector<8x128xf32>
    %263 = vector.extract_strided_slice %262 {offsets = [0, 0], sizes = [8, 32], strides = [1, 1]} : vector<8x128xf32> to vector<8x32xf32>
    %264 = vector.extract_strided_slice %262 {offsets = [0, 32], sizes = [8, 32], strides = [1, 1]} : vector<8x128xf32> to vector<8x32xf32>
    %265 = vector.extract_strided_slice %262 {offsets = [0, 64], sizes = [8, 32], strides = [1, 1]} : vector<8x128xf32> to vector<8x32xf32>
    %266 = vector.extract_strided_slice %262 {offsets = [0, 96], sizes = [8, 32], strides = [1, 1]} : vector<8x128xf32> to vector<8x32xf32>
    %267 = arith.mulf %264, %220 : vector<8x32xf32>
    %268 = arith.mulf %263, %265 : vector<8x32xf32>
    %269 = arith.addf %267, %268 : vector<8x32xf32>
    %270 = math.tanh %269 : vector<8x32xf32>
    %271 = arith.mulf %266, %270 : vector<8x32xf32>
    %c32 = arith.constant 32 : index
    %c0_61 = arith.constant 0 : index
    %272 = vector.load %arg14[%c32, %c0_61] : memref<64x32xf32, #tpu.memory_space<vmem>>, vector<8x32xf32>
    tpu.vector_store %arg14[%c32, %c0_61], %271 {strides = array<i32>} : memref<64x32xf32, #tpu.memory_space<vmem>>, vector<8x32xf32>,
    %cst_62 = arith.constant dense<0.000000e+00> : vector<8x128xf32>
    %273 = tpu.matmul %271, %16, %cst_62 {dimension_numbers = #tpu.dot_dimension_numbers<[1], [0], [0], [1], [0, 0, 1, 1], [], []>} : vector<8x32xf32>, vector<32x128xf32>, vector<8x128xf32> -> vector<8x128xf32>
    %274 = vector.extract_strided_slice %13 {offsets = [40, 0], sizes = [8, 128], strides = [1, 1]} : vector<64x128xf32> to vector<8x128xf32>
    %cst_63 = arith.constant dense<0.000000e+00> : vector<8x128xf32>
    %275 = tpu.matmul %247, %14, %cst_63 {dimension_numbers = #tpu.dot_dimension_numbers<[1], [0], [0], [1], [0, 0, 1, 1], [], []>} : vector<8x32xf32>, vector<32x128xf32>, vector<8x128xf32> -> vector<8x128xf32>
    %276 = arith.addf %274, %275 : vector<8x128xf32>
    %277 = arith.addf %276, %276 : vector<8x128xf32>
    %278 = arith.select %23, %277, %276 : vector<8x128xi1>, vector<8x128xf32>
    %279 = arith.negf %278 : vector<8x128xf32>
    %280 = math.exp %279 : vector<8x128xf32>
    %cst_64 = arith.constant 1.000000e+00 : f32
    %281 = vector.broadcast %cst_64 : f32 to vector<8x128xf32>
    %282 = arith.addf %281, %280 : vector<8x128xf32>
    %283 = arith.divf %281, %282 : vector<8x128xf32>
    %284 = arith.addf %283, %283 : vector<8x128xf32>
    %cst_65 = arith.constant 1.000000e+00 : f32
    %285 = vector.broadcast %cst_65 : f32 to vector<8x128xf32>
    %286 = arith.subf %284, %285 : vector<8x128xf32>
    %287 = arith.select %23, %286, %283 : vector<8x128xi1>, vector<8x128xf32>
    %288 = vector.extract_strided_slice %287 {offsets = [0, 0], sizes = [8, 32], strides = [1, 1]} : vector<8x128xf32> to vector<8x32xf32>
    %289 = vector.extract_strided_slice %287 {offsets = [0, 32], sizes = [8, 32], strides = [1, 1]} : vector<8x128xf32> to vector<8x32xf32>
    %290 = vector.extract_strided_slice %287 {offsets = [0, 64], sizes = [8, 32], strides = [1, 1]} : vector<8x128xf32> to vector<8x32xf32>
    %291 = vector.extract_strided_slice %287 {offsets = [0, 96], sizes = [8, 32], strides = [1, 1]} : vector<8x128xf32> to vector<8x32xf32>
    %292 = arith.mulf %289, %245 : vector<8x32xf32>
    %293 = arith.mulf %288, %290 : vector<8x32xf32>
    %294 = arith.addf %292, %293 : vector<8x32xf32>
    %295 = math.tanh %294 : vector<8x32xf32>
    %296 = arith.mulf %291, %295 : vector<8x32xf32>
    %cst_66 = arith.constant dense<0.000000e+00> : vector<8x128xf32>
    %297 = tpu.matmul %296, %15, %cst_66 {dimension_numbers = #tpu.dot_dimension_numbers<[1], [0], [0], [1], [0, 0, 1, 1], [], []>} : vector<8x32xf32>, vector<32x128xf32>, vector<8x128xf32> -> vector<8x128xf32>
    %298 = arith.addf %273, %297 : vector<8x128xf32>
    %299 = vector.broadcast %17 : vector<1x128xf32> to vector<8x128xf32>
    %300 = arith.addf %298, %299 : vector<8x128xf32>
    %301 = arith.addf %300, %300 : vector<8x128xf32>
    %302 = arith.select %23, %301, %300 : vector<8x128xi1>, vector<8x128xf32>
    %303 = arith.negf %302 : vector<8x128xf32>
    %304 = math.exp %303 : vector<8x128xf32>
    %cst_67 = arith.constant 1.000000e+00 : f32
    %305 = vector.broadcast %cst_67 : f32 to vector<8x128xf32>
    %306 = arith.addf %305, %304 : vector<8x128xf32>
    %307 = arith.divf %305, %306 : vector<8x128xf32>
    %308 = arith.addf %307, %307 : vector<8x128xf32>
    %cst_68 = arith.constant 1.000000e+00 : f32
    %309 = vector.broadcast %cst_68 : f32 to vector<8x128xf32>
    %310 = arith.subf %308, %309 : vector<8x128xf32>
    %311 = arith.select %23, %310, %307 : vector<8x128xi1>, vector<8x128xf32>
    %312 = vector.extract_strided_slice %311 {offsets = [0, 0], sizes = [8, 32], strides = [1, 1]} : vector<8x128xf32> to vector<8x32xf32>
    %313 = vector.extract_strided_slice %311 {offsets = [0, 32], sizes = [8, 32], strides = [1, 1]} : vector<8x128xf32> to vector<8x32xf32>
    %314 = vector.extract_strided_slice %311 {offsets = [0, 64], sizes = [8, 32], strides = [1, 1]} : vector<8x128xf32> to vector<8x32xf32>
    %315 = vector.extract_strided_slice %311 {offsets = [0, 96], sizes = [8, 32], strides = [1, 1]} : vector<8x128xf32> to vector<8x32xf32>
    %316 = arith.mulf %313, %269 : vector<8x32xf32>
    %317 = arith.mulf %312, %314 : vector<8x32xf32>
    %318 = arith.addf %316, %317 : vector<8x32xf32>
    %319 = math.tanh %318 : vector<8x32xf32>
    %320 = arith.mulf %315, %319 : vector<8x32xf32>
    %c40 = arith.constant 40 : index
    %c0_69 = arith.constant 0 : index
    %321 = vector.load %arg14[%c40, %c0_69] : memref<64x32xf32, #tpu.memory_space<vmem>>, vector<8x32xf32>
    tpu.vector_store %arg14[%c40, %c0_69], %320 {strides = array<i32>} : memref<64x32xf32, #tpu.memory_space<vmem>>, vector<8x32xf32>,
    %cst_70 = arith.constant dense<0.000000e+00> : vector<8x128xf32>
    %322 = tpu.matmul %320, %16, %cst_70 {dimension_numbers = #tpu.dot_dimension_numbers<[1], [0], [0], [1], [0, 0, 1, 1], [], []>} : vector<8x32xf32>, vector<32x128xf32>, vector<8x128xf32> -> vector<8x128xf32>
    %323 = vector.extract_strided_slice %13 {offsets = [48, 0], sizes = [8, 128], strides = [1, 1]} : vector<64x128xf32> to vector<8x128xf32>
    %cst_71 = arith.constant dense<0.000000e+00> : vector<8x128xf32>
    %324 = tpu.matmul %296, %14, %cst_71 {dimension_numbers = #tpu.dot_dimension_numbers<[1], [0], [0], [1], [0, 0, 1, 1], [], []>} : vector<8x32xf32>, vector<32x128xf32>, vector<8x128xf32> -> vector<8x128xf32>
    %325 = arith.addf %323, %324 : vector<8x128xf32>
    %326 = arith.addf %325, %325 : vector<8x128xf32>
    %327 = arith.select %23, %326, %325 : vector<8x128xi1>, vector<8x128xf32>
    %328 = arith.negf %327 : vector<8x128xf32>
    %329 = math.exp %328 : vector<8x128xf32>
    %cst_72 = arith.constant 1.000000e+00 : f32
    %330 = vector.broadcast %cst_72 : f32 to vector<8x128xf32>
    %331 = arith.addf %330, %329 : vector<8x128xf32>
    %332 = arith.divf %330, %331 : vector<8x128xf32>
    %333 = arith.addf %332, %332 : vector<8x128xf32>
    %cst_73 = arith.constant 1.000000e+00 : f32
    %334 = vector.broadcast %cst_73 : f32 to vector<8x128xf32>
    %335 = arith.subf %333, %334 : vector<8x128xf32>
    %336 = arith.select %23, %335, %332 : vector<8x128xi1>, vector<8x128xf32>
    %337 = vector.extract_strided_slice %336 {offsets = [0, 0], sizes = [8, 32], strides = [1, 1]} : vector<8x128xf32> to vector<8x32xf32>
    %338 = vector.extract_strided_slice %336 {offsets = [0, 32], sizes = [8, 32], strides = [1, 1]} : vector<8x128xf32> to vector<8x32xf32>
    %339 = vector.extract_strided_slice %336 {offsets = [0, 64], sizes = [8, 32], strides = [1, 1]} : vector<8x128xf32> to vector<8x32xf32>
    %340 = vector.extract_strided_slice %336 {offsets = [0, 96], sizes = [8, 32], strides = [1, 1]} : vector<8x128xf32> to vector<8x32xf32>
    %341 = arith.mulf %338, %294 : vector<8x32xf32>
    %342 = arith.mulf %337, %339 : vector<8x32xf32>
    %343 = arith.addf %341, %342 : vector<8x32xf32>
    %344 = math.tanh %343 : vector<8x32xf32>
    %345 = arith.mulf %340, %344 : vector<8x32xf32>
    %cst_74 = arith.constant dense<0.000000e+00> : vector<8x128xf32>
    %346 = tpu.matmul %345, %15, %cst_74 {dimension_numbers = #tpu.dot_dimension_numbers<[1], [0], [0], [1], [0, 0, 1, 1], [], []>} : vector<8x32xf32>, vector<32x128xf32>, vector<8x128xf32> -> vector<8x128xf32>
    %347 = arith.addf %322, %346 : vector<8x128xf32>
    %348 = vector.broadcast %17 : vector<1x128xf32> to vector<8x128xf32>
    %349 = arith.addf %347, %348 : vector<8x128xf32>
    %350 = arith.addf %349, %349 : vector<8x128xf32>
    %351 = arith.select %23, %350, %349 : vector<8x128xi1>, vector<8x128xf32>
    %352 = arith.negf %351 : vector<8x128xf32>
    %353 = math.exp %352 : vector<8x128xf32>
    %cst_75 = arith.constant 1.000000e+00 : f32
    %354 = vector.broadcast %cst_75 : f32 to vector<8x128xf32>
    %355 = arith.addf %354, %353 : vector<8x128xf32>
    %356 = arith.divf %354, %355 : vector<8x128xf32>
    %357 = arith.addf %356, %356 : vector<8x128xf32>
    %cst_76 = arith.constant 1.000000e+00 : f32
    %358 = vector.broadcast %cst_76 : f32 to vector<8x128xf32>
    %359 = arith.subf %357, %358 : vector<8x128xf32>
    %360 = arith.select %23, %359, %356 : vector<8x128xi1>, vector<8x128xf32>
    %361 = vector.extract_strided_slice %360 {offsets = [0, 0], sizes = [8, 32], strides = [1, 1]} : vector<8x128xf32> to vector<8x32xf32>
    %362 = vector.extract_strided_slice %360 {offsets = [0, 32], sizes = [8, 32], strides = [1, 1]} : vector<8x128xf32> to vector<8x32xf32>
    %363 = vector.extract_strided_slice %360 {offsets = [0, 64], sizes = [8, 32], strides = [1, 1]} : vector<8x128xf32> to vector<8x32xf32>
    %364 = vector.extract_strided_slice %360 {offsets = [0, 96], sizes = [8, 32], strides = [1, 1]} : vector<8x128xf32> to vector<8x32xf32>
    %365 = arith.mulf %362, %318 : vector<8x32xf32>
    %366 = arith.mulf %361, %363 : vector<8x32xf32>
    %367 = arith.addf %365, %366 : vector<8x32xf32>
    %368 = math.tanh %367 : vector<8x32xf32>
    %369 = arith.mulf %364, %368 : vector<8x32xf32>
    %c48 = arith.constant 48 : index
    %c0_77 = arith.constant 0 : index
    %370 = vector.load %arg14[%c48, %c0_77] : memref<64x32xf32, #tpu.memory_space<vmem>>, vector<8x32xf32>
    tpu.vector_store %arg14[%c48, %c0_77], %369 {strides = array<i32>} : memref<64x32xf32, #tpu.memory_space<vmem>>, vector<8x32xf32>,
    %cst_78 = arith.constant dense<0.000000e+00> : vector<8x128xf32>
    %371 = tpu.matmul %369, %16, %cst_78 {dimension_numbers = #tpu.dot_dimension_numbers<[1], [0], [0], [1], [0, 0, 1, 1], [], []>} : vector<8x32xf32>, vector<32x128xf32>, vector<8x128xf32> -> vector<8x128xf32>
    %372 = vector.extract_strided_slice %13 {offsets = [56, 0], sizes = [8, 128], strides = [1, 1]} : vector<64x128xf32> to vector<8x128xf32>
    %cst_79 = arith.constant dense<0.000000e+00> : vector<8x128xf32>
    %373 = tpu.matmul %345, %14, %cst_79 {dimension_numbers = #tpu.dot_dimension_numbers<[1], [0], [0], [1], [0, 0, 1, 1], [], []>} : vector<8x32xf32>, vector<32x128xf32>, vector<8x128xf32> -> vector<8x128xf32>
    %374 = arith.addf %372, %373 : vector<8x128xf32>
    %375 = arith.addf %374, %374 : vector<8x128xf32>
    %376 = arith.select %23, %375, %374 : vector<8x128xi1>, vector<8x128xf32>
    %377 = arith.negf %376 : vector<8x128xf32>
    %378 = math.exp %377 : vector<8x128xf32>
    %cst_80 = arith.constant 1.000000e+00 : f32
    %379 = vector.broadcast %cst_80 : f32 to vector<8x128xf32>
    %380 = arith.addf %379, %378 : vector<8x128xf32>
    %381 = arith.divf %379, %380 : vector<8x128xf32>
    %382 = arith.addf %381, %381 : vector<8x128xf32>
    %cst_81 = arith.constant 1.000000e+00 : f32
    %383 = vector.broadcast %cst_81 : f32 to vector<8x128xf32>
    %384 = arith.subf %382, %383 : vector<8x128xf32>
    %385 = arith.select %23, %384, %381 : vector<8x128xi1>, vector<8x128xf32>
    %386 = vector.extract_strided_slice %385 {offsets = [0, 0], sizes = [8, 32], strides = [1, 1]} : vector<8x128xf32> to vector<8x32xf32>
    %387 = vector.extract_strided_slice %385 {offsets = [0, 32], sizes = [8, 32], strides = [1, 1]} : vector<8x128xf32> to vector<8x32xf32>
    %388 = vector.extract_strided_slice %385 {offsets = [0, 64], sizes = [8, 32], strides = [1, 1]} : vector<8x128xf32> to vector<8x32xf32>
    %389 = vector.extract_strided_slice %385 {offsets = [0, 96], sizes = [8, 32], strides = [1, 1]} : vector<8x128xf32> to vector<8x32xf32>
    %390 = arith.mulf %387, %343 : vector<8x32xf32>
    %391 = arith.mulf %386, %388 : vector<8x32xf32>
    %392 = arith.addf %390, %391 : vector<8x32xf32>
    %393 = math.tanh %392 : vector<8x32xf32>
    %394 = arith.mulf %389, %393 : vector<8x32xf32>
    %cst_82 = arith.constant dense<0.000000e+00> : vector<8x128xf32>
    %395 = tpu.matmul %394, %15, %cst_82 {dimension_numbers = #tpu.dot_dimension_numbers<[1], [0], [0], [1], [0, 0, 1, 1], [], []>} : vector<8x32xf32>, vector<32x128xf32>, vector<8x128xf32> -> vector<8x128xf32>
    %396 = arith.addf %371, %395 : vector<8x128xf32>
    %397 = vector.broadcast %17 : vector<1x128xf32> to vector<8x128xf32>
    %398 = arith.addf %396, %397 : vector<8x128xf32>
    %399 = arith.addf %398, %398 : vector<8x128xf32>
    %400 = arith.select %23, %399, %398 : vector<8x128xi1>, vector<8x128xf32>
    %401 = arith.negf %400 : vector<8x128xf32>
    %402 = math.exp %401 : vector<8x128xf32>
    %cst_83 = arith.constant 1.000000e+00 : f32
    %403 = vector.broadcast %cst_83 : f32 to vector<8x128xf32>
    %404 = arith.addf %403, %402 : vector<8x128xf32>
    %405 = arith.divf %403, %404 : vector<8x128xf32>
    %406 = arith.addf %405, %405 : vector<8x128xf32>
    %cst_84 = arith.constant 1.000000e+00 : f32
    %407 = vector.broadcast %cst_84 : f32 to vector<8x128xf32>
    %408 = arith.subf %406, %407 : vector<8x128xf32>
    %409 = arith.select %23, %408, %405 : vector<8x128xi1>, vector<8x128xf32>
    %410 = vector.extract_strided_slice %409 {offsets = [0, 0], sizes = [8, 32], strides = [1, 1]} : vector<8x128xf32> to vector<8x32xf32>
    %411 = vector.extract_strided_slice %409 {offsets = [0, 32], sizes = [8, 32], strides = [1, 1]} : vector<8x128xf32> to vector<8x32xf32>
    %412 = vector.extract_strided_slice %409 {offsets = [0, 64], sizes = [8, 32], strides = [1, 1]} : vector<8x128xf32> to vector<8x32xf32>
    %413 = vector.extract_strided_slice %409 {offsets = [0, 96], sizes = [8, 32], strides = [1, 1]} : vector<8x128xf32> to vector<8x32xf32>
    %414 = arith.mulf %411, %367 : vector<8x32xf32>
    %415 = arith.mulf %410, %412 : vector<8x32xf32>
    %416 = arith.addf %414, %415 : vector<8x32xf32>
    %417 = math.tanh %416 : vector<8x32xf32>
    %418 = arith.mulf %413, %417 : vector<8x32xf32>
    %c56 = arith.constant 56 : index
    %c0_85 = arith.constant 0 : index
    %419 = vector.load %arg14[%c56, %c0_85] : memref<64x32xf32, #tpu.memory_space<vmem>>, vector<8x32xf32>
    tpu.vector_store %arg14[%c56, %c0_85], %418 {strides = array<i32>} : memref<64x32xf32, #tpu.memory_space<vmem>>, vector<8x32xf32>,
    %c0_86 = arith.constant 0 : index
    %c0_87 = arith.constant 0 : index
    %420 = vector.load %arg14[%c0_86, %c0_87] : memref<64x32xf32, #tpu.memory_space<vmem>>, vector<64x32xf32>
    %c0_88 = arith.constant 0 : index
    %c0_89 = arith.constant 0 : index
    %421 = vector.load %arg9[%c0_88, %c0_89] : memref<32x1xf32, #tpu.memory_space<vmem>>, vector<32x1xf32>
    %cst_90 = arith.constant dense<0.000000e+00> : vector<64x1xf32>
    %422 = tpu.matmul %420, %421, %cst_90 {dimension_numbers = #tpu.dot_dimension_numbers<[1], [0], [0], [1], [0, 0, 1, 1], [], []>} : vector<64x32xf32>, vector<32x1xf32>, vector<64x1xf32> -> vector<64x1xf32>
    %c0_91 = arith.constant 0 : index
    %c0_92 = arith.constant 0 : index
    %423 = vector.load %arg10[%c0_91, %c0_92] : memref<1x1xf32, #tpu.memory_space<vmem>>, vector<1x1xf32>
    %424 = vector.broadcast %423 : vector<1x1xf32> to vector<64x1xf32>
    %425 = arith.addf %422, %424 : vector<64x1xf32>
    %426 = vector.extract_strided_slice %425 {offsets = [0, 0], sizes = [8, 1], strides = [1, 1]} : vector<64x1xf32> to vector<8x1xf32>
    %427 = vector.extract_strided_slice %425 {offsets = [8, 0], sizes = [8, 1], strides = [1, 1]} : vector<64x1xf32> to vector<8x1xf32>
    %428 = vector.extract_strided_slice %425 {offsets = [16, 0], sizes = [8, 1], strides = [1, 1]} : vector<64x1xf32> to vector<8x1xf32>
    %429 = vector.extract_strided_slice %425 {offsets = [24, 0], sizes = [8, 1], strides = [1, 1]} : vector<64x1xf32> to vector<8x1xf32>
    %430 = vector.extract_strided_slice %425 {offsets = [32, 0], sizes = [8, 1], strides = [1, 1]} : vector<64x1xf32> to vector<8x1xf32>
    %431 = vector.extract_strided_slice %425 {offsets = [40, 0], sizes = [8, 1], strides = [1, 1]} : vector<64x1xf32> to vector<8x1xf32>
    %432 = vector.extract_strided_slice %425 {offsets = [48, 0], sizes = [8, 1], strides = [1, 1]} : vector<64x1xf32> to vector<8x1xf32>
    %433 = vector.extract_strided_slice %425 {offsets = [56, 0], sizes = [8, 1], strides = [1, 1]} : vector<64x1xf32> to vector<8x1xf32>
    %434 = arith.maximumf %426, %427 : vector<8x1xf32>
    %435 = arith.maximumf %434, %428 : vector<8x1xf32>
    %436 = arith.maximumf %435, %429 : vector<8x1xf32>
    %437 = arith.maximumf %436, %430 : vector<8x1xf32>
    %438 = arith.maximumf %437, %431 : vector<8x1xf32>
    %439 = arith.maximumf %438, %432 : vector<8x1xf32>
    %440 = arith.maximumf %439, %433 : vector<8x1xf32>
    %441 = arith.subf %426, %440 : vector<8x1xf32>
    %442 = math.exp %441 : vector<8x1xf32>
    %443 = arith.subf %427, %440 : vector<8x1xf32>
    %444 = math.exp %443 : vector<8x1xf32>
    %445 = arith.subf %428, %440 : vector<8x1xf32>
    %446 = math.exp %445 : vector<8x1xf32>
    %447 = arith.subf %429, %440 : vector<8x1xf32>
    %448 = math.exp %447 : vector<8x1xf32>
    %449 = arith.subf %430, %440 : vector<8x1xf32>
    %450 = math.exp %449 : vector<8x1xf32>
    %451 = arith.subf %431, %440 : vector<8x1xf32>
    %452 = math.exp %451 : vector<8x1xf32>
    %453 = arith.subf %432, %440 : vector<8x1xf32>
    %454 = math.exp %453 : vector<8x1xf32>
    %455 = arith.subf %433, %440 : vector<8x1xf32>
    %456 = math.exp %455 : vector<8x1xf32>
    %457 = arith.addf %442, %444 : vector<8x1xf32>
    %458 = arith.addf %457, %446 : vector<8x1xf32>
    %459 = arith.addf %458, %448 : vector<8x1xf32>
    %460 = arith.addf %459, %450 : vector<8x1xf32>
    %461 = arith.addf %460, %452 : vector<8x1xf32>
    %462 = arith.addf %461, %454 : vector<8x1xf32>
    %463 = arith.addf %462, %456 : vector<8x1xf32>
    %cst_93 = arith.constant 1.000000e+00 : f32
    %464 = vector.broadcast %cst_93 : f32 to vector<8x1xf32>
    %465 = arith.divf %464, %463 : vector<8x1xf32>
    %466 = arith.mulf %442, %465 : vector<8x1xf32>
    %467 = vector.extract_strided_slice %420 {offsets = [0, 0], sizes = [8, 32], strides = [1, 1]} : vector<64x32xf32> to vector<8x32xf32>
    %468 = vector.broadcast %466 : vector<8x1xf32> to vector<8x32xf32>
    %469 = arith.mulf %468, %467 : vector<8x32xf32>
    %470 = arith.mulf %444, %465 : vector<8x1xf32>
    %471 = vector.extract_strided_slice %420 {offsets = [8, 0], sizes = [8, 32], strides = [1, 1]} : vector<64x32xf32> to vector<8x32xf32>
    %472 = vector.broadcast %470 : vector<8x1xf32> to vector<8x32xf32>
    %473 = arith.mulf %472, %471 : vector<8x32xf32>
    %474 = arith.addf %469, %473 : vector<8x32xf32>
    %475 = arith.mulf %446, %465 : vector<8x1xf32>
    %476 = vector.extract_strided_slice %420 {offsets = [16, 0], sizes = [8, 32], strides = [1, 1]} : vector<64x32xf32> to vector<8x32xf32>
    %477 = vector.broadcast %475 : vector<8x1xf32> to vector<8x32xf32>
    %478 = arith.mulf %477, %476 : vector<8x32xf32>
    %479 = arith.addf %474, %478 : vector<8x32xf32>
    %480 = arith.mulf %448, %465 : vector<8x1xf32>
    %481 = vector.extract_strided_slice %420 {offsets = [24, 0], sizes = [8, 32], strides = [1, 1]} : vector<64x32xf32> to vector<8x32xf32>
    %482 = vector.broadcast %480 : vector<8x1xf32> to vector<8x32xf32>
    %483 = arith.mulf %482, %481 : vector<8x32xf32>
    %484 = arith.addf %479, %483 : vector<8x32xf32>
    %485 = arith.mulf %450, %465 : vector<8x1xf32>
    %486 = vector.extract_strided_slice %420 {offsets = [32, 0], sizes = [8, 32], strides = [1, 1]} : vector<64x32xf32> to vector<8x32xf32>
    %487 = vector.broadcast %485 : vector<8x1xf32> to vector<8x32xf32>
    %488 = arith.mulf %487, %486 : vector<8x32xf32>
    %489 = arith.addf %484, %488 : vector<8x32xf32>
    %490 = arith.mulf %452, %465 : vector<8x1xf32>
    %491 = vector.extract_strided_slice %420 {offsets = [40, 0], sizes = [8, 32], strides = [1, 1]} : vector<64x32xf32> to vector<8x32xf32>
    %492 = vector.broadcast %490 : vector<8x1xf32> to vector<8x32xf32>
    %493 = arith.mulf %492, %491 : vector<8x32xf32>
    %494 = arith.addf %489, %493 : vector<8x32xf32>
    %495 = arith.mulf %454, %465 : vector<8x1xf32>
    %496 = vector.extract_strided_slice %420 {offsets = [48, 0], sizes = [8, 32], strides = [1, 1]} : vector<64x32xf32> to vector<8x32xf32>
    %497 = vector.broadcast %495 : vector<8x1xf32> to vector<8x32xf32>
    %498 = arith.mulf %497, %496 : vector<8x32xf32>
    %499 = arith.addf %494, %498 : vector<8x32xf32>
    %500 = arith.mulf %456, %465 : vector<8x1xf32>
    %501 = vector.extract_strided_slice %420 {offsets = [56, 0], sizes = [8, 32], strides = [1, 1]} : vector<64x32xf32> to vector<8x32xf32>
    %502 = vector.broadcast %500 : vector<8x1xf32> to vector<8x32xf32>
    %503 = arith.mulf %502, %501 : vector<8x32xf32>
    %504 = arith.addf %499, %503 : vector<8x32xf32>
    %c0_94 = arith.constant 0 : index
    %c0_95 = arith.constant 0 : index
    %505 = vector.load %arg11[%c0_94, %c0_95] : memref<32x4xf32, #tpu.memory_space<vmem>>, vector<32x4xf32>
    %cst_96 = arith.constant dense<0.000000e+00> : vector<8x4xf32>
    %506 = tpu.matmul %504, %505, %cst_96 {dimension_numbers = #tpu.dot_dimension_numbers<[1], [0], [0], [1], [0, 0, 1, 1], [], []>} : vector<8x32xf32>, vector<32x4xf32>, vector<8x4xf32> -> vector<8x4xf32>
    %c0_97 = arith.constant 0 : index
    %c0_98 = arith.constant 0 : index
    %507 = vector.load %arg12[%c0_97, %c0_98] : memref<1x4xf32, #tpu.memory_space<vmem>>, vector<1x4xf32>
    %508 = vector.broadcast %507 : vector<1x4xf32> to vector<8x4xf32>
    %509 = arith.addf %506, %508 : vector<8x4xf32>
    %c0_99 = arith.constant 0 : index
    %c0_100 = arith.constant 0 : index
    %510 = vector.load %arg13[%c0_99, %c0_100] : memref<8x4xf32, #tpu.memory_space<vmem>>, vector<8x4xf32>
    tpu.vector_store %arg13[%c0_99, %c0_100], %509 {strides = array<i32>} : memref<8x4xf32, #tpu.memory_space<vmem>>, vector<8x4xf32>,
    return
  }
  func.func @transform_0(%arg0: i32) -> (i32, i32, i32) {
    %c0_i32 = arith.constant 0 : i32
    %c0_i32_0 = arith.constant 0 : i32
    %c0_i32_1 = arith.constant 0 : i32
    return %arg0, %c0_i32, %c0_i32_0 : i32, i32, i32
  }
  func.func @transform_1(%arg0: i32) -> (i32, i32) {
    %c0_i32 = arith.constant 0 : i32
    %c0_i32_0 = arith.constant 0 : i32
    %c0_i32_1 = arith.constant 0 : i32
    return %c0_i32, %c0_i32_0 : i32, i32
  }
  func.func @transform_2(%arg0: i32) -> (i32, i32) {
    %c0_i32 = arith.constant 0 : i32
    %c0_i32_0 = arith.constant 0 : i32
    %c0_i32_1 = arith.constant 0 : i32
    return %c0_i32, %c0_i32_0 : i32, i32
  }
  func.func @transform_3(%arg0: i32) -> (i32, i32) {
    %c0_i32 = arith.constant 0 : i32
    %c0_i32_0 = arith.constant 0 : i32
    %c0_i32_1 = arith.constant 0 : i32
    return %c0_i32, %c0_i32_0 : i32, i32
  }
  func.func @transform_4(%arg0: i32) -> (i32, i32) {
    %c0_i32 = arith.constant 0 : i32
    %c0_i32_0 = arith.constant 0 : i32
    %c0_i32_1 = arith.constant 0 : i32
    return %c0_i32, %c0_i32_0 : i32, i32
  }
  func.func @transform_5(%arg0: i32) -> (i32, i32) {
    %c0_i32 = arith.constant 0 : i32
    %c0_i32_0 = arith.constant 0 : i32
    %c0_i32_1 = arith.constant 0 : i32
    return %c0_i32, %c0_i32_0 : i32, i32
  }
  func.func @transform_6(%arg0: i32) -> (i32, i32) {
    %c0_i32 = arith.constant 0 : i32
    %c0_i32_0 = arith.constant 0 : i32
    %c0_i32_1 = arith.constant 0 : i32
    return %c0_i32, %c0_i32_0 : i32, i32
  }
  func.func @transform_7(%arg0: i32) -> (i32, i32) {
    %c0_i32 = arith.constant 0 : i32
    %c0_i32_0 = arith.constant 0 : i32
    %c0_i32_1 = arith.constant 0 : i32
    return %c0_i32, %c0_i32_0 : i32, i32
  }
  func.func @transform_8(%arg0: i32) -> (i32, i32) {
    %c0_i32 = arith.constant 0 : i32
    %c0_i32_0 = arith.constant 0 : i32
    %c0_i32_1 = arith.constant 0 : i32
    return %c0_i32, %c0_i32_0 : i32, i32
  }
  func.func @transform_9(%arg0: i32) -> (i32, i32) {
    %c0_i32 = arith.constant 0 : i32
    %c0_i32_0 = arith.constant 0 : i32
    %c0_i32_1 = arith.constant 0 : i32
    return %c0_i32, %c0_i32_0 : i32, i32
  }
  func.func @transform_10(%arg0: i32) -> (i32, i32) {
    %c0_i32 = arith.constant 0 : i32
    %c0_i32_0 = arith.constant 0 : i32
    %c0_i32_1 = arith.constant 0 : i32
    return %c0_i32, %c0_i32_0 : i32, i32
  }
  func.func @transform_11(%arg0: i32) -> (i32, i32) {
    %c0_i32 = arith.constant 0 : i32
    %c0_i32_0 = arith.constant 0 : i32
    %c0_i32_1 = arith.constant 0 : i32
    return %c0_i32, %c0_i32_0 : i32, i32
  }
  func.func @transform_12(%arg0: i32) -> (i32, i32) {
    %c0_i32 = arith.constant 0 : i32
    %c0_i32_0 = arith.constant 0 : i32
    return %arg0, %c0_i32 : i32, i32
  }
}

</mosaic_0001>

<llo_original>
// kernel: textclass_forward.1
$region0: #{textclass_forward.1}
  #allocation0 [shape = 'u32[]', space=smem, size = 0x4, offset = 0x4, fixed_abs, tag = 'smem constant byte address 0x4 - core index']
  #allocation1 [shape = 'u32[144,128]{1,0:T(1,128)}', space=vmem, size = 0x12000, scoped, tag = 'internal scratch']
  #allocation2 [shape = 'f32[64,32]{1,0:T(8,128)}', space=vmem, size = 0x8000, scoped, tag = 'scratch operand']
  #allocation3 [shape = 'f32[1,1]{1,0:T(1,128)S(1)}', space=vmem, size = 0x200, scoped, tag = 'scoped memory for textclass_forward.1']
  %s0 = inlined_call_operand.vmem [shape: s32[1,64,1], index: 0, kind: input, shape index: {}]
  %s1 = inlined_call_operand.vmem [shape: f32[50,16], index: 1, kind: input, shape index: {}]
  %s2 = inlined_call_operand.vmem [shape: f32[16,128], index: 2, kind: input, shape index: {}]
  %s3 = inlined_call_operand.vmem [shape: f32[32,128], index: 3, kind: input, shape index: {}]
  %s4 = inlined_call_operand.vmem [shape: f32[1,128], index: 4, kind: input, shape index: {}]
  %s5 = inlined_call_operand.vmem [shape: f32[32,128], index: 5, kind: input, shape index: {}]
  %s6 = inlined_call_operand.vmem [shape: f32[32,128], index: 6, kind: input, shape index: {}]
  %s7 = inlined_call_operand.vmem [shape: f32[1,128], index: 7, kind: input, shape index: {}]
  %s8 = inlined_call_operand.vmem [shape: f32[32,1], index: 8, kind: input, shape index: {}]
  %s9 = inlined_call_operand.<no memory space> [shape: f32[1,1], index: 9, kind: input, shape index: {}]
  %s10 = inlined_call_operand.vmem [shape: f32[32,4], index: 10, kind: input, shape index: {}]
  %s11 = inlined_call_operand.vmem [shape: f32[1,4], index: 11, kind: input, shape index: {}]
  %s12 = inlined_call_operand.vmem [shape: f32[8,4], index: 12, kind: output, shape index: {}]
  %s13 = sld [smem:[#allocation0]]
  $region58: #{textclass_forward.1} parent=0
    _
  %s15 = ssub.s32 1, %s13
  %s16 = scalar_select 0, %s15, %s13
  %v17 = vstv %s9
  %18 = vst [vmem:[#allocation3] sm:$0x1] %v17
  // Predicated region
  $region2: #{textclass_forward.1} parent=0 // pred_check
    _
  $region3: #{textclass_forward.1} parent=0 // pred_check_branch
    %20 = sbr.rel (0) target = $region5
  $region4: #{textclass_forward.1} parent=0 // pred_region
    _
  $region5: #{textclass_forward.1} parent=0 // pred_fallthru
    _
  // Predicated region
  $region6: #{textclass_forward.1} parent=0 // pred_check
    _
  $region7: #{textclass_forward.1} parent=0 // pred_check_branch
    %22 = sbr.rel (0) target = $region9
  $region8: #{textclass_forward.1} parent=0 // pred_region
    _
  $region9: #{textclass_forward.1} parent=0 // pred_fallthru
    _
  // Predicated region
  $region10: #{textclass_forward.1} parent=0 // pred_check
    _
  $region11: #{textclass_forward.1} parent=0 // pred_check_branch
    %24 = sbr.rel (0) target = $region13
  $region12: #{textclass_forward.1} parent=0 // pred_region
    _
  $region13: #{textclass_forward.1} parent=0 // pred_fallthru
    _
  // Predicated region
  $region14: #{textclass_forward.1} parent=0 // pred_check
    _
  $region15: #{textclass_forward.1} parent=0 // pred_check_branch
    %26 = sbr.rel (0) target = $region17
  $region16: #{textclass_forward.1} parent=0 // pred_region
    _
  $region17: #{textclass_forward.1} parent=0 // pred_fallthru
    _
  // Predicated region
  $region18: #{textclass_forward.1} parent=0 // pred_check
    _
  $region19: #{textclass_forward.1} parent=0 // pred_check_branch
    %28 = sbr.rel (0) target = $region21
  $region20: #{textclass_forward.1} parent=0 // pred_region
    _
  $region21: #{textclass_forward.1} parent=0 // pred_fallthru
    _
  // Predicated region
  $region22: #{textclass_forward.1} parent=0 // pred_check
    _
  $region23: #{textclass_forward.1} parent=0 // pred_check_branch
    %30 = sbr.rel (0) target = $region25
  $region24: #{textclass_forward.1} parent=0 // pred_region
    _
  $region25: #{textclass_forward.1} parent=0 // pred_fallthru
    _
  // Predicated region
  $region26: #{textclass_forward.1} parent=0 // pred_check
    _
  $region27: #{textclass_forward.1} parent=0 // pred_check_branch
    %32 = sbr.rel (0) target = $region29
  $region28: #{textclass_forward.1} parent=0 // pred_region
    _
  $region29: #{textclass_forward.1} parent=0 // pred_fallthru
    _
  // Predicated region
  $region30: #{textclass_forward.1} parent=0 // pred_check
    _
  $region31: #{textclass_forward.1} parent=0 // pred_check_branch
    %34 = sbr.rel (0) target = $region33
  $region32: #{textclass_forward.1} parent=0 // pred_region
    _
  $region33: #{textclass_forward.1} parent=0 // pred_fallthru
    _
  // Predicated region
  $region34: #{textclass_forward.1} parent=0 // pred_check
    _
  $region35: #{textclass_forward.1} parent=0 // pred_check_branch
    %36 = sbr.rel (0) target = $region37
  $region36: #{textclass_forward.1} parent=0 // pred_region
    _
  $region37: #{textclass_forward.1} parent=0 // pred_fallthru
    _
  // Predicated region
  $region38: #{textclass_forward.1} parent=0 // pred_check
    _
  $region39: #{textclass_forward.1} parent=0 // pred_check_branch
    %38 = sbr.rel (0) target = $region41
  $region40: #{textclass_forward.1} parent=0 // pred_region
    _
  $region41: #{textclass_forward.1} parent=0 // pred_fallthru
    _
  // Predicated region
  $region42: #{textclass_forward.1} parent=0 // pred_check
    _
  $region43: #{textclass_forward.1} parent=0 // pred_check_branch
    %40 = sbr.rel (0) target = $region45
  $region44: #{textclass_forward.1} parent=0 // pred_region
    _
  $region45: #{textclass_forward.1} parent=0 // pred_fallthru
    _
  // Predicated region
  $region46: #{textclass_forward.1} parent=0 // pred_check
    _
  $region47: #{textclass_forward.1} parent=0 // pred_check_branch
    %42 = sbr.rel (0) target = $region49
  $region48: #{textclass_forward.1} parent=0 // pred_region
    _
  $region49: #{textclass_forward.1} parent=0 // pred_fallthru
    _
  %v43 = vld [vmem:[%s0] sm:$0xff]
  %v44 = vld [vmem:[%s0 + $0x8] sm:$0xff]
  %v45 = vld [vmem:[%s0 + $0x10] sm:$0xff]
  %v46 = vld [vmem:[%s0 + $0x18] sm:$0xff]
  %v47 = vld [vmem:[%s0 + $0x20] sm:$0xff]
  %v48 = vld [vmem:[%s0 + $0x28] sm:$0xff]
  %v49 = vld [vmem:[%s0 + $0x30] sm:$0xff]
  %v50 = vld [vmem:[%s0 + $0x38] sm:$0xff]
  %v51 = vlaneseq
  %v52 = vand.u32 %v51, 127
  %53 = vset.pattern.permute.xlu0 0
  %54 = vperm.xlu0 %53, %v43
  %v55 = vpop.permute.xlu0 %54
  %56 = vset.pattern.permute.xlu0 0
  %57 = vperm.xlu0 %56, %v44
  %v58 = vpop.permute.xlu0 %57
  %59 = vset.pattern.permute.xlu0 0
  %60 = vperm.xlu0 %59, %v45
  %v61 = vpop.permute.xlu0 %60
  %62 = vset.pattern.permute.xlu0 0
  %63 = vperm.xlu0 %62, %v46
  %v64 = vpop.permute.xlu0 %63
  %65 = vset.pattern.permute.xlu0 0
  %66 = vperm.xlu0 %65, %v47
  %v67 = vpop.permute.xlu0 %66
  %68 = vset.pattern.permute.xlu0 0
  %69 = vperm.xlu0 %68, %v48
  %v70 = vpop.permute.xlu0 %69
  %71 = vset.pattern.permute.xlu0 0
  %72 = vperm.xlu0 %71, %v49
  %v73 = vpop.permute.xlu0 %72
  %74 = vset.pattern.permute.xlu0 0
  %75 = vperm.xlu0 %74, %v50
  %v76 = vpop.permute.xlu0 %75
  %vm77 = vcmp.eq.s32.totalorder %v55, %v52
  %vm78 = vcmp.eq.s32.totalorder %v58, %v52
  %vm79 = vcmp.eq.s32.totalorder %v61, %v52
  %vm80 = vcmp.eq.s32.totalorder %v64, %v52
  %vm81 = vcmp.eq.s32.totalorder %v67, %v52
  %vm82 = vcmp.eq.s32.totalorder %v70, %v52
  %vm83 = vcmp.eq.s32.totalorder %v73, %v52
  %vm84 = vcmp.eq.s32.totalorder %v76, %v52
  %v85 = vsel %vm77, 1, 0
  %v86 = vsel %vm78, 1, 0
  %v87 = vsel %vm79, 1, 0
  %v88 = vsel %vm80, 1, 0
  %v89 = vsel %vm81, 1, 0
  %v90 = vsel %vm82, 1, 0
  %v91 = vsel %vm83, 1, 0
  %v92 = vsel %vm84, 1, 0
  %v93 = vcvt.s32.f32 %v85
  %v94 = vcvt.s32.f32 %v86
  %v95 = vcvt.s32.f32 %v87
  %v96 = vcvt.s32.f32 %v88
  %v97 = vcvt.s32.f32 %v89
  %v98 = vcvt.s32.f32 %v90
  %v99 = vcvt.s32.f32 %v91
  %v100 = vcvt.s32.f32 %v92
  %v101 = vld [vmem:[%s1] sm:$0xff]
  %v102 = vld [vmem:[%s1 + $0x8] sm:$0xff]
  %v103 = vld [vmem:[%s1 + $0x10] sm:$0xff]
  %v104 = vld [vmem:[%s1 + $0x18] sm:$0xff]
  %v105 = vld [vmem:[%s1 + $0x20] sm:$0xff]
  %v106 = vld [vmem:[%s1 + $0x28] sm:$0xff]
  %v107 = vld [vmem:[%s1 + $0x30] sm:$0x3]
  %vm108 = vcmask 408576
  %v110 = vsel %vm108, %v93, 0
  %v113 = vsel %vm108, %v94, 0
  %v116 = vsel %vm108, %v95, 0
  %v119 = vsel %vm108, %v96, 0
  %v122 = vsel %vm108, %v97, 0
  %v125 = vsel %vm108, %v98, 0
  %v128 = vsel %vm108, %v99, 0
  %v131 = vsel %vm108, %v100, 0
  %vm133 = vcmask 1041408
  %v135 = vsel %vm133, %v107, 0
  %137 = vmatprep.subr.mxu0 0.0
  %138 = vmatpush1.msra.mxu0 0.0
  %139 = vmatprep.subr.mxu0 0.0
  %140 = vmatpush1.msra.mxu0 0.0
  %141 = vmatprep.subr.mxu0 0.0
  %142 = vmatpush1.msra.mxu0 0.0
  %143 = vmatprep.subr.mxu0 0.0
  %144 = vmatpush1.msra.mxu0 0.0
  %145 = vmatprep.subr.mxu0 0.0
  %146 = vmatpush1.msra.mxu0 0.0
  %147 = vmatprep.subr.mxu0 0.0
  %148 = vmatpush1.msra.mxu0 0.0
  %149 = vmatprep.subr.mxu0 0.0
  %150 = vmatpush1.msra.mxu0 0.0
  %151 = vmatprep.subr.mxu0 0.0
  %152 = vmatpush1.msra.mxu0 0.0
  %153 = vmatprep.subr.mxu0 0.0
  %154 = vmatpush1.msra.mxu0 0.0
  %155 = vmatprep.subr.mxu0 0.0
  %156 = vmatpush1.msra.mxu0 %v135
  %157 = vmatprep.subr.mxu0 0.0
  %158 = vmatpush1.msra.mxu0 %v106
  %159 = vmatprep.subr.mxu0 0.0
  %160 = vmatpush1.msra.mxu0 %v105
  %161 = vmatprep.subr.mxu0 0.0
  %162 = vmatpush1.msra.mxu0 %v104
  %163 = vmatprep.subr.mxu0 0.0
  %164 = vmatpush1.msra.mxu0 %v103
  %165 = vmatprep.subr.mxu0 0.0
  %166 = vmatpush1.msra.mxu0 %v102
  %167 = vmatprep.subr.mxu0 0.0
  %168 = vmatpush1.msra.mxu0 %v101
  %169 = vmatprep.subr.mxu0 0.0
  %170 = vmatpush2.msra.mxu0 0.0
  %171 = vmatprep.subr.mxu0 0.0
  %172 = vmatpush2.msra.mxu0 0.0
  %173 = vmatprep.subr.mxu0 0.0
  %174 = vmatpush2.msra.mxu0 0.0
  %175 = vmatprep.subr.mxu0 0.0
  %176 = vmatpush2.msra.mxu0 0.0
  %177 = vmatprep.subr.mxu0 0.0
  %178 = vmatpush2.msra.mxu0 0.0
  %179 = vmatprep.subr.mxu0 0.0
  %180 = vmatpush2.msra.mxu0 0.0
  %181 = vmatprep.subr.mxu0 0.0
  %182 = vmatpush2.msra.mxu0 0.0
  %183 = vmatprep.subr.mxu0 0.0
  %184 = vmatpush2.msra.mxu0 0.0
  %185 = vmatprep.subr.mxu0 0.0
  %186 = vmatpush2.msra.mxu0 0.0
  %187 = vmatprep.subr.mxu0 0.0
  %188 = vmatpush2.msra.mxu0 0.0
  %189 = vmatprep.subr.mxu0 0.0
  %190 = vmatpush2.msra.mxu0 0.0
  %191 = vmatprep.subr.mxu0 0.0
  %192 = vmatpush2.msra.mxu0 0.0
  %193 = vmatprep.subr.mxu0 0.0
  %194 = vmatpush2.msra.mxu0 0.0
  %195 = vmatprep.subr.mxu0 0.0
  %196 = vmatpush2.msra.mxu0 0.0
  %197 = vmatprep.subr.mxu0 0.0
  %198 = vmatpush2.msra.mxu0 0.0
  %199 = vmatprep.subr.mxu0 0.0
  %200 = vmatpush2.msra.mxu0 0.0
  %201 = vmatprep.mubr.f32.mxu0 0.0
  %202 = vmatmul.mubr.f32.gmra.mxu0 %v110
  %v203 = vpop.f32.mrf.mxu0
  %v204 = vadd.f32 0.0, %v203
  %v205 = vpop.f32.mrf.mxu0
  %206 = vmatprep.mubr.f32.mxu0 0.0
  %207 = vmatmul.mubr.f32.gmra.mxu0 %v113
  %v208 = vpop.f32.mrf.mxu0
  %v209 = vadd.f32 0.0, %v208
  %v210 = vpop.f32.mrf.mxu0
  %211 = vmatprep.mubr.f32.mxu0 0.0
  %212 = vmatmul.mubr.f32.gmra.mxu0 %v116
  %v213 = vpop.f32.mrf.mxu0
  %v214 = vadd.f32 0.0, %v213
  %v215 = vpop.f32.mrf.mxu0
  %216 = vmatprep.mubr.f32.mxu0 0.0
  %217 = vmatmul.mubr.f32.gmra.mxu0 %v119
  %v218 = vpop.f32.mrf.mxu0
  %v219 = vadd.f32 0.0, %v218
  %v220 = vpop.f32.mrf.mxu0
  %221 = vmatprep.mubr.f32.mxu0 0.0
  %222 = vmatmul.mubr.f32.gmra.mxu0 %v122
  %v223 = vpop.f32.mrf.mxu0
  %v224 = vadd.f32 0.0, %v223
  %v225 = vpop.f32.mrf.mxu0
  %226 = vmatprep.mubr.f32.mxu0 0.0
  %227 = vmatmul.mubr.f32.gmra.mxu0 %v125
  %v228 = vpop.f32.mrf.mxu0
  %v229 = vadd.f32 0.0, %v228
  %v230 = vpop.f32.mrf.mxu0
  %231 = vmatprep.mubr.f32.mxu0 0.0
  %232 = vmatmul.mubr.f32.gmra.mxu0 %v128
  %v233 = vpop.f32.mrf.mxu0
  %v234 = vadd.f32 0.0, %v233
  %v235 = vpop.f32.mrf.mxu0
  %236 = vmatprep.mubr.f32.mxu0 0.0
  %237 = vmatmul.mubr.f32.gmra.mxu0 %v131
  %v238 = vpop.f32.mrf.mxu0
  %v239 = vadd.f32 0.0, %v238
  %v240 = vpop.f32.mrf.mxu0
  %241 = vdwg.mxu0
  %v242 = vld [vmem:[%s2] sm:$0xff]
  %v243 = vld [vmem:[%s2 + $0x8] sm:$0xff]
  %v244 = vld [vmem:[%s4] sm:$0x1]
  %v246 = vlaneseq
  %v247 = vshrl.u32 %v246, 7
  %v248 = vsub.s32 0, %v247
  %v249 = vrot.slane %v244, %v248
  %vm251 = vcmask 130048
  %v253 = vsel %vm251, %v204, 0
  %v256 = vsel %vm251, %v209, 0
  %v259 = vsel %vm251, %v214, 0
  %v262 = vsel %vm251, %v219, 0
  %v265 = vsel %vm251, %v224, 0
  %v268 = vsel %vm251, %v229, 0
  %v271 = vsel %vm251, %v234, 0
  %v274 = vsel %vm251, %v239, 0
  %276 = vmatprep.subr.mxu0 0.0
  %277 = vmatpush1.msra.mxu0 0.0
  %278 = vmatprep.subr.mxu0 0.0
  %279 = vmatpush1.msra.mxu0 0.0
  %280 = vmatprep.subr.mxu0 0.0
  %281 = vmatpush1.msra.mxu0 0.0
  %282 = vmatprep.subr.mxu0 0.0
  %283 = vmatpush1.msra.mxu0 0.0
  %284 = vmatprep.subr.mxu0 0.0
  %285 = vmatpush1.msra.mxu0 0.0
  %286 = vmatprep.subr.mxu0 0.0
  %287 = vmatpush1.msra.mxu0 0.0
  %288 = vmatprep.subr.mxu0 0.0
  %289 = vmatpush1.msra.mxu0 0.0
  %290 = vmatprep.subr.mxu0 0.0
  %291 = vmatpush1.msra.mxu0 0.0
  %292 = vmatprep.subr.mxu0 0.0
  %293 = vmatpush1.msra.mxu0 0.0
  %294 = vmatprep.subr.mxu0 0.0
  %295 = vmatpush1.msra.mxu0 0.0
  %296 = vmatprep.subr.mxu0 0.0
  %297 = vmatpush1.msra.mxu0 0.0
  %298 = vmatprep.subr.mxu0 0.0
  %299 = vmatpush1.msra.mxu0 0.0
  %300 = vmatprep.subr.mxu0 0.0
  %301 = vmatpush1.msra.mxu0 0.0
  %302 = vmatprep.subr.mxu0 0.0
  %303 = vmatpush1.msra.mxu0 0.0
  %304 = vmatprep.subr.mxu0 0.0
  %305 = vmatpush1.msra.mxu0 %v243
  %306 = vmatprep.subr.mxu0 0.0
  %307 = vmatpush1.msra.mxu0 %v242
  %308 = vmatprep.subr.mxu0 0.0
  %309 = vmatpush2.msra.mxu0 0.0
  %310 = vmatprep.subr.mxu0 0.0
  %311 = vmatpush2.msra.mxu0 0.0
  %312 = vmatprep.subr.mxu0 0.0
  %313 = vmatpush2.msra.mxu0 0.0
  %314 = vmatprep.subr.mxu0 0.0
  %315 = vmatpush2.msra.mxu0 0.0
  %316 = vmatprep.subr.mxu0 0.0
  %317 = vmatpush2.msra.mxu0 0.0
  %318 = vmatprep.subr.mxu0 0.0
  %319 = vmatpush2.msra.mxu0 0.0
  %320 = vmatprep.subr.mxu0 0.0
  %321 = vmatpush2.msra.mxu0 0.0
  %322 = vmatprep.subr.mxu0 0.0
  %323 = vmatpush2.msra.mxu0 0.0
  %324 = vmatprep.subr.mxu0 0.0
  %325 = vmatpush2.msra.mxu0 0.0
  %326 = vmatprep.subr.mxu0 0.0
  %327 = vmatpush2.msra.mxu0 0.0
  %328 = vmatprep.subr.mxu0 0.0
  %329 = vmatpush2.msra.mxu0 0.0
  %330 = vmatprep.subr.mxu0 0.0
  %331 = vmatpush2.msra.mxu0 0.0
  %332 = vmatprep.subr.mxu0 0.0
  %333 = vmatpush2.msra.mxu0 0.0
  %334 = vmatprep.subr.mxu0 0.0
  %335 = vmatpush2.msra.mxu0 0.0
  %336 = vmatprep.subr.mxu0 0.0
  %337 = vmatpush2.msra.mxu0 0.0
  %338 = vmatprep.subr.mxu0 0.0
  %339 = vmatpush2.msra.mxu0 0.0
  %340 = vmatprep.mubr.f32.mxu0 0.0
  %341 = vmatmul.mubr.f32.gmra.mxu0 %v253
  %v342 = vpop.f32.mrf.mxu0
  %v343 = vadd.f32 %v249, %v342
  %v344 = vpop.f32.mrf.mxu0
  %345 = vmatprep.mubr.f32.mxu0 0.0
  %346 = vmatmul.mubr.f32.gmra.mxu0 %v256
  %v347 = vpop.f32.mrf.mxu0
  %v348 = vadd.f32 %v249, %v347
  %v349 = vpop.f32.mrf.mxu0
  %350 = vmatprep.mubr.f32.mxu0 0.0
  %351 = vmatmul.mubr.f32.gmra.mxu0 %v259
  %v352 = vpop.f32.mrf.mxu0
  %v353 = vadd.f32 %v249, %v352
  %v354 = vpop.f32.mrf.mxu0
  %355 = vmatprep.mubr.f32.mxu0 0.0
  %356 = vmatmul.mubr.f32.gmra.mxu0 %v262
  %v357 = vpop.f32.mrf.mxu0
  %v358 = vadd.f32 %v249, %v357
  %v359 = vpop.f32.mrf.mxu0
  %360 = vmatprep.mubr.f32.mxu0 0.0
  %361 = vmatmul.mubr.f32.gmra.mxu0 %v265
  %v362 = vpop.f32.mrf.mxu0
  %v363 = vadd.f32 %v249, %v362
  %v364 = vpop.f32.mrf.mxu0
  %365 = vmatprep.mubr.f32.mxu0 0.0
  %366 = vmatmul.mubr.f32.gmra.mxu0 %v268
  %v367 = vpop.f32.mrf.mxu0
  %v368 = vadd.f32 %v249, %v367
  %v369 = vpop.f32.mrf.mxu0
  %370 = vmatprep.mubr.f32.mxu0 0.0
  %371 = vmatmul.mubr.f32.gmra.mxu0 %v271
  %v372 = vpop.f32.mrf.mxu0
  %v373 = vadd.f32 %v249, %v372
  %v374 = vpop.f32.mrf.mxu0
  %375 = vmatprep.mubr.f32.mxu0 0.0
  %376 = vmatmul.mubr.f32.gmra.mxu0 %v274
  %v377 = vpop.f32.mrf.mxu0
  %v378 = vadd.f32 %v249, %v377
  %v379 = vpop.f32.mrf.mxu0
  %380 = vdwg.mxu0
  %v381 = vld [vmem:[%s3] sm:$0xff]
  %v382 = vld [vmem:[%s3 + $0x8] sm:$0xff]
  %v383 = vld [vmem:[%s3 + $0x10] sm:$0xff]
  %v384 = vld [vmem:[%s3 + $0x18] sm:$0xff]
  %v385 = vld [vmem:[%s5] sm:$0xff]
  %v386 = vld [vmem:[%s5 + $0x8] sm:$0xff]
  %v387 = vld [vmem:[%s5 + $0x10] sm:$0xff]
  %v388 = vld [vmem:[%s5 + $0x18] sm:$0xff]
  %v389 = vld [vmem:[%s6] sm:$0xff]
  %v390 = vld [vmem:[%s6 + $0x8] sm:$0xff]
  %v391 = vld [vmem:[%s6 + $0x10] sm:$0xff]
  %v392 = vld [vmem:[%s6 + $0x18] sm:$0xff]
  %v393 = vld [vmem:[%s7] sm:$0x1]
  %vm394 = vcmp.ge.s32.totalorder %v52, 64
  %vm395 = vcmp.lt.s32.totalorder %v52, 96
  %vm396 = vmand %vm394, %vm395
  %vm397 = vcmask 261120
  %v399 = vsel %vm397, 0.0, 0
  %401 = vmatprep.subr.mxu0 0.0
  %402 = vmatpush1.msra.mxu0 0.0
  %403 = vmatprep.subr.mxu0 0.0
  %404 = vmatpush1.msra.mxu0 0.0
  %405 = vmatprep.subr.mxu0 0.0
  %406 = vmatpush1.msra.mxu0 0.0
  %407 = vmatprep.subr.mxu0 0.0
  %408 = vmatpush1.msra.mxu0 0.0
  %409 = vmatprep.subr.mxu0 0.0
  %410 = vmatpush1.msra.mxu0 0.0
  %411 = vmatprep.subr.mxu0 0.0
  %412 = vmatpush1.msra.mxu0 0.0
  %413 = vmatprep.subr.mxu0 0.0
  %414 = vmatpush1.msra.mxu0 0.0
  %415 = vmatprep.subr.mxu0 0.0
  %416 = vmatpush1.msra.mxu0 0.0
  %417 = vmatprep.subr.mxu0 0.0
  %418 = vmatpush1.msra.mxu0 0.0
  %419 = vmatprep.subr.mxu0 0.0
  %420 = vmatpush1.msra.mxu0 0.0
  %421 = vmatprep.subr.mxu0 0.0
  %422 = vmatpush1.msra.mxu0 0.0
  %423 = vmatprep.subr.mxu0 0.0
  %424 = vmatpush1.msra.mxu0 0.0
  %425 = vmatprep.subr.mxu0 0.0
  %426 = vmatpush1.msra.mxu0 %v384
  %427 = vmatprep.subr.mxu0 0.0
  %428 = vmatpush1.msra.mxu0 %v383
  %429 = vmatprep.subr.mxu0 0.0
  %430 = vmatpush1.msra.mxu0 %v382
  %431 = vmatprep.subr.mxu0 0.0
  %432 = vmatpush1.msra.mxu0 %v381
  %433 = vmatprep.subr.mxu0 0.0
  %434 = vmatpush2.msra.mxu0 0.0
  %435 = vmatprep.subr.mxu0 0.0
  %436 = vmatpush2.msra.mxu0 0.0
  %437 = vmatprep.subr.mxu0 0.0
  %438 = vmatpush2.msra.mxu0 0.0
  %439 = vmatprep.subr.mxu0 0.0
  %440 = vmatpush2.msra.mxu0 0.0
  %441 = vmatprep.subr.mxu0 0.0
  %442 = vmatpush2.msra.mxu0 0.0
  %443 = vmatprep.subr.mxu0 0.0
  %444 = vmatpush2.msra.mxu0 0.0
  %445 = vmatprep.subr.mxu0 0.0
  %446 = vmatpush2.msra.mxu0 0.0
  %447 = vmatprep.subr.mxu0 0.0
  %448 = vmatpush2.msra.mxu0 0.0
  %449 = vmatprep.subr.mxu0 0.0
  %450 = vmatpush2.msra.mxu0 0.0
  %451 = vmatprep.subr.mxu0 0.0
  %452 = vmatpush2.msra.mxu0 0.0
  %453 = vmatprep.subr.mxu0 0.0
  %454 = vmatpush2.msra.mxu0 0.0
  %455 = vmatprep.subr.mxu0 0.0
  %456 = vmatpush2.msra.mxu0 0.0
  %457 = vmatprep.subr.mxu0 0.0
  %458 = vmatpush2.msra.mxu0 0.0
  %459 = vmatprep.subr.mxu0 0.0
  %460 = vmatpush2.msra.mxu0 0.0
  %461 = vmatprep.subr.mxu0 0.0
  %462 = vmatpush2.msra.mxu0 0.0
  %463 = vmatprep.subr.mxu0 0.0
  %464 = vmatpush2.msra.mxu0 0.0
  %465 = vmatprep.mubr.f32.mxu0 0.0
  %466 = vmatmul.mubr.f32.gmra.mxu0 %v399
  %v467 = vpop.f32.mrf.mxu0
  %v468 = vadd.f32 0.0, %v467
  %v469 = vpop.f32.mrf.mxu0
  %470 = vdwg.mxu0
  %v471 = vadd.f32 %v343, %v468
  %v472 = vadd.f32 %v471, %v471
  %v473 = vsel %vm396, %v472, %v471
  %v474 = vxor.u32 %v473, 2147483648
  %v475 = vmul.f32 %v474, 1.442695
  %v476 = vpow.pop %v475
  %v477 = vadd.f32 %v476, 1.0
  %v478 = vrcp.pop %v477
  %v479 = vmul.f32 1.0, %v478
  %v480 = vadd.f32 %v479, %v479
  %v481 = vsub.f32 %v480, 1.0
  %v482 = vsel %vm396, %v481, %v479
  %v483 = vmul.f32 %v482, 0.0
  %485 = vrot.lane.b32.xlu0 %v482, 64
  %v486 = vpop.permute.xlu0 %485
  %v488 = vmul.f32 %v482, %v486
  %490 = vrot.lane.b32.xlu0 %v488, 32
  %v491 = vpop.permute.xlu0 %490
  %v493 = vadd.f32 %v483, %v491
  %v494 = vtanh.pop %v493
  %496 = vrot.lane.b32.xlu0 %v494, 64
  %v497 = vpop.permute.xlu0 %496
  %v499 = vmul.f32 %v482, %v497
  %501 = vrot.lane.b32.xlu0 %v499, 32
  %v502 = vpop.permute.xlu0 %501
  %v503 = vsel %vm397, %v502, 0
  %505 = vmatprep.subr.mxu0 0.0
  %506 = vmatpush1.msra.mxu0 0.0
  %507 = vmatprep.subr.mxu0 0.0
  %508 = vmatpush1.msra.mxu0 0.0
  %509 = vmatprep.subr.mxu0 0.0
  %510 = vmatpush1.msra.mxu0 0.0
  %511 = vmatprep.subr.mxu0 0.0
  %512 = vmatpush1.msra.mxu0 0.0
  %513 = vmatprep.subr.mxu0 0.0
  %514 = vmatpush1.msra.mxu0 0.0
  %515 = vmatprep.subr.mxu0 0.0
  %516 = vmatpush1.msra.mxu0 0.0
  %517 = vmatprep.subr.mxu0 0.0
  %518 = vmatpush1.msra.mxu0 0.0
  %519 = vmatprep.subr.mxu0 0.0
  %520 = vmatpush1.msra.mxu0 0.0
  %521 = vmatprep.subr.mxu0 0.0
  %522 = vmatpush1.msra.mxu0 0.0
  %523 = vmatprep.subr.mxu0 0.0
  %524 = vmatpush1.msra.mxu0 0.0
  %525 = vmatprep.subr.mxu0 0.0
  %526 = vmatpush1.msra.mxu0 0.0
  %527 = vmatprep.subr.mxu0 0.0
  %528 = vmatpush1.msra.mxu0 0.0
  %529 = vmatprep.subr.mxu0 0.0
  %530 = vmatpush1.msra.mxu0 %v388
  %531 = vmatprep.subr.mxu0 0.0
  %532 = vmatpush1.msra.mxu0 %v387
  %533 = vmatprep.subr.mxu0 0.0
  %534 = vmatpush1.msra.mxu0 %v386
  %535 = vmatprep.subr.mxu0 0.0
  %536 = vmatpush1.msra.mxu0 %v385
  %537 = vmatprep.subr.mxu0 0.0
  %538 = vmatpush2.msra.mxu0 0.0
  %539 = vmatprep.subr.mxu0 0.0
  %540 = vmatpush2.msra.mxu0 0.0
  %541 = vmatprep.subr.mxu0 0.0
  %542 = vmatpush2.msra.mxu0 0.0
  %543 = vmatprep.subr.mxu0 0.0
  %544 = vmatpush2.msra.mxu0 0.0
  %545 = vmatprep.subr.mxu0 0.0
  %546 = vmatpush2.msra.mxu0 0.0
  %547 = vmatprep.subr.mxu0 0.0
  %548 = vmatpush2.msra.mxu0 0.0
  %549 = vmatprep.subr.mxu0 0.0
  %550 = vmatpush2.msra.mxu0 0.0
  %551 = vmatprep.subr.mxu0 0.0
  %552 = vmatpush2.msra.mxu0 0.0
  %553 = vmatprep.subr.mxu0 0.0
  %554 = vmatpush2.msra.mxu0 0.0
  %555 = vmatprep.subr.mxu0 0.0
  %556 = vmatpush2.msra.mxu0 0.0
  %557 = vmatprep.subr.mxu0 0.0
  %558 = vmatpush2.msra.mxu0 0.0
  %559 = vmatprep.subr.mxu0 0.0
  %560 = vmatpush2.msra.mxu0 0.0
  %561 = vmatprep.subr.mxu0 0.0
  %562 = vmatpush2.msra.mxu0 0.0
  %563 = vmatprep.subr.mxu0 0.0
  %564 = vmatpush2.msra.mxu0 0.0
  %565 = vmatprep.subr.mxu0 0.0
  %566 = vmatpush2.msra.mxu0 0.0
  %567 = vmatprep.subr.mxu0 0.0
  %568 = vmatpush2.msra.mxu0 0.0
  %569 = vmatprep.mubr.f32.mxu0 0.0
  %570 = vmatmul.mubr.f32.gmra.mxu0 %v503
  %v571 = vpop.f32.mrf.mxu0
  %v572 = vadd.f32 0.0, %v571
  %v573 = vpop.f32.mrf.mxu0
  %574 = vdwg.mxu0
  %575 = vmatprep.subr.mxu0 0.0
  %576 = vmatpush1.msra.mxu0 0.0
  %577 = vmatprep.subr.mxu0 0.0
  %578 = vmatpush1.msra.mxu0 0.0
  %579 = vmatprep.subr.mxu0 0.0
  %580 = vmatpush1.msra.mxu0 0.0
  %581 = vmatprep.subr.mxu0 0.0
  %582 = vmatpush1.msra.mxu0 0.0
  %583 = vmatprep.subr.mxu0 0.0
  %584 = vmatpush1.msra.mxu0 0.0
  %585 = vmatprep.subr.mxu0 0.0
  %586 = vmatpush1.msra.mxu0 0.0
  %587 = vmatprep.subr.mxu0 0.0
  %588 = vmatpush1.msra.mxu0 0.0
  %589 = vmatprep.subr.mxu0 0.0
  %590 = vmatpush1.msra.mxu0 0.0
  %591 = vmatprep.subr.mxu0 0.0
  %592 = vmatpush1.msra.mxu0 0.0
  %593 = vmatprep.subr.mxu0 0.0
  %594 = vmatpush1.msra.mxu0 0.0
  %595 = vmatprep.subr.mxu0 0.0
  %596 = vmatpush1.msra.mxu0 0.0
  %597 = vmatprep.subr.mxu0 0.0
  %598 = vmatpush1.msra.mxu0 0.0
  %599 = vmatprep.subr.mxu0 0.0
  %600 = vmatpush1.msra.mxu0 %v392
  %601 = vmatprep.subr.mxu0 0.0
  %602 = vmatpush1.msra.mxu0 %v391
  %603 = vmatprep.subr.mxu0 0.0
  %604 = vmatpush1.msra.mxu0 %v390
  %605 = vmatprep.subr.mxu0 0.0
  %606 = vmatpush1.msra.mxu0 %v389
  %607 = vmatprep.subr.mxu0 0.0
  %608 = vmatpush2.msra.mxu0 0.0
  %609 = vmatprep.subr.mxu0 0.0
  %610 = vmatpush2.msra.mxu0 0.0
  %611 = vmatprep.subr.mxu0 0.0
  %612 = vmatpush2.msra.mxu0 0.0
  %613 = vmatprep.subr.mxu0 0.0
  %614 = vmatpush2.msra.mxu0 0.0
  %615 = vmatprep.subr.mxu0 0.0
  %616 = vmatpush2.msra.mxu0 0.0
  %617 = vmatprep.subr.mxu0 0.0
  %618 = vmatpush2.msra.mxu0 0.0
  %619 = vmatprep.subr.mxu0 0.0
  %620 = vmatpush2.msra.mxu0 0.0
  %621 = vmatprep.subr.mxu0 0.0
  %622 = vmatpush2.msra.mxu0 0.0
  %623 = vmatprep.subr.mxu0 0.0
  %624 = vmatpush2.msra.mxu0 0.0
  %625 = vmatprep.subr.mxu0 0.0
  %626 = vmatpush2.msra.mxu0 0.0
  %627 = vmatprep.subr.mxu0 0.0
  %628 = vmatpush2.msra.mxu0 0.0
  %629 = vmatprep.subr.mxu0 0.0
  %630 = vmatpush2.msra.mxu0 0.0
  %631 = vmatprep.subr.mxu0 0.0
  %632 = vmatpush2.msra.mxu0 0.0
  %633 = vmatprep.subr.mxu0 0.0
  %634 = vmatpush2.msra.mxu0 0.0
  %635 = vmatprep.subr.mxu0 0.0
  %636 = vmatpush2.msra.mxu0 0.0
  %637 = vmatprep.subr.mxu0 0.0
  %638 = vmatpush2.msra.mxu0 0.0
  %639 = vmatprep.mubr.f32.mxu0 0.0
  %640 = vmatmul.mubr.f32.gmra.mxu0 %v399
  %v641 = vpop.f32.mrf.mxu0
  %v642 = vadd.f32 %v572, %v641
  %v643 = vpop.f32.mrf.mxu0
  %644 = vdwg.mxu0
  %v646 = vlaneseq
  %v647 = vshrl.u32 %v646, 7
  %v648 = vsub.s32 0, %v647
  %v649 = vrot.slane %v393, %v648
  %v651 = vadd.f32 %v642, %v649
  %v652 = vadd.f32 %v651, %v651
  %v653 = vsel %vm396, %v652, %v651
  %v654 = vxor.u32 %v653, 2147483648
  %v655 = vmul.f32 %v654, 1.442695
  %v656 = vpow.pop %v655
  %v657 = vadd.f32 %v656, 1.0
  %v658 = vrcp.pop %v657
  %v659 = vmul.f32 1.0, %v658
  %v660 = vadd.f32 %v659, %v659
  %v661 = vsub.f32 %v660, 1.0
  %v662 = vsel %vm396, %v661, %v659
  %v663 = vmul.f32 %v662, 0.0
  %665 = vrot.lane.b32.xlu0 %v662, 64
  %v666 = vpop.permute.xlu0 %665
  %v668 = vmul.f32 %v662, %v666
  %670 = vrot.lane.b32.xlu0 %v668, 32
  %v671 = vpop.permute.xlu0 %670
  %v673 = vadd.f32 %v663, %v671
  %v674 = vtanh.pop %v673
  %676 = vrot.lane.b32.xlu0 %v674, 64
  %v677 = vpop.permute.xlu0 %676
  %v679 = vmul.f32 %v662, %v677
  %681 = vrot.lane.b32.xlu0 %v679, 32
  %v682 = vpop.permute.xlu0 %681
  %684 = vst.msk [vmem:[#allocation2] sm:$0xff] %vm397, %v682
  %685 = vmatprep.subr.mxu0 0.0
  %686 = vmatpush1.msra.mxu0 0.0
  %687 = vmatprep.subr.mxu0 0.0
  %688 = vmatpush1.msra.mxu0 0.0
  %689 = vmatprep.subr.mxu0 0.0
  %690 = vmatpush1.msra.mxu0 0.0
  %691 = vmatprep.subr.mxu0 0.0
  %692 = vmatpush1.msra.mxu0 0.0
  %693 = vmatprep.subr.mxu0 0.0
  %694 = vmatpush1.msra.mxu0 0.0
  %695 = vmatprep.subr.mxu0 0.0
  %696 = vmatpush1.msra.mxu0 0.0
  %697 = vmatprep.subr.mxu0 0.0
  %698 = vmatpush1.msra.mxu0 0.0
  %699 = vmatprep.subr.mxu0 0.0
  %700 = vmatpush1.msra.mxu0 0.0
  %701 = vmatprep.subr.mxu0 0.0
  %702 = vmatpush1.msra.mxu0 0.0
  %703 = vmatprep.subr.mxu0 0.0
  %704 = vmatpush1.msra.mxu0 0.0
  %705 = vmatprep.subr.mxu0 0.0
  %706 = vmatpush1.msra.mxu0 0.0
  %707 = vmatprep.subr.mxu0 0.0
  %708 = vmatpush1.msra.mxu0 0.0
  %709 = vmatprep.subr.mxu0 0.0
  %710 = vmatpush1.msra.mxu0 %v384
  %711 = vmatprep.subr.mxu0 0.0
  %712 = vmatpush1.msra.mxu0 %v383
  %713 = vmatprep.subr.mxu0 0.0
  %714 = vmatpush1.msra.mxu0 %v382
  %715 = vmatprep.subr.mxu0 0.0
  %716 = vmatpush1.msra.mxu0 %v381
  %717 = vmatprep.subr.mxu0 0.0
  %718 = vmatpush2.msra.mxu0 0.0
  %719 = vmatprep.subr.mxu0 0.0
  %720 = vmatpush2.msra.mxu0 0.0
  %721 = vmatprep.subr.mxu0 0.0
  %722 = vmatpush2.msra.mxu0 0.0
  %723 = vmatprep.subr.mxu0 0.0
  %724 = vmatpush2.msra.mxu0 0.0
  %725 = vmatprep.subr.mxu0 0.0
  %726 = vmatpush2.msra.mxu0 0.0
  %727 = vmatprep.subr.mxu0 0.0
  %728 = vmatpush2.msra.mxu0 0.0
  %729 = vmatprep.subr.mxu0 0.0
  %730 = vmatpush2.msra.mxu0 0.0
  %731 = vmatprep.subr.mxu0 0.0
  %732 = vmatpush2.msra.mxu0 0.0
  %733 = vmatprep.subr.mxu0 0.0
  %734 = vmatpush2.msra.mxu0 0.0
  %735 = vmatprep.subr.mxu0 0.0
  %736 = vmatpush2.msra.mxu0 0.0
  %737 = vmatprep.subr.mxu0 0.0
  %738 = vmatpush2.msra.mxu0 0.0
  %739 = vmatprep.subr.mxu0 0.0
  %740 = vmatpush2.msra.mxu0 0.0
  %741 = vmatprep.subr.mxu0 0.0
  %742 = vmatpush2.msra.mxu0 0.0
  %743 = vmatprep.subr.mxu0 0.0
  %744 = vmatpush2.msra.mxu0 0.0
  %745 = vmatprep.subr.mxu0 0.0
  %746 = vmatpush2.msra.mxu0 0.0
  %747 = vmatprep.subr.mxu0 0.0
  %748 = vmatpush2.msra.mxu0 0.0
  %749 = vmatprep.mubr.f32.mxu0 0.0
  %750 = vmatmul.mubr.f32.gmra.mxu0 %v503
  %v751 = vpop.f32.mrf.mxu0
  %v752 = vadd.f32 0.0, %v751
  %v753 = vpop.f32.mrf.mxu0
  %754 = vdwg.mxu0
  %v755 = vadd.f32 %v348, %v752
  %v756 = vadd.f32 %v755, %v755
  %v757 = vsel %vm396, %v756, %v755
  %v758 = vxor.u32 %v757, 2147483648
  %v759 = vmul.f32 %v758, 1.442695
  %v760 = vpow.pop %v759
  %v761 = vadd.f32 %v760, 1.0
  %v762 = vrcp.pop %v761
  %v763 = vmul.f32 1.0, %v762
  %v764 = vadd.f32 %v763, %v763
  %v765 = vsub.f32 %v764, 1.0
  %v766 = vsel %vm396, %v765, %v763
  %v767 = vmul.f32 %v766, %v493
  %769 = vrot.lane.b32.xlu0 %v766, 64
  %v770 = vpop.permute.xlu0 %769
  %v772 = vmul.f32 %v766, %v770
  %774 = vrot.lane.b32.xlu0 %v772, 32
  %v775 = vpop.permute.xlu0 %774
  %v777 = vadd.f32 %v767, %v775
  %v778 = vtanh.pop %v777
  %780 = vrot.lane.b32.xlu0 %v778, 64
  %v781 = vpop.permute.xlu0 %780
  %v783 = vmul.f32 %v766, %v781
  %785 = vrot.lane.b32.xlu0 %v783, 32
  %v786 = vpop.permute.xlu0 %785
  %v787 = vsel %vm397, %v786, 0
  %789 = vmatprep.subr.mxu0 0.0
  %790 = vmatpush1.msra.mxu0 0.0
  %791 = vmatprep.subr.mxu0 0.0
  %792 = vmatpush1.msra.mxu0 0.0
  %793 = vmatprep.subr.mxu0 0.0
  %794 = vmatpush1.msra.mxu0 0.0
  %795 = vmatprep.subr.mxu0 0.0
  %796 = vmatpush1.msra.mxu0 0.0
  %797 = vmatprep.subr.mxu0 0.0
  %798 = vmatpush1.msra.mxu0 0.0
  %799 = vmatprep.subr.mxu0 0.0
  %800 = vmatpush1.msra.mxu0 0.0
  %801 = vmatprep.subr.mxu0 0.0
  %802 = vmatpush1.msra.mxu0 0.0
  %803 = vmatprep.subr.mxu0 0.0
  %804 = vmatpush1.msra.mxu0 0.0
  %805 = vmatprep.subr.mxu0 0.0
  %806 = vmatpush1.msra.mxu0 0.0
  %807 = vmatprep.subr.mxu0 0.0
  %808 = vmatpush1.msra.mxu0 0.0
  %809 = vmatprep.subr.mxu0 0.0
  %810 = vmatpush1.msra.mxu0 0.0
  %811 = vmatprep.subr.mxu0 0.0
  %812 = vmatpush1.msra.mxu0 0.0
  %813 = vmatprep.subr.mxu0 0.0
  %814 = vmatpush1.msra.mxu0 %v388
  %815 = vmatprep.subr.mxu0 0.0
  %816 = vmatpush1.msra.mxu0 %v387
  %817 = vmatprep.subr.mxu0 0.0
  %818 = vmatpush1.msra.mxu0 %v386
  %819 = vmatprep.subr.mxu0 0.0
  %820 = vmatpush1.msra.mxu0 %v385
  %821 = vmatprep.subr.mxu0 0.0
  %822 = vmatpush2.msra.mxu0 0.0
  %823 = vmatprep.subr.mxu0 0.0
  %824 = vmatpush2.msra.mxu0 0.0
  %825 = vmatprep.subr.mxu0 0.0
  %826 = vmatpush2.msra.mxu0 0.0
  %827 = vmatprep.subr.mxu0 0.0
  %828 = vmatpush2.msra.mxu0 0.0
  %829 = vmatprep.subr.mxu0 0.0
  %830 = vmatpush2.msra.mxu0 0.0
  %831 = vmatprep.subr.mxu0 0.0
  %832 = vmatpush2.msra.mxu0 0.0
  %833 = vmatprep.subr.mxu0 0.0
  %834 = vmatpush2.msra.mxu0 0.0
  %835 = vmatprep.subr.mxu0 0.0
  %836 = vmatpush2.msra.mxu0 0.0
  %837 = vmatprep.subr.mxu0 0.0
  %838 = vmatpush2.msra.mxu0 0.0
  %839 = vmatprep.subr.mxu0 0.0
  %840 = vmatpush2.msra.mxu0 0.0
  %841 = vmatprep.subr.mxu0 0.0
  %842 = vmatpush2.msra.mxu0 0.0
  %843 = vmatprep.subr.mxu0 0.0
  %844 = vmatpush2.msra.mxu0 0.0
  %845 = vmatprep.subr.mxu0 0.0
  %846 = vmatpush2.msra.mxu0 0.0
  %847 = vmatprep.subr.mxu0 0.0
  %848 = vmatpush2.msra.mxu0 0.0
  %849 = vmatprep.subr.mxu0 0.0
  %850 = vmatpush2.msra.mxu0 0.0
  %851 = vmatprep.subr.mxu0 0.0
  %852 = vmatpush2.msra.mxu0 0.0
  %853 = vmatprep.mubr.f32.mxu0 0.0
  %854 = vmatmul.mubr.f32.gmra.mxu0 %v787
  %v855 = vpop.f32.mrf.mxu0
  %v856 = vadd.f32 0.0, %v855
  %v857 = vpop.f32.mrf.mxu0
  %858 = vdwg.mxu0
  %v859 = vsel %vm397, %v682, 0
  %861 = vmatprep.subr.mxu0 0.0
  %862 = vmatpush1.msra.mxu0 0.0
  %863 = vmatprep.subr.mxu0 0.0
  %864 = vmatpush1.msra.mxu0 0.0
  %865 = vmatprep.subr.mxu0 0.0
  %866 = vmatpush1.msra.mxu0 0.0
  %867 = vmatprep.subr.mxu0 0.0
  %868 = vmatpush1.msra.mxu0 0.0
  %869 = vmatprep.subr.mxu0 0.0
  %870 = vmatpush1.msra.mxu0 0.0
  %871 = vmatprep.subr.mxu0 0.0
  %872 = vmatpush1.msra.mxu0 0.0
  %873 = vmatprep.subr.mxu0 0.0
  %874 = vmatpush1.msra.mxu0 0.0
  %875 = vmatprep.subr.mxu0 0.0
  %876 = vmatpush1.msra.mxu0 0.0
  %877 = vmatprep.subr.mxu0 0.0
  %878 = vmatpush1.msra.mxu0 0.0
  %879 = vmatprep.subr.mxu0 0.0
  %880 = vmatpush1.msra.mxu0 0.0
  %881 = vmatprep.subr.mxu0 0.0
  %882 = vmatpush1.msra.mxu0 0.0
  %883 = vmatprep.subr.mxu0 0.0
  %884 = vmatpush1.msra.mxu0 0.0
  %885 = vmatprep.subr.mxu0 0.0
  %886 = vmatpush1.msra.mxu0 %v392
  %887 = vmatprep.subr.mxu0 0.0
  %888 = vmatpush1.msra.mxu0 %v391
  %889 = vmatprep.subr.mxu0 0.0
  %890 = vmatpush1.msra.mxu0 %v390
  %891 = vmatprep.subr.mxu0 0.0
  %892 = vmatpush1.msra.mxu0 %v389
  %893 = vmatprep.subr.mxu0 0.0
  %894 = vmatpush2.msra.mxu0 0.0
  %895 = vmatprep.subr.mxu0 0.0
  %896 = vmatpush2.msra.mxu0 0.0
  %897 = vmatprep.subr.mxu0 0.0
  %898 = vmatpush2.msra.mxu0 0.0
  %899 = vmatprep.subr.mxu0 0.0
  %900 = vmatpush2.msra.mxu0 0.0
  %901 = vmatprep.subr.mxu0 0.0
  %902 = vmatpush2.msra.mxu0 0.0
  %903 = vmatprep.subr.mxu0 0.0
  %904 = vmatpush2.msra.mxu0 0.0
  %905 = vmatprep.subr.mxu0 0.0
  %906 = vmatpush2.msra.mxu0 0.0
  %907 = vmatprep.subr.mxu0 0.0
  %908 = vmatpush2.msra.mxu0 0.0
  %909 = vmatprep.subr.mxu0 0.0
  %910 = vmatpush2.msra.mxu0 0.0
  %911 = vmatprep.subr.mxu0 0.0
  %912 = vmatpush2.msra.mxu0 0.0
  %913 = vmatprep.subr.mxu0 0.0
  %914 = vmatpush2.msra.mxu0 0.0
  %915 = vmatprep.subr.mxu0 0.0
  %916 = vmatpush2.msra.mxu0 0.0
  %917 = vmatprep.subr.mxu0 0.0
  %918 = vmatpush2.msra.mxu0 0.0
  %919 = vmatprep.subr.mxu0 0.0
  %920 = vmatpush2.msra.mxu0 0.0
  %921 = vmatprep.subr.mxu0 0.0
  %922 = vmatpush2.msra.mxu0 0.0
  %923 = vmatprep.subr.mxu0 0.0
  %924 = vmatpush2.msra.mxu0 0.0
  %925 = vmatprep.mubr.f32.mxu0 0.0
  %926 = vmatmul.mubr.f32.gmra.mxu0 %v859
  %v927 = vpop.f32.mrf.mxu0
  %v928 = vadd.f32 %v856, %v927
  %v929 = vpop.f32.mrf.mxu0
  %930 = vdwg.mxu0
  %v931 = vadd.f32 %v928, %v649
  %v932 = vadd.f32 %v931, %v931
  %v933 = vsel %vm396, %v932, %v931
  %v934 = vxor.u32 %v933, 2147483648
  %v935 = vmul.f32 %v934, 1.442695
  %v936 = vpow.pop %v935
  %v937 = vadd.f32 %v936, 1.0
  %v938 = vrcp.pop %v937
  %v939 = vmul.f32 1.0, %v938
  %v940 = vadd.f32 %v939, %v939
  %v941 = vsub.f32 %v940, 1.0
  %v942 = vsel %vm396, %v941, %v939
  %v943 = vmul.f32 %v942, %v673
  %945 = vrot.lane.b32.xlu0 %v942, 64
  %v946 = vpop.permute.xlu0 %945
  %v948 = vmul.f32 %v942, %v946
  %950 = vrot.lane.b32.xlu0 %v948, 32
  %v951 = vpop.permute.xlu0 %950
  %v953 = vadd.f32 %v943, %v951
  %v954 = vtanh.pop %v953
  %956 = vrot.lane.b32.xlu0 %v954, 64
  %v957 = vpop.permute.xlu0 %956
  %v959 = vmul.f32 %v942, %v957
  %961 = vrot.lane.b32.xlu0 %v959, 32
  %v962 = vpop.permute.xlu0 %961
  %964 = vst.msk [vmem:[#allocation2 + $0x8] sm:$0xff] %vm397, %v962
  %965 = vmatprep.subr.mxu0 0.0
  %966 = vmatpush1.msra.mxu0 0.0
  %967 = vmatprep.subr.mxu0 0.0
  %968 = vmatpush1.msra.mxu0 0.0
  %969 = vmatprep.subr.mxu0 0.0
  %970 = vmatpush1.msra.mxu0 0.0
  %971 = vmatprep.subr.mxu0 0.0
  %972 = vmatpush1.msra.mxu0 0.0
  %973 = vmatprep.subr.mxu0 0.0
  %974 = vmatpush1.msra.mxu0 0.0
  %975 = vmatprep.subr.mxu0 0.0
  %976 = vmatpush1.msra.mxu0 0.0
  %977 = vmatprep.subr.mxu0 0.0
  %978 = vmatpush1.msra.mxu0 0.0
  %979 = vmatprep.subr.mxu0 0.0
  %980 = vmatpush1.msra.mxu0 0.0
  %981 = vmatprep.subr.mxu0 0.0
  %982 = vmatpush1.msra.mxu0 0.0
  %983 = vmatprep.subr.mxu0 0.0
  %984 = vmatpush1.msra.mxu0 0.0
  %985 = vmatprep.subr.mxu0 0.0
  %986 = vmatpush1.msra.mxu0 0.0
  %987 = vmatprep.subr.mxu0 0.0
  %988 = vmatpush1.msra.mxu0 0.0
  %989 = vmatprep.subr.mxu0 0.0
  %990 = vmatpush1.msra.mxu0 %v384
  %991 = vmatprep.subr.mxu0 0.0
  %992 = vmatpush1.msra.mxu0 %v383
  %993 = vmatprep.subr.mxu0 0.0
  %994 = vmatpush1.msra.mxu0 %v382
  %995 = vmatprep.subr.mxu0 0.0
  %996 = vmatpush1.msra.mxu0 %v381
  %997 = vmatprep.subr.mxu0 0.0
  %998 = vmatpush2.msra.mxu0 0.0
  %999 = vmatprep.subr.mxu0 0.0
  %1000 = vmatpush2.msra.mxu0 0.0
  %1001 = vmatprep.subr.mxu0 0.0
  %1002 = vmatpush2.msra.mxu0 0.0
  %1003 = vmatprep.subr.mxu0 0.0
  %1004 = vmatpush2.msra.mxu0 0.0
  %1005 = vmatprep.subr.mxu0 0.0
  %1006 = vmatpush2.msra.mxu0 0.0
  %1007 = vmatprep.subr.mxu0 0.0
  %1008 = vmatpush2.msra.mxu0 0.0
  %1009 = vmatprep.subr.mxu0 0.0
  %1010 = vmatpush2.msra.mxu0 0.0
  %1011 = vmatprep.subr.mxu0 0.0
  %1012 = vmatpush2.msra.mxu0 0.0
  %1013 = vmatprep.subr.mxu0 0.0
  %1014 = vmatpush2.msra.mxu0 0.0
  %1015 = vmatprep.subr.mxu0 0.0
  %1016 = vmatpush2.msra.mxu0 0.0
  %1017 = vmatprep.subr.mxu0 0.0
  %1018 = vmatpush2.msra.mxu0 0.0
  %1019 = vmatprep.subr.mxu0 0.0
  %1020 = vmatpush2.msra.mxu0 0.0
  %1021 = vmatprep.subr.mxu0 0.0
  %1022 = vmatpush2.msra.mxu0 0.0
  %1023 = vmatprep.subr.mxu0 0.0
  %1024 = vmatpush2.msra.mxu0 0.0
  %1025 = vmatprep.subr.mxu0 0.0
  %1026 = vmatpush2.msra.mxu0 0.0
  %1027 = vmatprep.subr.mxu0 0.0
  %1028 = vmatpush2.msra.mxu0 0.0
  %1029 = vmatprep.mubr.f32.mxu0 0.0
  %1030 = vmatmul.mubr.f32.gmra.mxu0 %v787
  %v1031 = vpop.f32.mrf.mxu0
  %v1032 = vadd.f32 0.0, %v1031
  %v1033 = vpop.f32.mrf.mxu0
  %1034 = vdwg.mxu0
  %v1035 = vadd.f32 %v353, %v1032
  %v1036 = vadd.f32 %v1035, %v1035
  %v1037 = vsel %vm396, %v1036, %v1035
  %v1038 = vxor.u32 %v1037, 2147483648
  %v1039 = vmul.f32 %v1038, 1.442695
  %v1040 = vpow.pop %v1039
  %v1041 = vadd.f32 %v1040, 1.0
  %v1042 = vrcp.pop %v1041
  %v1043 = vmul.f32 1.0, %v1042
  %v1044 = vadd.f32 %v1043, %v1043
  %v1045 = vsub.f32 %v1044, 1.0
  %v1046 = vsel %vm396, %v1045, %v1043
  %v1047 = vmul.f32 %v1046, %v777
  %1049 = vrot.lane.b32.xlu0 %v1046, 64
  %v1050 = vpop.permute.xlu0 %1049
  %v1052 = vmul.f32 %v1046, %v1050
  %1054 = vrot.lane.b32.xlu0 %v1052, 32
  %v1055 = vpop.permute.xlu0 %1054
  %v1057 = vadd.f32 %v1047, %v1055
  %v1058 = vtanh.pop %v1057
  %1060 = vrot.lane.b32.xlu0 %v1058, 64
  %v1061 = vpop.permute.xlu0 %1060
  %v1063 = vmul.f32 %v1046, %v1061
  %1065 = vrot.lane.b32.xlu0 %v1063, 32
  %v1066 = vpop.permute.xlu0 %1065
  %v1067 = vsel %vm397, %v1066, 0
  %1069 = vmatprep.subr.mxu0 0.0
  %1070 = vmatpush1.msra.mxu0 0.0
  %1071 = vmatprep.subr.mxu0 0.0
  %1072 = vmatpush1.msra.mxu0 0.0
  %1073 = vmatprep.subr.mxu0 0.0
  %1074 = vmatpush1.msra.mxu0 0.0
  %1075 = vmatprep.subr.mxu0 0.0
  %1076 = vmatpush1.msra.mxu0 0.0
  %1077 = vmatprep.subr.mxu0 0.0
  %1078 = vmatpush1.msra.mxu0 0.0
  %1079 = vmatprep.subr.mxu0 0.0
  %1080 = vmatpush1.msra.mxu0 0.0
  %1081 = vmatprep.subr.mxu0 0.0
  %1082 = vmatpush1.msra.mxu0 0.0
  %1083 = vmatprep.subr.mxu0 0.0
  %1084 = vmatpush1.msra.mxu0 0.0
  %1085 = vmatprep.subr.mxu0 0.0
  %1086 = vmatpush1.msra.mxu0 0.0
  %1087 = vmatprep.subr.mxu0 0.0
  %1088 = vmatpush1.msra.mxu0 0.0
  %1089 = vmatprep.subr.mxu0 0.0
  %1090 = vmatpush1.msra.mxu0 0.0
  %1091 = vmatprep.subr.mxu0 0.0
  %1092 = vmatpush1.msra.mxu0 0.0
  %1093 = vmatprep.subr.mxu0 0.0
  %1094 = vmatpush1.msra.mxu0 %v388
  %1095 = vmatprep.subr.mxu0 0.0
  %1096 = vmatpush1.msra.mxu0 %v387
  %1097 = vmatprep.subr.mxu0 0.0
  %1098 = vmatpush1.msra.mxu0 %v386
  %1099 = vmatprep.subr.mxu0 0.0
  %1100 = vmatpush1.msra.mxu0 %v385
  %1101 = vmatprep.subr.mxu0 0.0
  %1102 = vmatpush2.msra.mxu0 0.0
  %1103 = vmatprep.subr.mxu0 0.0
  %1104 = vmatpush2.msra.mxu0 0.0
  %1105 = vmatprep.subr.mxu0 0.0
  %1106 = vmatpush2.msra.mxu0 0.0
  %1107 = vmatprep.subr.mxu0 0.0
  %1108 = vmatpush2.msra.mxu0 0.0
  %1109 = vmatprep.subr.mxu0 0.0
  %1110 = vmatpush2.msra.mxu0 0.0
  %1111 = vmatprep.subr.mxu0 0.0
  %1112 = vmatpush2.msra.mxu0 0.0
  %1113 = vmatprep.subr.mxu0 0.0
  %1114 = vmatpush2.msra.mxu0 0.0
  %1115 = vmatprep.subr.mxu0 0.0
  %1116 = vmatpush2.msra.mxu0 0.0
  %1117 = vmatprep.subr.mxu0 0.0
  %1118 = vmatpush2.msra.mxu0 0.0
  %1119 = vmatprep.subr.mxu0 0.0
  %1120 = vmatpush2.msra.mxu0 0.0
  %1121 = vmatprep.subr.mxu0 0.0
  %1122 = vmatpush2.msra.mxu0 0.0
  %1123 = vmatprep.subr.mxu0 0.0
  %1124 = vmatpush2.msra.mxu0 0.0
  %1125 = vmatprep.subr.mxu0 0.0
  %1126 = vmatpush2.msra.mxu0 0.0
  %1127 = vmatprep.subr.mxu0 0.0
  %1128 = vmatpush2.msra.mxu0 0.0
  %1129 = vmatprep.subr.mxu0 0.0
  %1130 = vmatpush2.msra.mxu0 0.0
  %1131 = vmatprep.subr.mxu0 0.0
  %1132 = vmatpush2.msra.mxu0 0.0
  %1133 = vmatprep.mubr.f32.mxu0 0.0
  %1134 = vmatmul.mubr.f32.gmra.mxu0 %v1067
  %v1135 = vpop.f32.mrf.mxu0
  %v1136 = vadd.f32 0.0, %v1135
  %v1137 = vpop.f32.mrf.mxu0
  %1138 = vdwg.mxu0
  %v1139 = vsel %vm397, %v962, 0
  %1141 = vmatprep.subr.mxu0 0.0
  %1142 = vmatpush1.msra.mxu0 0.0
  %1143 = vmatprep.subr.mxu0 0.0
  %1144 = vmatpush1.msra.mxu0 0.0
  %1145 = vmatprep.subr.mxu0 0.0
  %1146 = vmatpush1.msra.mxu0 0.0
  %1147 = vmatprep.subr.mxu0 0.0
  %1148 = vmatpush1.msra.mxu0 0.0
  %1149 = vmatprep.subr.mxu0 0.0
  %1150 = vmatpush1.msra.mxu0 0.0
  %1151 = vmatprep.subr.mxu0 0.0
  %1152 = vmatpush1.msra.mxu0 0.0
  %1153 = vmatprep.subr.mxu0 0.0
  %1154 = vmatpush1.msra.mxu0 0.0
  %1155 = vmatprep.subr.mxu0 0.0
  %1156 = vmatpush1.msra.mxu0 0.0
  %1157 = vmatprep.subr.mxu0 0.0
  %1158 = vmatpush1.msra.mxu0 0.0
  %1159 = vmatprep.subr.mxu0 0.0
  %1160 = vmatpush1.msra.mxu0 0.0
  %1161 = vmatprep.subr.mxu0 0.0
  %1162 = vmatpush1.msra.mxu0 0.0
  %1163 = vmatprep.subr.mxu0 0.0
  %1164 = vmatpush1.msra.mxu0 0.0
  %1165 = vmatprep.subr.mxu0 0.0
  %1166 = vmatpush1.msra.mxu0 %v392
  %1167 = vmatprep.subr.mxu0 0.0
  %1168 = vmatpush1.msra.mxu0 %v391
  %1169 = vmatprep.subr.mxu0 0.0
  %1170 = vmatpush1.msra.mxu0 %v390
  %1171 = vmatprep.subr.mxu0 0.0
  %1172 = vmatpush1.msra.mxu0 %v389
  %1173 = vmatprep.subr.mxu0 0.0
  %1174 = vmatpush2.msra.mxu0 0.0
  %1175 = vmatprep.subr.mxu0 0.0
  %1176 = vmatpush2.msra.mxu0 0.0
  %1177 = vmatprep.subr.mxu0 0.0
  %1178 = vmatpush2.msra.mxu0 0.0
  %1179 = vmatprep.subr.mxu0 0.0
  %1180 = vmatpush2.msra.mxu0 0.0
  %1181 = vmatprep.subr.mxu0 0.0
  %1182 = vmatpush2.msra.mxu0 0.0
  %1183 = vmatprep.subr.mxu0 0.0
  %1184 = vmatpush2.msra.mxu0 0.0
  %1185 = vmatprep.subr.mxu0 0.0
  %1186 = vmatpush2.msra.mxu0 0.0
  %1187 = vmatprep.subr.mxu0 0.0
  %1188 = vmatpush2.msra.mxu0 0.0
  %1189 = vmatprep.subr.mxu0 0.0
  %1190 = vmatpush2.msra.mxu0 0.0
  %1191 = vmatprep.subr.mxu0 0.0
  %1192 = vmatpush2.msra.mxu0 0.0
  %1193 = vmatprep.subr.mxu0 0.0
  %1194 = vmatpush2.msra.mxu0 0.0
  %1195 = vmatprep.subr.mxu0 0.0
  %1196 = vmatpush2.msra.mxu0 0.0
  %1197 = vmatprep.subr.mxu0 0.0
  %1198 = vmatpush2.msra.mxu0 0.0
  %1199 = vmatprep.subr.mxu0 0.0
  %1200 = vmatpush2.msra.mxu0 0.0
  %1201 = vmatprep.subr.mxu0 0.0
  %1202 = vmatpush2.msra.mxu0 0.0
  %1203 = vmatprep.subr.mxu0 0.0
  %1204 = vmatpush2.msra.mxu0 0.0
  %1205 = vmatprep.mubr.f32.mxu0 0.0
  %1206 = vmatmul.mubr.f32.gmra.mxu0 %v1139
  %v1207 = vpop.f32.mrf.mxu0
  %v1208 = vadd.f32 %v1136, %v1207
  %v1209 = vpop.f32.mrf.mxu0
  %1210 = vdwg.mxu0
  %v1211 = vadd.f32 %v1208, %v649
  %v1212 = vadd.f32 %v1211, %v1211
  %v1213 = vsel %vm396, %v1212, %v1211
  %v1214 = vxor.u32 %v1213, 2147483648
  %v1215 = vmul.f32 %v1214, 1.442695
  %v1216 = vpow.pop %v1215
  %v1217 = vadd.f32 %v1216, 1.0
  %v1218 = vrcp.pop %v1217
  %v1219 = vmul.f32 1.0, %v1218
  %v1220 = vadd.f32 %v1219, %v1219
  %v1221 = vsub.f32 %v1220, 1.0
  %v1222 = vsel %vm396, %v1221, %v1219
  %v1223 = vmul.f32 %v1222, %v953
  %1225 = vrot.lane.b32.xlu0 %v1222, 64
  %v1226 = vpop.permute.xlu0 %1225
  %v1228 = vmul.f32 %v1222, %v1226
  %1230 = vrot.lane.b32.xlu0 %v1228, 32
  %v1231 = vpop.permute.xlu0 %1230
  %v1233 = vadd.f32 %v1223, %v1231
  %v1234 = vtanh.pop %v1233
  %1236 = vrot.lane.b32.xlu0 %v1234, 64
  %v1237 = vpop.permute.xlu0 %1236
  %v1239 = vmul.f32 %v1222, %v1237
  %1241 = vrot.lane.b32.xlu0 %v1239, 32
  %v1242 = vpop.permute.xlu0 %1241
  %1244 = vst.msk [vmem:[#allocation2 + $0x10] sm:$0xff] %vm397, %v1242
  %1245 = vmatprep.subr.mxu0 0.0
  %1246 = vmatpush1.msra.mxu0 0.0
  %1247 = vmatprep.subr.mxu0 0.0
  %1248 = vmatpush1.msra.mxu0 0.0
  %1249 = vmatprep.subr.mxu0 0.0
  %1250 = vmatpush1.msra.mxu0 0.0
  %1251 = vmatprep.subr.mxu0 0.0
  %1252 = vmatpush1.msra.mxu0 0.0
  %1253 = vmatprep.subr.mxu0 0.0
  %1254 = vmatpush1.msra.mxu0 0.0
  %1255 = vmatprep.subr.mxu0 0.0
  %1256 = vmatpush1.msra.mxu0 0.0
  %1257 = vmatprep.subr.mxu0 0.0
  %1258 = vmatpush1.msra.mxu0 0.0
  %1259 = vmatprep.subr.mxu0 0.0
  %1260 = vmatpush1.msra.mxu0 0.0
  %1261 = vmatprep.subr.mxu0 0.0
  %1262 = vmatpush1.msra.mxu0 0.0
  %1263 = vmatprep.subr.mxu0 0.0
  %1264 = vmatpush1.msra.mxu0 0.0
  %1265 = vmatprep.subr.mxu0 0.0
  %1266 = vmatpush1.msra.mxu0 0.0
  %1267 = vmatprep.subr.mxu0 0.0
  %1268 = vmatpush1.msra.mxu0 0.0
  %1269 = vmatprep.subr.mxu0 0.0
  %1270 = vmatpush1.msra.mxu0 %v384
  %1271 = vmatprep.subr.mxu0 0.0
  %1272 = vmatpush1.msra.mxu0 %v383
  %1273 = vmatprep.subr.mxu0 0.0
  %1274 = vmatpush1.msra.mxu0 %v382
  %1275 = vmatprep.subr.mxu0 0.0
  %1276 = vmatpush1.msra.mxu0 %v381
  %1277 = vmatprep.subr.mxu0 0.0
  %1278 = vmatpush2.msra.mxu0 0.0
  %1279 = vmatprep.subr.mxu0 0.0
  %1280 = vmatpush2.msra.mxu0 0.0
  %1281 = vmatprep.subr.mxu0 0.0
  %1282 = vmatpush2.msra.mxu0 0.0
  %1283 = vmatprep.subr.mxu0 0.0
  %1284 = vmatpush2.msra.mxu0 0.0
  %1285 = vmatprep.subr.mxu0 0.0
  %1286 = vmatpush2.msra.mxu0 0.0
  %1287 = vmatprep.subr.mxu0 0.0
  %1288 = vmatpush2.msra.mxu0 0.0
  %1289 = vmatprep.subr.mxu0 0.0
  %1290 = vmatpush2.msra.mxu0 0.0
  %1291 = vmatprep.subr.mxu0 0.0
  %1292 = vmatpush2.msra.mxu0 0.0
  %1293 = vmatprep.subr.mxu0 0.0
  %1294 = vmatpush2.msra.mxu0 0.0
  %1295 = vmatprep.subr.mxu0 0.0
  %1296 = vmatpush2.msra.mxu0 0.0
  %1297 = vmatprep.subr.mxu0 0.0
  %1298 = vmatpush2.msra.mxu0 0.0
  %1299 = vmatprep.subr.mxu0 0.0
  %1300 = vmatpush2.msra.mxu0 0.0
  %1301 = vmatprep.subr.mxu0 0.0
  %1302 = vmatpush2.msra.mxu0 0.0
  %1303 = vmatprep.subr.mxu0 0.0
  %1304 = vmatpush2.msra.mxu0 0.0
  %1305 = vmatprep.subr.mxu0 0.0
  %1306 = vmatpush2.msra.mxu0 0.0
  %1307 = vmatprep.subr.mxu0 0.0
  %1308 = vmatpush2.msra.mxu0 0.0
  %1309 = vmatprep.mubr.f32.mxu0 0.0
  %1310 = vmatmul.mubr.f32.gmra.mxu0 %v1067
  %v1311 = vpop.f32.mrf.mxu0
  %v1312 = vadd.f32 0.0, %v1311
  %v1313 = vpop.f32.mrf.mxu0
  %1314 = vdwg.mxu0
  %v1315 = vadd.f32 %v358, %v1312
  %v1316 = vadd.f32 %v1315, %v1315
  %v1317 = vsel %vm396, %v1316, %v1315
  %v1318 = vxor.u32 %v1317, 2147483648
  %v1319 = vmul.f32 %v1318, 1.442695
  %v1320 = vpow.pop %v1319
  %v1321 = vadd.f32 %v1320, 1.0
  %v1322 = vrcp.pop %v1321
  %v1323 = vmul.f32 1.0, %v1322
  %v1324 = vadd.f32 %v1323, %v1323
  %v1325 = vsub.f32 %v1324, 1.0
  %v1326 = vsel %vm396, %v1325, %v1323
  %v1327 = vmul.f32 %v1326, %v1057
  %1329 = vrot.lane.b32.xlu0 %v1326, 64
  %v1330 = vpop.permute.xlu0 %1329
  %v1332 = vmul.f32 %v1326, %v1330
  %1334 = vrot.lane.b32.xlu0 %v1332, 32
  %v1335 = vpop.permute.xlu0 %1334
  %v1337 = vadd.f32 %v1327, %v1335
  %v1338 = vtanh.pop %v1337
  %1340 = vrot.lane.b32.xlu0 %v1338, 64
  %v1341 = vpop.permute.xlu0 %1340
  %v1343 = vmul.f32 %v1326, %v1341
  %1345 = vrot.lane.b32.xlu0 %v1343, 32
  %v1346 = vpop.permute.xlu0 %1345
  %v1347 = vsel %vm397, %v1346, 0
  %1349 = vmatprep.subr.mxu0 0.0
  %1350 = vmatpush1.msra.mxu0 0.0
  %1351 = vmatprep.subr.mxu0 0.0
  %1352 = vmatpush1.msra.mxu0 0.0
  %1353 = vmatprep.subr.mxu0 0.0
  %1354 = vmatpush1.msra.mxu0 0.0
  %1355 = vmatprep.subr.mxu0 0.0
  %1356 = vmatpush1.msra.mxu0 0.0
  %1357 = vmatprep.subr.mxu0 0.0
  %1358 = vmatpush1.msra.mxu0 0.0
  %1359 = vmatprep.subr.mxu0 0.0
  %1360 = vmatpush1.msra.mxu0 0.0
  %1361 = vmatprep.subr.mxu0 0.0
  %1362 = vmatpush1.msra.mxu0 0.0
  %1363 = vmatprep.subr.mxu0 0.0
  %1364 = vmatpush1.msra.mxu0 0.0
  %1365 = vmatprep.subr.mxu0 0.0
  %1366 = vmatpush1.msra.mxu0 0.0
  %1367 = vmatprep.subr.mxu0 0.0
  %1368 = vmatpush1.msra.mxu0 0.0
  %1369 = vmatprep.subr.mxu0 0.0
  %1370 = vmatpush1.msra.mxu0 0.0
  %1371 = vmatprep.subr.mxu0 0.0
  %1372 = vmatpush1.msra.mxu0 0.0
  %1373 = vmatprep.subr.mxu0 0.0
  %1374 = vmatpush1.msra.mxu0 %v388
  %1375 = vmatprep.subr.mxu0 0.0
  %1376 = vmatpush1.msra.mxu0 %v387
  %1377 = vmatprep.subr.mxu0 0.0
  %1378 = vmatpush1.msra.mxu0 %v386
  %1379 = vmatprep.subr.mxu0 0.0
  %1380 = vmatpush1.msra.mxu0 %v385
  %1381 = vmatprep.subr.mxu0 0.0
  %1382 = vmatpush2.msra.mxu0 0.0
  %1383 = vmatprep.subr.mxu0 0.0
  %1384 = vmatpush2.msra.mxu0 0.0
  %1385 = vmatprep.subr.mxu0 0.0
  %1386 = vmatpush2.msra.mxu0 0.0
  %1387 = vmatprep.subr.mxu0 0.0
  %1388 = vmatpush2.msra.mxu0 0.0
  %1389 = vmatprep.subr.mxu0 0.0
  %1390 = vmatpush2.msra.mxu0 0.0
  %1391 = vmatprep.subr.mxu0 0.0
  %1392 = vmatpush2.msra.mxu0 0.0
  %1393 = vmatprep.subr.mxu0 0.0
  %1394 = vmatpush2.msra.mxu0 0.0
  %1395 = vmatprep.subr.mxu0 0.0
  %1396 = vmatpush2.msra.mxu0 0.0
  %1397 = vmatprep.subr.mxu0 0.0
  %1398 = vmatpush2.msra.mxu0 0.0
  %1399 = vmatprep.subr.mxu0 0.0
  %1400 = vmatpush2.msra.mxu0 0.0
  %1401 = vmatprep.subr.mxu0 0.0
  %1402 = vmatpush2.msra.mxu0 0.0
  %1403 = vmatprep.subr.mxu0 0.0
  %1404 = vmatpush2.msra.mxu0 0.0
  %1405 = vmatprep.subr.mxu0 0.0
  %1406 = vmatpush2.msra.mxu0 0.0
  %1407 = vmatprep.subr.mxu0 0.0
  %1408 = vmatpush2.msra.mxu0 0.0
  %1409 = vmatprep.subr.mxu0 0.0
  %1410 = vmatpush2.msra.mxu0 0.0
  %1411 = vmatprep.subr.mxu0 0.0
  %1412 = vmatpush2.msra.mxu0 0.0
  %1413 = vmatprep.mubr.f32.mxu0 0.0
  %1414 = vmatmul.mubr.f32.gmra.mxu0 %v1347
  %v1415 = vpop.f32.mrf.mxu0
  %v1416 = vadd.f32 0.0, %v1415
  %v1417 = vpop.f32.mrf.mxu0
  %1418 = vdwg.mxu0
  %v1419 = vsel %vm397, %v1242, 0
  %1421 = vmatprep.subr.mxu0 0.0
  %1422 = vmatpush1.msra.mxu0 0.0
  %1423 = vmatprep.subr.mxu0 0.0
  %1424 = vmatpush1.msra.mxu0 0.0
  %1425 = vmatprep.subr.mxu0 0.0
  %1426 = vmatpush1.msra.mxu0 0.0
  %1427 = vmatprep.subr.mxu0 0.0
  %1428 = vmatpush1.msra.mxu0 0.0
  %1429 = vmatprep.subr.mxu0 0.0
  %1430 = vmatpush1.msra.mxu0 0.0
  %1431 = vmatprep.subr.mxu0 0.0
  %1432 = vmatpush1.msra.mxu0 0.0
  %1433 = vmatprep.subr.mxu0 0.0
  %1434 = vmatpush1.msra.mxu0 0.0
  %1435 = vmatprep.subr.mxu0 0.0
  %1436 = vmatpush1.msra.mxu0 0.0
  %1437 = vmatprep.subr.mxu0 0.0
  %1438 = vmatpush1.msra.mxu0 0.0
  %1439 = vmatprep.subr.mxu0 0.0
  %1440 = vmatpush1.msra.mxu0 0.0
  %1441 = vmatprep.subr.mxu0 0.0
  %1442 = vmatpush1.msra.mxu0 0.0
  %1443 = vmatprep.subr.mxu0 0.0
  %1444 = vmatpush1.msra.mxu0 0.0
  %1445 = vmatprep.subr.mxu0 0.0
  %1446 = vmatpush1.msra.mxu0 %v392
  %1447 = vmatprep.subr.mxu0 0.0
  %1448 = vmatpush1.msra.mxu0 %v391
  %1449 = vmatprep.subr.mxu0 0.0
  %1450 = vmatpush1.msra.mxu0 %v390
  %1451 = vmatprep.subr.mxu0 0.0
  %1452 = vmatpush1.msra.mxu0 %v389
  %1453 = vmatprep.subr.mxu0 0.0
  %1454 = vmatpush2.msra.mxu0 0.0
  %1455 = vmatprep.subr.mxu0 0.0
  %1456 = vmatpush2.msra.mxu0 0.0
  %1457 = vmatprep.subr.mxu0 0.0
  %1458 = vmatpush2.msra.mxu0 0.0
  %1459 = vmatprep.subr.mxu0 0.0
  %1460 = vmatpush2.msra.mxu0 0.0
  %1461 = vmatprep.subr.mxu0 0.0
  %1462 = vmatpush2.msra.mxu0 0.0
  %1463 = vmatprep.subr.mxu0 0.0
  %1464 = vmatpush2.msra.mxu0 0.0
  %1465 = vmatprep.subr.mxu0 0.0
  %1466 = vmatpush2.msra.mxu0 0.0
  %1467 = vmatprep.subr.mxu0 0.0
  %1468 = vmatpush2.msra.mxu0 0.0
  %1469 = vmatprep.subr.mxu0 0.0
  %1470 = vmatpush2.msra.mxu0 0.0
  %1471 = vmatprep.subr.mxu0 0.0
  %1472 = vmatpush2.msra.mxu0 0.0
  %1473 = vmatprep.subr.mxu0 0.0
  %1474 = vmatpush2.msra.mxu0 0.0
  %1475 = vmatprep.subr.mxu0 0.0
  %1476 = vmatpush2.msra.mxu0 0.0
  %1477 = vmatprep.subr.mxu0 0.0
  %1478 = vmatpush2.msra.mxu0 0.0
  %1479 = vmatprep.subr.mxu0 0.0
  %1480 = vmatpush2.msra.mxu0 0.0
  %1481 = vmatprep.subr.mxu0 0.0
  %1482 = vmatpush2.msra.mxu0 0.0
  %1483 = vmatprep.subr.mxu0 0.0
  %1484 = vmatpush2.msra.mxu0 0.0
  %1485 = vmatprep.mubr.f32.mxu0 0.0
  %1486 = vmatmul.mubr.f32.gmra.mxu0 %v1419
  %v1487 = vpop.f32.mrf.mxu0
  %v1488 = vadd.f32 %v1416, %v1487
  %v1489 = vpop.f32.mrf.mxu0
  %1490 = vdwg.mxu0
  %v1491 = vadd.f32 %v1488, %v649
  %v1492 = vadd.f32 %v1491, %v1491
  %v1493 = vsel %vm396, %v1492, %v1491
  %v1494 = vxor.u32 %v1493, 2147483648
  %v1495 = vmul.f32 %v1494, 1.442695
  %v1496 = vpow.pop %v1495
  %v1497 = vadd.f32 %v1496, 1.0
  %v1498 = vrcp.pop %v1497
  %v1499 = vmul.f32 1.0, %v1498
  %v1500 = vadd.f32 %v1499, %v1499
  %v1501 = vsub.f32 %v1500, 1.0
  %v1502 = vsel %vm396, %v1501, %v1499
  %v1503 = vmul.f32 %v1502, %v1233
  %1505 = vrot.lane.b32.xlu0 %v1502, 64
  %v1506 = vpop.permute.xlu0 %1505
  %v1508 = vmul.f32 %v1502, %v1506
  %1510 = vrot.lane.b32.xlu0 %v1508, 32
  %v1511 = vpop.permute.xlu0 %1510
  %v1513 = vadd.f32 %v1503, %v1511
  %v1514 = vtanh.pop %v1513
  %1516 = vrot.lane.b32.xlu0 %v1514, 64
  %v1517 = vpop.permute.xlu0 %1516
  %v1519 = vmul.f32 %v1502, %v1517
  %1521 = vrot.lane.b32.xlu0 %v1519, 32
  %v1522 = vpop.permute.xlu0 %1521
  %1524 = vst.msk [vmem:[#allocation2 + $0x18] sm:$0xff] %vm397, %v1522
  %1525 = vmatprep.subr.mxu0 0.0
  %1526 = vmatpush1.msra.mxu0 0.0
  %1527 = vmatprep.subr.mxu0 0.0
  %1528 = vmatpush1.msra.mxu0 0.0
  %1529 = vmatprep.subr.mxu0 0.0
  %1530 = vmatpush1.msra.mxu0 0.0
  %1531 = vmatprep.subr.mxu0 0.0
  %1532 = vmatpush1.msra.mxu0 0.0
  %1533 = vmatprep.subr.mxu0 0.0
  %1534 = vmatpush1.msra.mxu0 0.0
  %1535 = vmatprep.subr.mxu0 0.0
  %1536 = vmatpush1.msra.mxu0 0.0
  %1537 = vmatprep.subr.mxu0 0.0
  %1538 = vmatpush1.msra.mxu0 0.0
  %1539 = vmatprep.subr.mxu0 0.0
  %1540 = vmatpush1.msra.mxu0 0.0
  %1541 = vmatprep.subr.mxu0 0.0
  %1542 = vmatpush1.msra.mxu0 0.0
  %1543 = vmatprep.subr.mxu0 0.0
  %1544 = vmatpush1.msra.mxu0 0.0
  %1545 = vmatprep.subr.mxu0 0.0
  %1546 = vmatpush1.msra.mxu0 0.0
  %1547 = vmatprep.subr.mxu0 0.0
  %1548 = vmatpush1.msra.mxu0 0.0
  %1549 = vmatprep.subr.mxu0 0.0
  %1550 = vmatpush1.msra.mxu0 %v384
  %1551 = vmatprep.subr.mxu0 0.0
  %1552 = vmatpush1.msra.mxu0 %v383
  %1553 = vmatprep.subr.mxu0 0.0
  %1554 = vmatpush1.msra.mxu0 %v382
  %1555 = vmatprep.subr.mxu0 0.0
  %1556 = vmatpush1.msra.mxu0 %v381
  %1557 = vmatprep.subr.mxu0 0.0
  %1558 = vmatpush2.msra.mxu0 0.0
  %1559 = vmatprep.subr.mxu0 0.0
  %1560 = vmatpush2.msra.mxu0 0.0
  %1561 = vmatprep.subr.mxu0 0.0
  %1562 = vmatpush2.msra.mxu0 0.0
  %1563 = vmatprep.subr.mxu0 0.0
  %1564 = vmatpush2.msra.mxu0 0.0
  %1565 = vmatprep.subr.mxu0 0.0
  %1566 = vmatpush2.msra.mxu0 0.0
  %1567 = vmatprep.subr.mxu0 0.0
  %1568 = vmatpush2.msra.mxu0 0.0
  %1569 = vmatprep.subr.mxu0 0.0
  %1570 = vmatpush2.msra.mxu0 0.0
  %1571 = vmatprep.subr.mxu0 0.0
  %1572 = vmatpush2.msra.mxu0 0.0
  %1573 = vmatprep.subr.mxu0 0.0
  %1574 = vmatpush2.msra.mxu0 0.0
  %1575 = vmatprep.subr.mxu0 0.0
  %1576 = vmatpush2.msra.mxu0 0.0
  %1577 = vmatprep.subr.mxu0 0.0
  %1578 = vmatpush2.msra.mxu0 0.0
  %1579 = vmatprep.subr.mxu0 0.0
  %1580 = vmatpush2.msra.mxu0 0.0
  %1581 = vmatprep.subr.mxu0 0.0
  %1582 = vmatpush2.msra.mxu0 0.0
  %1583 = vmatprep.subr.mxu0 0.0
  %1584 = vmatpush2.msra.mxu0 0.0
  %1585 = vmatprep.subr.mxu0 0.0
  %1586 = vmatpush2.msra.mxu0 0.0
  %1587 = vmatprep.subr.mxu0 0.0
  %1588 = vmatpush2.msra.mxu0 0.0
  %1589 = vmatprep.mubr.f32.mxu0 0.0
  %1590 = vmatmul.mubr.f32.gmra.mxu0 %v1347
  %v1591 = vpop.f32.mrf.mxu0
  %v1592 = vadd.f32 0.0, %v1591
  %v1593 = vpop.f32.mrf.mxu0
  %1594 = vdwg.mxu0
  %v1595 = vadd.f32 %v363, %v1592
  %v1596 = vadd.f32 %v1595, %v1595
  %v1597 = vsel %vm396, %v1596, %v1595
  %v1598 = vxor.u32 %v1597, 2147483648
  %v1599 = vmul.f32 %v1598, 1.442695
  %v1600 = vpow.pop %v1599
  %v1601 = vadd.f32 %v1600, 1.0
  %v1602 = vrcp.pop %v1601
  %v1603 = vmul.f32 1.0, %v1602
  %v1604 = vadd.f32 %v1603, %v1603
  %v1605 = vsub.f32 %v1604, 1.0
  %v1606 = vsel %vm396, %v1605, %v1603
  %v1607 = vmul.f32 %v1606, %v1337
  %1609 = vrot.lane.b32.xlu0 %v1606, 64
  %v1610 = vpop.permute.xlu0 %1609
  %v1612 = vmul.f32 %v1606, %v1610
  %1614 = vrot.lane.b32.xlu0 %v1612, 32
  %v1615 = vpop.permute.xlu0 %1614
  %v1617 = vadd.f32 %v1607, %v1615
  %v1618 = vtanh.pop %v1617
  %1620 = vrot.lane.b32.xlu0 %v1618, 64
  %v1621 = vpop.permute.xlu0 %1620
  %v1623 = vmul.f32 %v1606, %v1621
  %1625 = vrot.lane.b32.xlu0 %v1623, 32
  %v1626 = vpop.permute.xlu0 %1625
  %v1627 = vsel %vm397, %v1626, 0
  %1629 = vmatprep.subr.mxu0 0.0
  %1630 = vmatpush1.msra.mxu0 0.0
  %1631 = vmatprep.subr.mxu0 0.0
  %1632 = vmatpush1.msra.mxu0 0.0
  %1633 = vmatprep.subr.mxu0 0.0
  %1634 = vmatpush1.msra.mxu0 0.0
  %1635 = vmatprep.subr.mxu0 0.0
  %1636 = vmatpush1.msra.mxu0 0.0
  %1637 = vmatprep.subr.mxu0 0.0
  %1638 = vmatpush1.msra.mxu0 0.0
  %1639 = vmatprep.subr.mxu0 0.0
  %1640 = vmatpush1.msra.mxu0 0.0
  %1641 = vmatprep.subr.mxu0 0.0
  %1642 = vmatpush1.msra.mxu0 0.0
  %1643 = vmatprep.subr.mxu0 0.0
  %1644 = vmatpush1.msra.mxu0 0.0
  %1645 = vmatprep.subr.mxu0 0.0
  %1646 = vmatpush1.msra.mxu0 0.0
  %1647 = vmatprep.subr.mxu0 0.0
  %1648 = vmatpush1.msra.mxu0 0.0
  %1649 = vmatprep.subr.mxu0 0.0
  %1650 = vmatpush1.msra.mxu0 0.0
  %1651 = vmatprep.subr.mxu0 0.0
  %1652 = vmatpush1.msra.mxu0 0.0
  %1653 = vmatprep.subr.mxu0 0.0
  %1654 = vmatpush1.msra.mxu0 %v388
  %1655 = vmatprep.subr.mxu0 0.0
  %1656 = vmatpush1.msra.mxu0 %v387
  %1657 = vmatprep.subr.mxu0 0.0
  %1658 = vmatpush1.msra.mxu0 %v386
  %1659 = vmatprep.subr.mxu0 0.0
  %1660 = vmatpush1.msra.mxu0 %v385
  %1661 = vmatprep.subr.mxu0 0.0
  %1662 = vmatpush2.msra.mxu0 0.0
  %1663 = vmatprep.subr.mxu0 0.0
  %1664 = vmatpush2.msra.mxu0 0.0
  %1665 = vmatprep.subr.mxu0 0.0
  %1666 = vmatpush2.msra.mxu0 0.0
  %1667 = vmatprep.subr.mxu0 0.0
  %1668 = vmatpush2.msra.mxu0 0.0
  %1669 = vmatprep.subr.mxu0 0.0
  %1670 = vmatpush2.msra.mxu0 0.0
  %1671 = vmatprep.subr.mxu0 0.0
  %1672 = vmatpush2.msra.mxu0 0.0
  %1673 = vmatprep.subr.mxu0 0.0
  %1674 = vmatpush2.msra.mxu0 0.0
  %1675 = vmatprep.subr.mxu0 0.0
  %1676 = vmatpush2.msra.mxu0 0.0
  %1677 = vmatprep.subr.mxu0 0.0
  %1678 = vmatpush2.msra.mxu0 0.0
  %1679 = vmatprep.subr.mxu0 0.0
  %1680 = vmatpush2.msra.mxu0 0.0
  %1681 = vmatprep.subr.mxu0 0.0
  %1682 = vmatpush2.msra.mxu0 0.0
  %1683 = vmatprep.subr.mxu0 0.0
  %1684 = vmatpush2.msra.mxu0 0.0
  %1685 = vmatprep.subr.mxu0 0.0
  %1686 = vmatpush2.msra.mxu0 0.0
  %1687 = vmatprep.subr.mxu0 0.0
  %1688 = vmatpush2.msra.mxu0 0.0
  %1689 = vmatprep.subr.mxu0 0.0
  %1690 = vmatpush2.msra.mxu0 0.0
  %1691 = vmatprep.subr.mxu0 0.0
  %1692 = vmatpush2.msra.mxu0 0.0
  %1693 = vmatprep.mubr.f32.mxu0 0.0
  %1694 = vmatmul.mubr.f32.gmra.mxu0 %v1627
  %v1695 = vpop.f32.mrf.mxu0
  %v1696 = vadd.f32 0.0, %v1695
  %v1697 = vpop.f32.mrf.mxu0
  %1698 = vdwg.mxu0
  %v1699 = vsel %vm397, %v1522, 0
  %1701 = vmatprep.subr.mxu0 0.0
  %1702 = vmatpush1.msra.mxu0 0.0
  %1703 = vmatprep.subr.mxu0 0.0
  %1704 = vmatpush1.msra.mxu0 0.0
  %1705 = vmatprep.subr.mxu0 0.0
  %1706 = vmatpush1.msra.mxu0 0.0
  %1707 = vmatprep.subr.mxu0 0.0
  %1708 = vmatpush1.msra.mxu0 0.0
  %1709 = vmatprep.subr.mxu0 0.0
  %1710 = vmatpush1.msra.mxu0 0.0
  %1711 = vmatprep.subr.mxu0 0.0
  %1712 = vmatpush1.msra.mxu0 0.0
  %1713 = vmatprep.subr.mxu0 0.0
  %1714 = vmatpush1.msra.mxu0 0.0
  %1715 = vmatprep.subr.mxu0 0.0
  %1716 = vmatpush1.msra.mxu0 0.0
  %1717 = vmatprep.subr.mxu0 0.0
  %1718 = vmatpush1.msra.mxu0 0.0
  %1719 = vmatprep.subr.mxu0 0.0
  %1720 = vmatpush1.msra.mxu0 0.0
  %1721 = vmatprep.subr.mxu0 0.0
  %1722 = vmatpush1.msra.mxu0 0.0
  %1723 = vmatprep.subr.mxu0 0.0
  %1724 = vmatpush1.msra.mxu0 0.0
  %1725 = vmatprep.subr.mxu0 0.0
  %1726 = vmatpush1.msra.mxu0 %v392
  %1727 = vmatprep.subr.mxu0 0.0
  %1728 = vmatpush1.msra.mxu0 %v391
  %1729 = vmatprep.subr.mxu0 0.0
  %1730 = vmatpush1.msra.mxu0 %v390
  %1731 = vmatprep.subr.mxu0 0.0
  %1732 = vmatpush1.msra.mxu0 %v389
  %1733 = vmatprep.subr.mxu0 0.0
  %1734 = vmatpush2.msra.mxu0 0.0
  %1735 = vmatprep.subr.mxu0 0.0
  %1736 = vmatpush2.msra.mxu0 0.0
  %1737 = vmatprep.subr.mxu0 0.0
  %1738 = vmatpush2.msra.mxu0 0.0
  %1739 = vmatprep.subr.mxu0 0.0
  %1740 = vmatpush2.msra.mxu0 0.0
  %1741 = vmatprep.subr.mxu0 0.0
  %1742 = vmatpush2.msra.mxu0 0.0
  %1743 = vmatprep.subr.mxu0 0.0
  %1744 = vmatpush2.msra.mxu0 0.0
  %1745 = vmatprep.subr.mxu0 0.0
  %1746 = vmatpush2.msra.mxu0 0.0
  %1747 = vmatprep.subr.mxu0 0.0
  %1748 = vmatpush2.msra.mxu0 0.0
  %1749 = vmatprep.subr.mxu0 0.0
  %1750 = vmatpush2.msra.mxu0 0.0
  %1751 = vmatprep.subr.mxu0 0.0
  %1752 = vmatpush2.msra.mxu0 0.0
  %1753 = vmatprep.subr.mxu0 0.0
  %1754 = vmatpush2.msra.mxu0 0.0
  %1755 = vmatprep.subr.mxu0 0.0
  %1756 = vmatpush2.msra.mxu0 0.0
  %1757 = vmatprep.subr.mxu0 0.0
  %1758 = vmatpush2.msra.mxu0 0.0
  %1759 = vmatprep.subr.mxu0 0.0
  %1760 = vmatpush2.msra.mxu0 0.0
  %1761 = vmatprep.subr.mxu0 0.0
  %1762 = vmatpush2.msra.mxu0 0.0
  %1763 = vmatprep.subr.mxu0 0.0
  %1764 = vmatpush2.msra.mxu0 0.0
  %1765 = vmatprep.mubr.f32.mxu0 0.0
  %1766 = vmatmul.mubr.f32.gmra.mxu0 %v1699
  %v1767 = vpop.f32.mrf.mxu0
  %v1768 = vadd.f32 %v1696, %v1767
  %v1769 = vpop.f32.mrf.mxu0
  %1770 = vdwg.mxu0
  %v1771 = vadd.f32 %v1768, %v649
  %v1772 = vadd.f32 %v1771, %v1771
  %v1773 = vsel %vm396, %v1772, %v1771
  %v1774 = vxor.u32 %v1773, 2147483648
  %v1775 = vmul.f32 %v1774, 1.442695
  %v1776 = vpow.pop %v1775
  %v1777 = vadd.f32 %v1776, 1.0
  %v1778 = vrcp.pop %v1777
  %v1779 = vmul.f32 1.0, %v1778
  %v1780 = vadd.f32 %v1779, %v1779
  %v1781 = vsub.f32 %v1780, 1.0
  %v1782 = vsel %vm396, %v1781, %v1779
  %v1783 = vmul.f32 %v1782, %v1513
  %1785 = vrot.lane.b32.xlu0 %v1782, 64
  %v1786 = vpop.permute.xlu0 %1785
  %v1788 = vmul.f32 %v1782, %v1786
  %1790 = vrot.lane.b32.xlu0 %v1788, 32
  %v1791 = vpop.permute.xlu0 %1790
  %v1793 = vadd.f32 %v1783, %v1791
  %v1794 = vtanh.pop %v1793
  %1796 = vrot.lane.b32.xlu0 %v1794, 64
  %v1797 = vpop.permute.xlu0 %1796
  %v1799 = vmul.f32 %v1782, %v1797
  %1801 = vrot.lane.b32.xlu0 %v1799, 32
  %v1802 = vpop.permute.xlu0 %1801
  %1804 = vst.msk [vmem:[#allocation2 + $0x20] sm:$0xff] %vm397, %v1802
  %1805 = vmatprep.subr.mxu0 0.0
  %1806 = vmatpush1.msra.mxu0 0.0
  %1807 = vmatprep.subr.mxu0 0.0
  %1808 = vmatpush1.msra.mxu0 0.0
  %1809 = vmatprep.subr.mxu0 0.0
  %1810 = vmatpush1.msra.mxu0 0.0
  %1811 = vmatprep.subr.mxu0 0.0
  %1812 = vmatpush1.msra.mxu0 0.0
  %1813 = vmatprep.subr.mxu0 0.0
  %1814 = vmatpush1.msra.mxu0 0.0
  %1815 = vmatprep.subr.mxu0 0.0
  %1816 = vmatpush1.msra.mxu0 0.0
  %1817 = vmatprep.subr.mxu0 0.0
  %1818 = vmatpush1.msra.mxu0 0.0
  %1819 = vmatprep.subr.mxu0 0.0
  %1820 = vmatpush1.msra.mxu0 0.0
  %1821 = vmatprep.subr.mxu0 0.0
  %1822 = vmatpush1.msra.mxu0 0.0
  %1823 = vmatprep.subr.mxu0 0.0
  %1824 = vmatpush1.msra.mxu0 0.0
  %1825 = vmatprep.subr.mxu0 0.0
  %1826 = vmatpush1.msra.mxu0 0.0
  %1827 = vmatprep.subr.mxu0 0.0
  %1828 = vmatpush1.msra.mxu0 0.0
  %1829 = vmatprep.subr.mxu0 0.0
  %1830 = vmatpush1.msra.mxu0 %v384
  %1831 = vmatprep.subr.mxu0 0.0
  %1832 = vmatpush1.msra.mxu0 %v383
  %1833 = vmatprep.subr.mxu0 0.0
  %1834 = vmatpush1.msra.mxu0 %v382
  %1835 = vmatprep.subr.mxu0 0.0
  %1836 = vmatpush1.msra.mxu0 %v381
  %1837 = vmatprep.subr.mxu0 0.0
  %1838 = vmatpush2.msra.mxu0 0.0
  %1839 = vmatprep.subr.mxu0 0.0
  %1840 = vmatpush2.msra.mxu0 0.0
  %1841 = vmatprep.subr.mxu0 0.0
  %1842 = vmatpush2.msra.mxu0 0.0
  %1843 = vmatprep.subr.mxu0 0.0
  %1844 = vmatpush2.msra.mxu0 0.0
  %1845 = vmatprep.subr.mxu0 0.0
  %1846 = vmatpush2.msra.mxu0 0.0
  %1847 = vmatprep.subr.mxu0 0.0
  %1848 = vmatpush2.msra.mxu0 0.0
  %1849 = vmatprep.subr.mxu0 0.0
  %1850 = vmatpush2.msra.mxu0 0.0
  %1851 = vmatprep.subr.mxu0 0.0
  %1852 = vmatpush2.msra.mxu0 0.0
  %1853 = vmatprep.subr.mxu0 0.0
  %1854 = vmatpush2.msra.mxu0 0.0
  %1855 = vmatprep.subr.mxu0 0.0
  %1856 = vmatpush2.msra.mxu0 0.0
  %1857 = vmatprep.subr.mxu0 0.0
  %1858 = vmatpush2.msra.mxu0 0.0
  %1859 = vmatprep.subr.mxu0 0.0
  %1860 = vmatpush2.msra.mxu0 0.0
  %1861 = vmatprep.subr.mxu0 0.0
  %1862 = vmatpush2.msra.mxu0 0.0
  %1863 = vmatprep.subr.mxu0 0.0
  %1864 = vmatpush2.msra.mxu0 0.0
  %1865 = vmatprep.subr.mxu0 0.0
  %1866 = vmatpush2.msra.mxu0 0.0
  %1867 = vmatprep.subr.mxu0 0.0
  %1868 = vmatpush2.msra.mxu0 0.0
  %1869 = vmatprep.mubr.f32.mxu0 0.0
  %1870 = vmatmul.mubr.f32.gmra.mxu0 %v1627
  %v1871 = vpop.f32.mrf.mxu0
  %v1872 = vadd.f32 0.0, %v1871
  %v1873 = vpop.f32.mrf.mxu0
  %1874 = vdwg.mxu0
  %v1875 = vadd.f32 %v368, %v1872
  %v1876 = vadd.f32 %v1875, %v1875
  %v1877 = vsel %vm396, %v1876, %v1875
  %v1878 = vxor.u32 %v1877, 2147483648
  %v1879 = vmul.f32 %v1878, 1.442695
  %v1880 = vpow.pop %v1879
  %v1881 = vadd.f32 %v1880, 1.0
  %v1882 = vrcp.pop %v1881
  %v1883 = vmul.f32 1.0, %v1882
  %v1884 = vadd.f32 %v1883, %v1883
  %v1885 = vsub.f32 %v1884, 1.0
  %v1886 = vsel %vm396, %v1885, %v1883
  %v1887 = vmul.f32 %v1886, %v1617
  %1889 = vrot.lane.b32.xlu0 %v1886, 64
  %v1890 = vpop.permute.xlu0 %1889
  %v1892 = vmul.f32 %v1886, %v1890
  %1894 = vrot.lane.b32.xlu0 %v1892, 32
  %v1895 = vpop.permute.xlu0 %1894
  %v1897 = vadd.f32 %v1887, %v1895
  %v1898 = vtanh.pop %v1897
  %1900 = vrot.lane.b32.xlu0 %v1898, 64
  %v1901 = vpop.permute.xlu0 %1900
  %v1903 = vmul.f32 %v1886, %v1901
  %1905 = vrot.lane.b32.xlu0 %v1903, 32
  %v1906 = vpop.permute.xlu0 %1905
  %v1907 = vsel %vm397, %v1906, 0
  %1909 = vmatprep.subr.mxu0 0.0
  %1910 = vmatpush1.msra.mxu0 0.0
  %1911 = vmatprep.subr.mxu0 0.0
  %1912 = vmatpush1.msra.mxu0 0.0
  %1913 = vmatprep.subr.mxu0 0.0
  %1914 = vmatpush1.msra.mxu0 0.0
  %1915 = vmatprep.subr.mxu0 0.0
  %1916 = vmatpush1.msra.mxu0 0.0
  %1917 = vmatprep.subr.mxu0 0.0
  %1918 = vmatpush1.msra.mxu0 0.0
  %1919 = vmatprep.subr.mxu0 0.0
  %1920 = vmatpush1.msra.mxu0 0.0
  %1921 = vmatprep.subr.mxu0 0.0
  %1922 = vmatpush1.msra.mxu0 0.0
  %1923 = vmatprep.subr.mxu0 0.0
  %1924 = vmatpush1.msra.mxu0 0.0
  %1925 = vmatprep.subr.mxu0 0.0
  %1926 = vmatpush1.msra.mxu0 0.0
  %1927 = vmatprep.subr.mxu0 0.0
  %1928 = vmatpush1.msra.mxu0 0.0
  %1929 = vmatprep.subr.mxu0 0.0
  %1930 = vmatpush1.msra.mxu0 0.0
  %1931 = vmatprep.subr.mxu0 0.0
  %1932 = vmatpush1.msra.mxu0 0.0
  %1933 = vmatprep.subr.mxu0 0.0
  %1934 = vmatpush1.msra.mxu0 %v388
  %1935 = vmatprep.subr.mxu0 0.0
  %1936 = vmatpush1.msra.mxu0 %v387
  %1937 = vmatprep.subr.mxu0 0.0
  %1938 = vmatpush1.msra.mxu0 %v386
  %1939 = vmatprep.subr.mxu0 0.0
  %1940 = vmatpush1.msra.mxu0 %v385
  %1941 = vmatprep.subr.mxu0 0.0
  %1942 = vmatpush2.msra.mxu0 0.0
  %1943 = vmatprep.subr.mxu0 0.0
  %1944 = vmatpush2.msra.mxu0 0.0
  %1945 = vmatprep.subr.mxu0 0.0
  %1946 = vmatpush2.msra.mxu0 0.0
  %1947 = vmatprep.subr.mxu0 0.0
  %1948 = vmatpush2.msra.mxu0 0.0
  %1949 = vmatprep.subr.mxu0 0.0
  %1950 = vmatpush2.msra.mxu0 0.0
  %1951 = vmatprep.subr.mxu0 0.0
  %1952 = vmatpush2.msra.mxu0 0.0
  %1953 = vmatprep.subr.mxu0 0.0
  %1954 = vmatpush2.msra.mxu0 0.0
  %1955 = vmatprep.subr.mxu0 0.0
  %1956 = vmatpush2.msra.mxu0 0.0
  %1957 = vmatprep.subr.mxu0 0.0
  %1958 = vmatpush2.msra.mxu0 0.0
  %1959 = vmatprep.subr.mxu0 0.0
  %1960 = vmatpush2.msra.mxu0 0.0
  %1961 = vmatprep.subr.mxu0 0.0
  %1962 = vmatpush2.msra.mxu0 0.0
  %1963 = vmatprep.subr.mxu0 0.0
  %1964 = vmatpush2.msra.mxu0 0.0
  %1965 = vmatprep.subr.mxu0 0.0
  %1966 = vmatpush2.msra.mxu0 0.0
  %1967 = vmatprep.subr.mxu0 0.0
  %1968 = vmatpush2.msra.mxu0 0.0
  %1969 = vmatprep.subr.mxu0 0.0
  %1970 = vmatpush2.msra.mxu0 0.0
  %1971 = vmatprep.subr.mxu0 0.0
  %1972 = vmatpush2.msra.mxu0 0.0
  %1973 = vmatprep.mubr.f32.mxu0 0.0
  %1974 = vmatmul.mubr.f32.gmra.mxu0 %v1907
  %v1975 = vpop.f32.mrf.mxu0
  %v1976 = vadd.f32 0.0, %v1975
  %v1977 = vpop.f32.mrf.mxu0
  %1978 = vdwg.mxu0
  %v1979 = vsel %vm397, %v1802, 0
  %1981 = vmatprep.subr.mxu0 0.0
  %1982 = vmatpush1.msra.mxu0 0.0
  %1983 = vmatprep.subr.mxu0 0.0
  %1984 = vmatpush1.msra.mxu0 0.0
  %1985 = vmatprep.subr.mxu0 0.0
  %1986 = vmatpush1.msra.mxu0 0.0
  %1987 = vmatprep.subr.mxu0 0.0
  %1988 = vmatpush1.msra.mxu0 0.0
  %1989 = vmatprep.subr.mxu0 0.0
  %1990 = vmatpush1.msra.mxu0 0.0
  %1991 = vmatprep.subr.mxu0 0.0
  %1992 = vmatpush1.msra.mxu0 0.0
  %1993 = vmatprep.subr.mxu0 0.0
  %1994 = vmatpush1.msra.mxu0 0.0
  %1995 = vmatprep.subr.mxu0 0.0
  %1996 = vmatpush1.msra.mxu0 0.0
  %1997 = vmatprep.subr.mxu0 0.0
  %1998 = vmatpush1.msra.mxu0 0.0
  %1999 = vmatprep.subr.mxu0 0.0
  %2000 = vmatpush1.msra.mxu0 0.0
  %2001 = vmatprep.subr.mxu0 0.0
  %2002 = vmatpush1.msra.mxu0 0.0
  %2003 = vmatprep.subr.mxu0 0.0
  %2004 = vmatpush1.msra.mxu0 0.0
  %2005 = vmatprep.subr.mxu0 0.0
  %2006 = vmatpush1.msra.mxu0 %v392
  %2007 = vmatprep.subr.mxu0 0.0
  %2008 = vmatpush1.msra.mxu0 %v391
  %2009 = vmatprep.subr.mxu0 0.0
  %2010 = vmatpush1.msra.mxu0 %v390
  %2011 = vmatprep.subr.mxu0 0.0
  %2012 = vmatpush1.msra.mxu0 %v389
  %2013 = vmatprep.subr.mxu0 0.0
  %2014 = vmatpush2.msra.mxu0 0.0
  %2015 = vmatprep.subr.mxu0 0.0
  %2016 = vmatpush2.msra.mxu0 0.0
  %2017 = vmatprep.subr.mxu0 0.0
  %2018 = vmatpush2.msra.mxu0 0.0
  %2019 = vmatprep.subr.mxu0 0.0
  %2020 = vmatpush2.msra.mxu0 0.0
  %2021 = vmatprep.subr.mxu0 0.0
  %2022 = vmatpush2.msra.mxu0 0.0
  %2023 = vmatprep.subr.mxu0 0.0
  %2024 = vmatpush2.msra.mxu0 0.0
  %2025 = vmatprep.subr.mxu0 0.0
  %2026 = vmatpush2.msra.mxu0 0.0
  %2027 = vmatprep.subr.mxu0 0.0
  %2028 = vmatpush2.msra.mxu0 0.0
  %2029 = vmatprep.subr.mxu0 0.0
  %2030 = vmatpush2.msra.mxu0 0.0
  %2031 = vmatprep.subr.mxu0 0.0
  %2032 = vmatpush2.msra.mxu0 0.0
  %2033 = vmatprep.subr.mxu0 0.0
  %2034 = vmatpush2.msra.mxu0 0.0
  %2035 = vmatprep.subr.mxu0 0.0
  %2036 = vmatpush2.msra.mxu0 0.0
  %2037 = vmatprep.subr.mxu0 0.0
  %2038 = vmatpush2.msra.mxu0 0.0
  %2039 = vmatprep.subr.mxu0 0.0
  %2040 = vmatpush2.msra.mxu0 0.0
  %2041 = vmatprep.subr.mxu0 0.0
  %2042 = vmatpush2.msra.mxu0 0.0
  %2043 = vmatprep.subr.mxu0 0.0
  %2044 = vmatpush2.msra.mxu0 0.0
  %2045 = vmatprep.mubr.f32.mxu0 0.0
  %2046 = vmatmul.mubr.f32.gmra.mxu0 %v1979
  %v2047 = vpop.f32.mrf.mxu0
  %v2048 = vadd.f32 %v1976, %v2047
  %v2049 = vpop.f32.mrf.mxu0
  %2050 = vdwg.mxu0
  %v2051 = vadd.f32 %v2048, %v649
  %v2052 = vadd.f32 %v2051, %v2051
  %v2053 = vsel %vm396, %v2052, %v2051
  %v2054 = vxor.u32 %v2053, 2147483648
  %v2055 = vmul.f32 %v2054, 1.442695
  %v2056 = vpow.pop %v2055
  %v2057 = vadd.f32 %v2056, 1.0
  %v2058 = vrcp.pop %v2057
  %v2059 = vmul.f32 1.0, %v2058
  %v2060 = vadd.f32 %v2059, %v2059
  %v2061 = vsub.f32 %v2060, 1.0
  %v2062 = vsel %vm396, %v2061, %v2059
  %v2063 = vmul.f32 %v2062, %v1793
  %2065 = vrot.lane.b32.xlu0 %v2062, 64
  %v2066 = vpop.permute.xlu0 %2065
  %v2068 = vmul.f32 %v2062, %v2066
  %2070 = vrot.lane.b32.xlu0 %v2068, 32
  %v2071 = vpop.permute.xlu0 %2070
  %v2073 = vadd.f32 %v2063, %v2071
  %v2074 = vtanh.pop %v2073
  %2076 = vrot.lane.b32.xlu0 %v2074, 64
  %v2077 = vpop.permute.xlu0 %2076
  %v2079 = vmul.f32 %v2062, %v2077
  %2081 = vrot.lane.b32.xlu0 %v2079, 32
  %v2082 = vpop.permute.xlu0 %2081
  %2084 = vst.msk [vmem:[#allocation2 + $0x28] sm:$0xff] %vm397, %v2082
  %2085 = vmatprep.subr.mxu0 0.0
  %2086 = vmatpush1.msra.mxu0 0.0
  %2087 = vmatprep.subr.mxu0 0.0
  %2088 = vmatpush1.msra.mxu0 0.0
  %2089 = vmatprep.subr.mxu0 0.0
  %2090 = vmatpush1.msra.mxu0 0.0
  %2091 = vmatprep.subr.mxu0 0.0
  %2092 = vmatpush1.msra.mxu0 0.0
  %2093 = vmatprep.subr.mxu0 0.0
  %2094 = vmatpush1.msra.mxu0 0.0
  %2095 = vmatprep.subr.mxu0 0.0
  %2096 = vmatpush1.msra.mxu0 0.0
  %2097 = vmatprep.subr.mxu0 0.0
  %2098 = vmatpush1.msra.mxu0 0.0
  %2099 = vmatprep.subr.mxu0 0.0
  %2100 = vmatpush1.msra.mxu0 0.0
  %2101 = vmatprep.subr.mxu0 0.0
  %2102 = vmatpush1.msra.mxu0 0.0
  %2103 = vmatprep.subr.mxu0 0.0
  %2104 = vmatpush1.msra.mxu0 0.0
  %2105 = vmatprep.subr.mxu0 0.0
  %2106 = vmatpush1.msra.mxu0 0.0
  %2107 = vmatprep.subr.mxu0 0.0
  %2108 = vmatpush1.msra.mxu0 0.0
  %2109 = vmatprep.subr.mxu0 0.0
  %2110 = vmatpush1.msra.mxu0 %v384
  %2111 = vmatprep.subr.mxu0 0.0
  %2112 = vmatpush1.msra.mxu0 %v383
  %2113 = vmatprep.subr.mxu0 0.0
  %2114 = vmatpush1.msra.mxu0 %v382
  %2115 = vmatprep.subr.mxu0 0.0
  %2116 = vmatpush1.msra.mxu0 %v381
  %2117 = vmatprep.subr.mxu0 0.0
  %2118 = vmatpush2.msra.mxu0 0.0
  %2119 = vmatprep.subr.mxu0 0.0
  %2120 = vmatpush2.msra.mxu0 0.0
  %2121 = vmatprep.subr.mxu0 0.0
  %2122 = vmatpush2.msra.mxu0 0.0
  %2123 = vmatprep.subr.mxu0 0.0
  %2124 = vmatpush2.msra.mxu0 0.0
  %2125 = vmatprep.subr.mxu0 0.0
  %2126 = vmatpush2.msra.mxu0 0.0
  %2127 = vmatprep.subr.mxu0 0.0
  %2128 = vmatpush2.msra.mxu0 0.0
  %2129 = vmatprep.subr.mxu0 0.0
  %2130 = vmatpush2.msra.mxu0 0.0
  %2131 = vmatprep.subr.mxu0 0.0
  %2132 = vmatpush2.msra.mxu0 0.0
  %2133 = vmatprep.subr.mxu0 0.0
  %2134 = vmatpush2.msra.mxu0 0.0
  %2135 = vmatprep.subr.mxu0 0.0
  %2136 = vmatpush2.msra.mxu0 0.0
  %2137 = vmatprep.subr.mxu0 0.0
  %2138 = vmatpush2.msra.mxu0 0.0
  %2139 = vmatprep.subr.mxu0 0.0
  %2140 = vmatpush2.msra.mxu0 0.0
  %2141 = vmatprep.subr.mxu0 0.0
  %2142 = vmatpush2.msra.mxu0 0.0
  %2143 = vmatprep.subr.mxu0 0.0
  %2144 = vmatpush2.msra.mxu0 0.0
  %2145 = vmatprep.subr.mxu0 0.0
  %2146 = vmatpush2.msra.mxu0 0.0
  %2147 = vmatprep.subr.mxu0 0.0
  %2148 = vmatpush2.msra.mxu0 0.0
  %2149 = vmatprep.mubr.f32.mxu0 0.0
  %2150 = vmatmul.mubr.f32.gmra.mxu0 %v1907
  %v2151 = vpop.f32.mrf.mxu0
  %v2152 = vadd.f32 0.0, %v2151
  %v2153 = vpop.f32.mrf.mxu0
  %2154 = vdwg.mxu0
  %v2155 = vadd.f32 %v373, %v2152
  %v2156 = vadd.f32 %v2155, %v2155
  %v2157 = vsel %vm396, %v2156, %v2155
  %v2158 = vxor.u32 %v2157, 2147483648
  %v2159 = vmul.f32 %v2158, 1.442695
  %v2160 = vpow.pop %v2159
  %v2161 = vadd.f32 %v2160, 1.0
  %v2162 = vrcp.pop %v2161
  %v2163 = vmul.f32 1.0, %v2162
  %v2164 = vadd.f32 %v2163, %v2163
  %v2165 = vsub.f32 %v2164, 1.0
  %v2166 = vsel %vm396, %v2165, %v2163
  %v2167 = vmul.f32 %v2166, %v1897
  %2169 = vrot.lane.b32.xlu0 %v2166, 64
  %v2170 = vpop.permute.xlu0 %2169
  %v2172 = vmul.f32 %v2166, %v2170
  %2174 = vrot.lane.b32.xlu0 %v2172, 32
  %v2175 = vpop.permute.xlu0 %2174
  %v2177 = vadd.f32 %v2167, %v2175
  %v2178 = vtanh.pop %v2177
  %2180 = vrot.lane.b32.xlu0 %v2178, 64
  %v2181 = vpop.permute.xlu0 %2180
  %v2183 = vmul.f32 %v2166, %v2181
  %2185 = vrot.lane.b32.xlu0 %v2183, 32
  %v2186 = vpop.permute.xlu0 %2185
  %v2187 = vsel %vm397, %v2186, 0
  %2189 = vmatprep.subr.mxu0 0.0
  %2190 = vmatpush1.msra.mxu0 0.0
  %2191 = vmatprep.subr.mxu0 0.0
  %2192 = vmatpush1.msra.mxu0 0.0
  %2193 = vmatprep.subr.mxu0 0.0
  %2194 = vmatpush1.msra.mxu0 0.0
  %2195 = vmatprep.subr.mxu0 0.0
  %2196 = vmatpush1.msra.mxu0 0.0
  %2197 = vmatprep.subr.mxu0 0.0
  %2198 = vmatpush1.msra.mxu0 0.0
  %2199 = vmatprep.subr.mxu0 0.0
  %2200 = vmatpush1.msra.mxu0 0.0
  %2201 = vmatprep.subr.mxu0 0.0
  %2202 = vmatpush1.msra.mxu0 0.0
  %2203 = vmatprep.subr.mxu0 0.0
  %2204 = vmatpush1.msra.mxu0 0.0
  %2205 = vmatprep.subr.mxu0 0.0
  %2206 = vmatpush1.msra.mxu0 0.0
  %2207 = vmatprep.subr.mxu0 0.0
  %2208 = vmatpush1.msra.mxu0 0.0
  %2209 = vmatprep.subr.mxu0 0.0
  %2210 = vmatpush1.msra.mxu0 0.0
  %2211 = vmatprep.subr.mxu0 0.0
  %2212 = vmatpush1.msra.mxu0 0.0
  %2213 = vmatprep.subr.mxu0 0.0
  %2214 = vmatpush1.msra.mxu0 %v388
  %2215 = vmatprep.subr.mxu0 0.0
  %2216 = vmatpush1.msra.mxu0 %v387
  %2217 = vmatprep.subr.mxu0 0.0
  %2218 = vmatpush1.msra.mxu0 %v386
  %2219 = vmatprep.subr.mxu0 0.0
  %2220 = vmatpush1.msra.mxu0 %v385
  %2221 = vmatprep.subr.mxu0 0.0
  %2222 = vmatpush2.msra.mxu0 0.0
  %2223 = vmatprep.subr.mxu0 0.0
  %2224 = vmatpush2.msra.mxu0 0.0
  %2225 = vmatprep.subr.mxu0 0.0
  %2226 = vmatpush2.msra.mxu0 0.0
  %2227 = vmatprep.subr.mxu0 0.0
  %2228 = vmatpush2.msra.mxu0 0.0
  %2229 = vmatprep.subr.mxu0 0.0
  %2230 = vmatpush2.msra.mxu0 0.0
  %2231 = vmatprep.subr.mxu0 0.0
  %2232 = vmatpush2.msra.mxu0 0.0
  %2233 = vmatprep.subr.mxu0 0.0
  %2234 = vmatpush2.msra.mxu0 0.0
  %2235 = vmatprep.subr.mxu0 0.0
  %2236 = vmatpush2.msra.mxu0 0.0
  %2237 = vmatprep.subr.mxu0 0.0
  %2238 = vmatpush2.msra.mxu0 0.0
  %2239 = vmatprep.subr.mxu0 0.0
  %2240 = vmatpush2.msra.mxu0 0.0
  %2241 = vmatprep.subr.mxu0 0.0
  %2242 = vmatpush2.msra.mxu0 0.0
  %2243 = vmatprep.subr.mxu0 0.0
  %2244 = vmatpush2.msra.mxu0 0.0
  %2245 = vmatprep.subr.mxu0 0.0
  %2246 = vmatpush2.msra.mxu0 0.0
  %2247 = vmatprep.subr.mxu0 0.0
  %2248 = vmatpush2.msra.mxu0 0.0
  %2249 = vmatprep.subr.mxu0 0.0
  %2250 = vmatpush2.msra.mxu0 0.0
  %2251 = vmatprep.subr.mxu0 0.0
  %2252 = vmatpush2.msra.mxu0 0.0
  %2253 = vmatprep.mubr.f32.mxu0 0.0
  %2254 = vmatmul.mubr.f32.gmra.mxu0 %v2187
  %v2255 = vpop.f32.mrf.mxu0
  %v2256 = vadd.f32 0.0, %v2255
  %v2257 = vpop.f32.mrf.mxu0
  %2258 = vdwg.mxu0
  %v2259 = vsel %vm397, %v2082, 0
  %2261 = vmatprep.subr.mxu0 0.0
  %2262 = vmatpush1.msra.mxu0 0.0
  %2263 = vmatprep.subr.mxu0 0.0
  %2264 = vmatpush1.msra.mxu0 0.0
  %2265 = vmatprep.subr.mxu0 0.0
  %2266 = vmatpush1.msra.mxu0 0.0
  %2267 = vmatprep.subr.mxu0 0.0
  %2268 = vmatpush1.msra.mxu0 0.0
  %2269 = vmatprep.subr.mxu0 0.0
  %2270 = vmatpush1.msra.mxu0 0.0
  %2271 = vmatprep.subr.mxu0 0.0
  %2272 = vmatpush1.msra.mxu0 0.0
  %2273 = vmatprep.subr.mxu0 0.0
  %2274 = vmatpush1.msra.mxu0 0.0
  %2275 = vmatprep.subr.mxu0 0.0
  %2276 = vmatpush1.msra.mxu0 0.0
  %2277 = vmatprep.subr.mxu0 0.0
  %2278 = vmatpush1.msra.mxu0 0.0
  %2279 = vmatprep.subr.mxu0 0.0
  %2280 = vmatpush1.msra.mxu0 0.0
  %2281 = vmatprep.subr.mxu0 0.0
  %2282 = vmatpush1.msra.mxu0 0.0
  %2283 = vmatprep.subr.mxu0 0.0
  %2284 = vmatpush1.msra.mxu0 0.0
  %2285 = vmatprep.subr.mxu0 0.0
  %2286 = vmatpush1.msra.mxu0 %v392
  %2287 = vmatprep.subr.mxu0 0.0
  %2288 = vmatpush1.msra.mxu0 %v391
  %2289 = vmatprep.subr.mxu0 0.0
  %2290 = vmatpush1.msra.mxu0 %v390
  %2291 = vmatprep.subr.mxu0 0.0
  %2292 = vmatpush1.msra.mxu0 %v389
  %2293 = vmatprep.subr.mxu0 0.0
  %2294 = vmatpush2.msra.mxu0 0.0
  %2295 = vmatprep.subr.mxu0 0.0
  %2296 = vmatpush2.msra.mxu0 0.0
  %2297 = vmatprep.subr.mxu0 0.0
  %2298 = vmatpush2.msra.mxu0 0.0
  %2299 = vmatprep.subr.mxu0 0.0
  %2300 = vmatpush2.msra.mxu0 0.0
  %2301 = vmatprep.subr.mxu0 0.0
  %2302 = vmatpush2.msra.mxu0 0.0
  %2303 = vmatprep.subr.mxu0 0.0
  %2304 = vmatpush2.msra.mxu0 0.0
  %2305 = vmatprep.subr.mxu0 0.0
  %2306 = vmatpush2.msra.mxu0 0.0
  %2307 = vmatprep.subr.mxu0 0.0
  %2308 = vmatpush2.msra.mxu0 0.0
  %2309 = vmatprep.subr.mxu0 0.0
  %2310 = vmatpush2.msra.mxu0 0.0
  %2311 = vmatprep.subr.mxu0 0.0
  %2312 = vmatpush2.msra.mxu0 0.0
  %2313 = vmatprep.subr.mxu0 0.0
  %2314 = vmatpush2.msra.mxu0 0.0
  %2315 = vmatprep.subr.mxu0 0.0
  %2316 = vmatpush2.msra.mxu0 0.0
  %2317 = vmatprep.subr.mxu0 0.0
  %2318 = vmatpush2.msra.mxu0 0.0
  %2319 = vmatprep.subr.mxu0 0.0
  %2320 = vmatpush2.msra.mxu0 0.0
  %2321 = vmatprep.subr.mxu0 0.0
  %2322 = vmatpush2.msra.mxu0 0.0
  %2323 = vmatprep.subr.mxu0 0.0
  %2324 = vmatpush2.msra.mxu0 0.0
  %2325 = vmatprep.mubr.f32.mxu0 0.0
  %2326 = vmatmul.mubr.f32.gmra.mxu0 %v2259
  %v2327 = vpop.f32.mrf.mxu0
  %v2328 = vadd.f32 %v2256, %v2327
  %v2329 = vpop.f32.mrf.mxu0
  %2330 = vdwg.mxu0
  %v2331 = vadd.f32 %v2328, %v649
  %v2332 = vadd.f32 %v2331, %v2331
  %v2333 = vsel %vm396, %v2332, %v2331
  %v2334 = vxor.u32 %v2333, 2147483648
  %v2335 = vmul.f32 %v2334, 1.442695
  %v2336 = vpow.pop %v2335
  %v2337 = vadd.f32 %v2336, 1.0
  %v2338 = vrcp.pop %v2337
  %v2339 = vmul.f32 1.0, %v2338
  %v2340 = vadd.f32 %v2339, %v2339
  %v2341 = vsub.f32 %v2340, 1.0
  %v2342 = vsel %vm396, %v2341, %v2339
  %v2343 = vmul.f32 %v2342, %v2073
  %2345 = vrot.lane.b32.xlu0 %v2342, 64
  %v2346 = vpop.permute.xlu0 %2345
  %v2348 = vmul.f32 %v2342, %v2346
  %2350 = vrot.lane.b32.xlu0 %v2348, 32
  %v2351 = vpop.permute.xlu0 %2350
  %v2353 = vadd.f32 %v2343, %v2351
  %v2354 = vtanh.pop %v2353
  %2356 = vrot.lane.b32.xlu0 %v2354, 64
  %v2357 = vpop.permute.xlu0 %2356
  %v2359 = vmul.f32 %v2342, %v2357
  %2361 = vrot.lane.b32.xlu0 %v2359, 32
  %v2362 = vpop.permute.xlu0 %2361
  %2364 = vst.msk [vmem:[#allocation2 + $0x30] sm:$0xff] %vm397, %v2362
  %2365 = vmatprep.subr.mxu0 0.0
  %2366 = vmatpush1.msra.mxu0 0.0
  %2367 = vmatprep.subr.mxu0 0.0
  %2368 = vmatpush1.msra.mxu0 0.0
  %2369 = vmatprep.subr.mxu0 0.0
  %2370 = vmatpush1.msra.mxu0 0.0
  %2371 = vmatprep.subr.mxu0 0.0
  %2372 = vmatpush1.msra.mxu0 0.0
  %2373 = vmatprep.subr.mxu0 0.0
  %2374 = vmatpush1.msra.mxu0 0.0
  %2375 = vmatprep.subr.mxu0 0.0
  %2376 = vmatpush1.msra.mxu0 0.0
  %2377 = vmatprep.subr.mxu0 0.0
  %2378 = vmatpush1.msra.mxu0 0.0
  %2379 = vmatprep.subr.mxu0 0.0
  %2380 = vmatpush1.msra.mxu0 0.0
  %2381 = vmatprep.subr.mxu0 0.0
  %2382 = vmatpush1.msra.mxu0 0.0
  %2383 = vmatprep.subr.mxu0 0.0
  %2384 = vmatpush1.msra.mxu0 0.0
  %2385 = vmatprep.subr.mxu0 0.0
  %2386 = vmatpush1.msra.mxu0 0.0
  %2387 = vmatprep.subr.mxu0 0.0
  %2388 = vmatpush1.msra.mxu0 0.0
  %2389 = vmatprep.subr.mxu0 0.0
  %2390 = vmatpush1.msra.mxu0 %v384
  %2391 = vmatprep.subr.mxu0 0.0
  %2392 = vmatpush1.msra.mxu0 %v383
  %2393 = vmatprep.subr.mxu0 0.0
  %2394 = vmatpush1.msra.mxu0 %v382
  %2395 = vmatprep.subr.mxu0 0.0
  %2396 = vmatpush1.msra.mxu0 %v381
  %2397 = vmatprep.subr.mxu0 0.0
  %2398 = vmatpush2.msra.mxu0 0.0
  %2399 = vmatprep.subr.mxu0 0.0
  %2400 = vmatpush2.msra.mxu0 0.0
  %2401 = vmatprep.subr.mxu0 0.0
  %2402 = vmatpush2.msra.mxu0 0.0
  %2403 = vmatprep.subr.mxu0 0.0
  %2404 = vmatpush2.msra.mxu0 0.0
  %2405 = vmatprep.subr.mxu0 0.0
  %2406 = vmatpush2.msra.mxu0 0.0
  %2407 = vmatprep.subr.mxu0 0.0
  %2408 = vmatpush2.msra.mxu0 0.0
  %2409 = vmatprep.subr.mxu0 0.0
  %2410 = vmatpush2.msra.mxu0 0.0
  %2411 = vmatprep.subr.mxu0 0.0
  %2412 = vmatpush2.msra.mxu0 0.0
  %2413 = vmatprep.subr.mxu0 0.0
  %2414 = vmatpush2.msra.mxu0 0.0
  %2415 = vmatprep.subr.mxu0 0.0
  %2416 = vmatpush2.msra.mxu0 0.0
  %2417 = vmatprep.subr.mxu0 0.0
  %2418 = vmatpush2.msra.mxu0 0.0
  %2419 = vmatprep.subr.mxu0 0.0
  %2420 = vmatpush2.msra.mxu0 0.0
  %2421 = vmatprep.subr.mxu0 0.0
  %2422 = vmatpush2.msra.mxu0 0.0
  %2423 = vmatprep.subr.mxu0 0.0
  %2424 = vmatpush2.msra.mxu0 0.0
  %2425 = vmatprep.subr.mxu0 0.0
  %2426 = vmatpush2.msra.mxu0 0.0
  %2427 = vmatprep.subr.mxu0 0.0
  %2428 = vmatpush2.msra.mxu0 0.0
  %2429 = vmatprep.mubr.f32.mxu0 0.0
  %2430 = vmatmul.mubr.f32.gmra.mxu0 %v2187
  %v2431 = vpop.f32.mrf.mxu0
  %v2432 = vadd.f32 0.0, %v2431
  %v2433 = vpop.f32.mrf.mxu0
  %2434 = vdwg.mxu0
  %v2435 = vadd.f32 %v378, %v2432
  %v2436 = vadd.f32 %v2435, %v2435
  %v2437 = vsel %vm396, %v2436, %v2435
  %v2438 = vxor.u32 %v2437, 2147483648
  %v2439 = vmul.f32 %v2438, 1.442695
  %v2440 = vpow.pop %v2439
  %v2441 = vadd.f32 %v2440, 1.0
  %v2442 = vrcp.pop %v2441
  %v2443 = vmul.f32 1.0, %v2442
  %v2444 = vadd.f32 %v2443, %v2443
  %v2445 = vsub.f32 %v2444, 1.0
  %v2446 = vsel %vm396, %v2445, %v2443
  %v2447 = vmul.f32 %v2446, %v2177
  %2449 = vrot.lane.b32.xlu0 %v2446, 64
  %v2450 = vpop.permute.xlu0 %2449
  %v2452 = vmul.f32 %v2446, %v2450
  %2454 = vrot.lane.b32.xlu0 %v2452, 32
  %v2455 = vpop.permute.xlu0 %2454
  %v2457 = vadd.f32 %v2447, %v2455
  %v2458 = vtanh.pop %v2457
  %2460 = vrot.lane.b32.xlu0 %v2458, 64
  %v2461 = vpop.permute.xlu0 %2460
  %v2463 = vmul.f32 %v2446, %v2461
  %2465 = vrot.lane.b32.xlu0 %v2463, 32
  %v2466 = vpop.permute.xlu0 %2465
  %v2467 = vsel %vm397, %v2466, 0
  %2469 = vmatprep.subr.mxu0 0.0
  %2470 = vmatpush1.msra.mxu0 0.0
  %2471 = vmatprep.subr.mxu0 0.0
  %2472 = vmatpush1.msra.mxu0 0.0
  %2473 = vmatprep.subr.mxu0 0.0
  %2474 = vmatpush1.msra.mxu0 0.0
  %2475 = vmatprep.subr.mxu0 0.0
  %2476 = vmatpush1.msra.mxu0 0.0
  %2477 = vmatprep.subr.mxu0 0.0
  %2478 = vmatpush1.msra.mxu0 0.0
  %2479 = vmatprep.subr.mxu0 0.0
  %2480 = vmatpush1.msra.mxu0 0.0
  %2481 = vmatprep.subr.mxu0 0.0
  %2482 = vmatpush1.msra.mxu0 0.0
  %2483 = vmatprep.subr.mxu0 0.0
  %2484 = vmatpush1.msra.mxu0 0.0
  %2485 = vmatprep.subr.mxu0 0.0
  %2486 = vmatpush1.msra.mxu0 0.0
  %2487 = vmatprep.subr.mxu0 0.0
  %2488 = vmatpush1.msra.mxu0 0.0
  %2489 = vmatprep.subr.mxu0 0.0
  %2490 = vmatpush1.msra.mxu0 0.0
  %2491 = vmatprep.subr.mxu0 0.0
  %2492 = vmatpush1.msra.mxu0 0.0
  %2493 = vmatprep.subr.mxu0 0.0
  %2494 = vmatpush1.msra.mxu0 %v388
  %2495 = vmatprep.subr.mxu0 0.0
  %2496 = vmatpush1.msra.mxu0 %v387
  %2497 = vmatprep.subr.mxu0 0.0
  %2498 = vmatpush1.msra.mxu0 %v386
  %2499 = vmatprep.subr.mxu0 0.0
  %2500 = vmatpush1.msra.mxu0 %v385
  %2501 = vmatprep.subr.mxu0 0.0
  %2502 = vmatpush2.msra.mxu0 0.0
  %2503 = vmatprep.subr.mxu0 0.0
  %2504 = vmatpush2.msra.mxu0 0.0
  %2505 = vmatprep.subr.mxu0 0.0
  %2506 = vmatpush2.msra.mxu0 0.0
  %2507 = vmatprep.subr.mxu0 0.0
  %2508 = vmatpush2.msra.mxu0 0.0
  %2509 = vmatprep.subr.mxu0 0.0
  %2510 = vmatpush2.msra.mxu0 0.0
  %2511 = vmatprep.subr.mxu0 0.0
  %2512 = vmatpush2.msra.mxu0 0.0
  %2513 = vmatprep.subr.mxu0 0.0
  %2514 = vmatpush2.msra.mxu0 0.0
  %2515 = vmatprep.subr.mxu0 0.0
  %2516 = vmatpush2.msra.mxu0 0.0
  %2517 = vmatprep.subr.mxu0 0.0
  %2518 = vmatpush2.msra.mxu0 0.0
  %2519 = vmatprep.subr.mxu0 0.0
  %2520 = vmatpush2.msra.mxu0 0.0
  %2521 = vmatprep.subr.mxu0 0.0
  %2522 = vmatpush2.msra.mxu0 0.0
  %2523 = vmatprep.subr.mxu0 0.0
  %2524 = vmatpush2.msra.mxu0 0.0
  %2525 = vmatprep.subr.mxu0 0.0
  %2526 = vmatpush2.msra.mxu0 0.0
  %2527 = vmatprep.subr.mxu0 0.0
  %2528 = vmatpush2.msra.mxu0 0.0
  %2529 = vmatprep.subr.mxu0 0.0
  %2530 = vmatpush2.msra.mxu0 0.0
  %2531 = vmatprep.subr.mxu0 0.0
  %2532 = vmatpush2.msra.mxu0 0.0
  %2533 = vmatprep.mubr.f32.mxu0 0.0
  %2534 = vmatmul.mubr.f32.gmra.mxu0 %v2467
  %v2535 = vpop.f32.mrf.mxu0
  %v2536 = vadd.f32 0.0, %v2535
  %v2537 = vpop.f32.mrf.mxu0
  %2538 = vdwg.mxu0
  %v2539 = vsel %vm397, %v2362, 0
  %2541 = vmatprep.subr.mxu0 0.0
  %2542 = vmatpush1.msra.mxu0 0.0
  %2543 = vmatprep.subr.mxu0 0.0
  %2544 = vmatpush1.msra.mxu0 0.0
  %2545 = vmatprep.subr.mxu0 0.0
  %2546 = vmatpush1.msra.mxu0 0.0
  %2547 = vmatprep.subr.mxu0 0.0
  %2548 = vmatpush1.msra.mxu0 0.0
  %2549 = vmatprep.subr.mxu0 0.0
  %2550 = vmatpush1.msra.mxu0 0.0
  %2551 = vmatprep.subr.mxu0 0.0
  %2552 = vmatpush1.msra.mxu0 0.0
  %2553 = vmatprep.subr.mxu0 0.0
  %2554 = vmatpush1.msra.mxu0 0.0
  %2555 = vmatprep.subr.mxu0 0.0
  %2556 = vmatpush1.msra.mxu0 0.0
  %2557 = vmatprep.subr.mxu0 0.0
  %2558 = vmatpush1.msra.mxu0 0.0
  %2559 = vmatprep.subr.mxu0 0.0
  %2560 = vmatpush1.msra.mxu0 0.0
  %2561 = vmatprep.subr.mxu0 0.0
  %2562 = vmatpush1.msra.mxu0 0.0
  %2563 = vmatprep.subr.mxu0 0.0
  %2564 = vmatpush1.msra.mxu0 0.0
  %2565 = vmatprep.subr.mxu0 0.0
  %2566 = vmatpush1.msra.mxu0 %v392
  %2567 = vmatprep.subr.mxu0 0.0
  %2568 = vmatpush1.msra.mxu0 %v391
  %2569 = vmatprep.subr.mxu0 0.0
  %2570 = vmatpush1.msra.mxu0 %v390
  %2571 = vmatprep.subr.mxu0 0.0
  %2572 = vmatpush1.msra.mxu0 %v389
  %2573 = vmatprep.subr.mxu0 0.0
  %2574 = vmatpush2.msra.mxu0 0.0
  %2575 = vmatprep.subr.mxu0 0.0
  %2576 = vmatpush2.msra.mxu0 0.0
  %2577 = vmatprep.subr.mxu0 0.0
  %2578 = vmatpush2.msra.mxu0 0.0
  %2579 = vmatprep.subr.mxu0 0.0
  %2580 = vmatpush2.msra.mxu0 0.0
  %2581 = vmatprep.subr.mxu0 0.0
  %2582 = vmatpush2.msra.mxu0 0.0
  %2583 = vmatprep.subr.mxu0 0.0
  %2584 = vmatpush2.msra.mxu0 0.0
  %2585 = vmatprep.subr.mxu0 0.0
  %2586 = vmatpush2.msra.mxu0 0.0
  %2587 = vmatprep.subr.mxu0 0.0
  %2588 = vmatpush2.msra.mxu0 0.0
  %2589 = vmatprep.subr.mxu0 0.0
  %2590 = vmatpush2.msra.mxu0 0.0
  %2591 = vmatprep.subr.mxu0 0.0
  %2592 = vmatpush2.msra.mxu0 0.0
  %2593 = vmatprep.subr.mxu0 0.0
  %2594 = vmatpush2.msra.mxu0 0.0
  %2595 = vmatprep.subr.mxu0 0.0
  %2596 = vmatpush2.msra.mxu0 0.0
  %2597 = vmatprep.subr.mxu0 0.0
  %2598 = vmatpush2.msra.mxu0 0.0
  %2599 = vmatprep.subr.mxu0 0.0
  %2600 = vmatpush2.msra.mxu0 0.0
  %2601 = vmatprep.subr.mxu0 0.0
  %2602 = vmatpush2.msra.mxu0 0.0
  %2603 = vmatprep.subr.mxu0 0.0
  %2604 = vmatpush2.msra.mxu0 0.0
  %2605 = vmatprep.mubr.f32.mxu0 0.0
  %2606 = vmatmul.mubr.f32.gmra.mxu0 %v2539
  %v2607 = vpop.f32.mrf.mxu0
  %v2608 = vadd.f32 %v2536, %v2607
  %v2609 = vpop.f32.mrf.mxu0
  %2610 = vdwg.mxu0
  %v2611 = vadd.f32 %v2608, %v649
  %v2612 = vadd.f32 %v2611, %v2611
  %v2613 = vsel %vm396, %v2612, %v2611
  %v2614 = vxor.u32 %v2613, 2147483648
  %v2615 = vmul.f32 %v2614, 1.442695
  %v2616 = vpow.pop %v2615
  %v2617 = vadd.f32 %v2616, 1.0
  %v2618 = vrcp.pop %v2617
  %v2619 = vmul.f32 1.0, %v2618
  %v2620 = vadd.f32 %v2619, %v2619
  %v2621 = vsub.f32 %v2620, 1.0
  %v2622 = vsel %vm396, %v2621, %v2619
  %v2623 = vmul.f32 %v2622, %v2353
  %2625 = vrot.lane.b32.xlu0 %v2622, 64
  %v2626 = vpop.permute.xlu0 %2625
  %v2628 = vmul.f32 %v2622, %v2626
  %2630 = vrot.lane.b32.xlu0 %v2628, 32
  %v2631 = vpop.permute.xlu0 %2630
  %v2633 = vadd.f32 %v2623, %v2631
  %v2634 = vtanh.pop %v2633
  %2636 = vrot.lane.b32.xlu0 %v2634, 64
  %v2637 = vpop.permute.xlu0 %2636
  %v2639 = vmul.f32 %v2622, %v2637
  %2641 = vrot.lane.b32.xlu0 %v2639, 32
  %v2642 = vpop.permute.xlu0 %2641
  %2644 = vst.msk [vmem:[#allocation2 + $0x38] sm:$0xff] %vm397, %v2642
  %v2645 = vld [vmem:[#allocation2] sm:$0xff]
  %v2646 = vld [vmem:[#allocation2 + $0x8] sm:$0xff]
  %v2647 = vld [vmem:[#allocation2 + $0x10] sm:$0xff]
  %v2648 = vld [vmem:[#allocation2 + $0x18] sm:$0xff]
  %v2649 = vld [vmem:[#allocation2 + $0x20] sm:$0xff]
  %v2650 = vld [vmem:[#allocation2 + $0x28] sm:$0xff]
  %v2651 = vld [vmem:[#allocation2 + $0x30] sm:$0xff]
  %v2652 = vld [vmem:[#allocation2 + $0x38] sm:$0xff]
  %v2653 = vld [vmem:[%s8] sm:$0xff]
  %v2654 = vld [vmem:[%s8 + $0x8] sm:$0xff]
  %v2655 = vld [vmem:[%s8 + $0x10] sm:$0xff]
  %v2656 = vld [vmem:[%s8 + $0x18] sm:$0xff]
  %v2657 = vld [vmem:[#allocation3] sm:$0x1]
  %v2659 = vlaneseq
  %v2660 = vshrl.u32 %v2659, 7
  %v2661 = vsub.s32 0, %v2660
  %v2662 = vrot.slane %v2657, %v2661
  %v2665 = vsel %vm397, %v2645, 0
  %v2668 = vsel %vm397, %v2646, 0
  %v2671 = vsel %vm397, %v2647, 0
  %v2674 = vsel %vm397, %v2648, 0
  %v2677 = vsel %vm397, %v2649, 0
  %v2680 = vsel %vm397, %v2650, 0
  %v2683 = vsel %vm397, %v2651, 0
  %v2686 = vsel %vm397, %v2652, 0
  %2688 = vmatprep.subr.mxu0 0.0
  %2689 = vmatpush1.msra.mxu0 0.0
  %2690 = vmatprep.subr.mxu0 0.0
  %2691 = vmatpush1.msra.mxu0 0.0
  %2692 = vmatprep.subr.mxu0 0.0
  %2693 = vmatpush1.msra.mxu0 0.0
  %2694 = vmatprep.subr.mxu0 0.0
  %2695 = vmatpush1.msra.mxu0 0.0
  %2696 = vmatprep.subr.mxu0 0.0
  %2697 = vmatpush1.msra.mxu0 0.0
  %2698 = vmatprep.subr.mxu0 0.0
  %2699 = vmatpush1.msra.mxu0 0.0
  %2700 = vmatprep.subr.mxu0 0.0
  %2701 = vmatpush1.msra.mxu0 0.0
  %2702 = vmatprep.subr.mxu0 0.0
  %2703 = vmatpush1.msra.mxu0 0.0
  %2704 = vmatprep.subr.mxu0 0.0
  %2705 = vmatpush1.msra.mxu0 0.0
  %2706 = vmatprep.subr.mxu0 0.0
  %2707 = vmatpush1.msra.mxu0 0.0
  %2708 = vmatprep.subr.mxu0 0.0
  %2709 = vmatpush1.msra.mxu0 0.0
  %2710 = vmatprep.subr.mxu0 0.0
  %2711 = vmatpush1.msra.mxu0 0.0
  %2712 = vmatprep.subr.mxu0 0.0
  %2713 = vmatpush1.msra.mxu0 %v2656
  %2714 = vmatprep.subr.mxu0 0.0
  %2715 = vmatpush1.msra.mxu0 %v2655
  %2716 = vmatprep.subr.mxu0 0.0
  %2717 = vmatpush1.msra.mxu0 %v2654
  %2718 = vmatprep.subr.mxu0 0.0
  %2719 = vmatpush1.msra.mxu0 %v2653
  %2720 = vmatprep.subr.mxu0 0.0
  %2721 = vmatpush2.msra.mxu0 0.0
  %2722 = vmatprep.subr.mxu0 0.0
  %2723 = vmatpush2.msra.mxu0 0.0
  %2724 = vmatprep.subr.mxu0 0.0
  %2725 = vmatpush2.msra.mxu0 0.0
  %2726 = vmatprep.subr.mxu0 0.0
  %2727 = vmatpush2.msra.mxu0 0.0
  %2728 = vmatprep.subr.mxu0 0.0
  %2729 = vmatpush2.msra.mxu0 0.0
  %2730 = vmatprep.subr.mxu0 0.0
  %2731 = vmatpush2.msra.mxu0 0.0
  %2732 = vmatprep.subr.mxu0 0.0
  %2733 = vmatpush2.msra.mxu0 0.0
  %2734 = vmatprep.subr.mxu0 0.0
  %2735 = vmatpush2.msra.mxu0 0.0
  %2736 = vmatprep.subr.mxu0 0.0
  %2737 = vmatpush2.msra.mxu0 0.0
  %2738 = vmatprep.subr.mxu0 0.0
  %2739 = vmatpush2.msra.mxu0 0.0
  %2740 = vmatprep.subr.mxu0 0.0
  %2741 = vmatpush2.msra.mxu0 0.0
  %2742 = vmatprep.subr.mxu0 0.0
  %2743 = vmatpush2.msra.mxu0 0.0
  %2744 = vmatprep.subr.mxu0 0.0
  %2745 = vmatpush2.msra.mxu0 0.0
  %2746 = vmatprep.subr.mxu0 0.0
  %2747 = vmatpush2.msra.mxu0 0.0
  %2748 = vmatprep.subr.mxu0 0.0
  %2749 = vmatpush2.msra.mxu0 0.0
  %2750 = vmatprep.subr.mxu0 0.0
  %2751 = vmatpush2.msra.mxu0 0.0
  %2752 = vmatprep.mubr.f32.mxu0 0.0
  %2753 = vmatmul.mubr.f32.gmra.mxu0 %v2665
  %v2754 = vpop.f32.mrf.mxu0
  %v2755 = vadd.f32 %v2662, %v2754
  %v2756 = vpop.f32.mrf.mxu0
  %2757 = vmatprep.mubr.f32.mxu0 0.0
  %2758 = vmatmul.mubr.f32.gmra.mxu0 %v2668
  %v2759 = vpop.f32.mrf.mxu0
  %v2760 = vadd.f32 %v2662, %v2759
  %v2761 = vpop.f32.mrf.mxu0
  %2762 = vmatprep.mubr.f32.mxu0 0.0
  %2763 = vmatmul.mubr.f32.gmra.mxu0 %v2671
  %v2764 = vpop.f32.mrf.mxu0
  %v2765 = vadd.f32 %v2662, %v2764
  %v2766 = vpop.f32.mrf.mxu0
  %2767 = vmatprep.mubr.f32.mxu0 0.0
  %2768 = vmatmul.mubr.f32.gmra.mxu0 %v2674
  %v2769 = vpop.f32.mrf.mxu0
  %v2770 = vadd.f32 %v2662, %v2769
  %v2771 = vpop.f32.mrf.mxu0
  %2772 = vmatprep.mubr.f32.mxu0 0.0
  %2773 = vmatmul.mubr.f32.gmra.mxu0 %v2677
  %v2774 = vpop.f32.mrf.mxu0
  %v2775 = vadd.f32 %v2662, %v2774
  %v2776 = vpop.f32.mrf.mxu0
  %2777 = vmatprep.mubr.f32.mxu0 0.0
  %2778 = vmatmul.mubr.f32.gmra.mxu0 %v2680
  %v2779 = vpop.f32.mrf.mxu0
  %v2780 = vadd.f32 %v2662, %v2779
  %v2781 = vpop.f32.mrf.mxu0
  %2782 = vmatprep.mubr.f32.mxu0 0.0
  %2783 = vmatmul.mubr.f32.gmra.mxu0 %v2683
  %v2784 = vpop.f32.mrf.mxu0
  %v2785 = vadd.f32 %v2662, %v2784
  %v2786 = vpop.f32.mrf.mxu0
  %2787 = vmatprep.mubr.f32.mxu0 0.0
  %2788 = vmatmul.mubr.f32.gmra.mxu0 %v2686
  %v2789 = vpop.f32.mrf.mxu0
  %v2790 = vadd.f32 %v2662, %v2789
  %v2791 = vpop.f32.mrf.mxu0
  %2792 = vdwg.mxu0
  %v2793 = vmax.f32 %v2755, %v2760
  %v2794 = vmax.f32 %v2793, %v2765
  %v2795 = vmax.f32 %v2794, %v2770
  %v2796 = vmax.f32 %v2795, %v2775
  %v2797 = vmax.f32 %v2796, %v2780
  %v2798 = vmax.f32 %v2797, %v2785
  %v2799 = vmax.f32 %v2798, %v2790
  %v2800 = vsub.f32 %v2755, %v2799
  %v2801 = vmul.f32 %v2800, 1.442695
  %v2802 = vpow.pop %v2801
  %v2803 = vsub.f32 %v2760, %v2799
  %v2804 = vmul.f32 %v2803, 1.442695
  %v2805 = vpow.pop %v2804
  %v2806 = vsub.f32 %v2765, %v2799
  %v2807 = vmul.f32 %v2806, 1.442695
  %v2808 = vpow.pop %v2807
  %v2809 = vsub.f32 %v2770, %v2799
  %v2810 = vmul.f32 %v2809, 1.442695
  %v2811 = vpow.pop %v2810
  %v2812 = vsub.f32 %v2775, %v2799
  %v2813 = vmul.f32 %v2812, 1.442695
  %v2814 = vpow.pop %v2813
  %v2815 = vsub.f32 %v2780, %v2799
  %v2816 = vmul.f32 %v2815, 1.442695
  %v2817 = vpow.pop %v2816
  %v2818 = vsub.f32 %v2785, %v2799
  %v2819 = vmul.f32 %v2818, 1.442695
  %v2820 = vpow.pop %v2819
  %v2821 = vsub.f32 %v2790, %v2799
  %v2822 = vmul.f32 %v2821, 1.442695
  %v2823 = vpow.pop %v2822
  %v2824 = vadd.f32 %v2802, %v2805
  %v2825 = vadd.f32 %v2824, %v2808
  %v2826 = vadd.f32 %v2825, %v2811
  %v2827 = vadd.f32 %v2826, %v2814
  %v2828 = vadd.f32 %v2827, %v2817
  %v2829 = vadd.f32 %v2828, %v2820
  %v2830 = vadd.f32 %v2829, %v2823
  %v2831 = vrcp.pop %v2830
  %v2832 = vmul.f32 1.0, %v2831
  %v2833 = vmul.f32 %v2802, %v2832
  %2835 = vset.pattern.permute.xlu0 0
  %2836 = vperm.xlu0 %2835, %v2833
  %v2837 = vpop.permute.xlu0 %2836
  %v2839 = vmul.f32 %v2837, %v2645
  %v2840 = vmul.f32 %v2805, %v2832
  %2842 = vset.pattern.permute.xlu0 0
  %2843 = vperm.xlu0 %2842, %v2840
  %v2844 = vpop.permute.xlu0 %2843
  %v2846 = vmul.f32 %v2844, %v2646
  %v2847 = vadd.f32 %v2839, %v2846
  %v2848 = vmul.f32 %v2808, %v2832
  %2850 = vset.pattern.permute.xlu0 0
  %2851 = vperm.xlu0 %2850, %v2848
  %v2852 = vpop.permute.xlu0 %2851
  %v2854 = vmul.f32 %v2852, %v2647
  %v2855 = vadd.f32 %v2847, %v2854
  %v2856 = vmul.f32 %v2811, %v2832
  %2858 = vset.pattern.permute.xlu0 0
  %2859 = vperm.xlu0 %2858, %v2856
  %v2860 = vpop.permute.xlu0 %2859
  %v2862 = vmul.f32 %v2860, %v2648
  %v2863 = vadd.f32 %v2855, %v2862
  %v2864 = vmul.f32 %v2814, %v2832
  %2866 = vset.pattern.permute.xlu0 0
  %2867 = vperm.xlu0 %2866, %v2864
  %v2868 = vpop.permute.xlu0 %2867
  %v2870 = vmul.f32 %v2868, %v2649
  %v2871 = vadd.f32 %v2863, %v2870
  %v2872 = vmul.f32 %v2817, %v2832
  %2874 = vset.pattern.permute.xlu0 0
  %2875 = vperm.xlu0 %2874, %v2872
  %v2876 = vpop.permute.xlu0 %2875
  %v2878 = vmul.f32 %v2876, %v2650
  %v2879 = vadd.f32 %v2871, %v2878
  %v2880 = vmul.f32 %v2820, %v2832
  %2882 = vset.pattern.permute.xlu0 0
  %2883 = vperm.xlu0 %2882, %v2880
  %v2884 = vpop.permute.xlu0 %2883
  %v2886 = vmul.f32 %v2884, %v2651
  %v2887 = vadd.f32 %v2879, %v2886
  %v2888 = vmul.f32 %v2823, %v2832
  %2890 = vset.pattern.permute.xlu0 0
  %2891 = vperm.xlu0 %2890, %v2888
  %v2892 = vpop.permute.xlu0 %2891
  %v2894 = vmul.f32 %v2892, %v2652
  %v2895 = vadd.f32 %v2887, %v2894
  %v2896 = vld [vmem:[%s10] sm:$0xff]
  %v2897 = vld [vmem:[%s10 + $0x8] sm:$0xff]
  %v2898 = vld [vmem:[%s10 + $0x10] sm:$0xff]
  %v2899 = vld [vmem:[%s10 + $0x18] sm:$0xff]
  %v2900 = vld [vmem:[%s11] sm:$0x1]
  %v2902 = vlaneseq
  %v2903 = vshrl.u32 %v2902, 7
  %v2904 = vsub.s32 0, %v2903
  %v2905 = vrot.slane %v2900, %v2904
  %v2908 = vsel %vm397, %v2895, 0
  %2910 = vmatprep.subr.mxu0 0.0
  %2911 = vmatpush1.msra.mxu0 0.0
  %2912 = vmatprep.subr.mxu0 0.0
  %2913 = vmatpush1.msra.mxu0 0.0
  %2914 = vmatprep.subr.mxu0 0.0
  %2915 = vmatpush1.msra.mxu0 0.0
  %2916 = vmatprep.subr.mxu0 0.0
  %2917 = vmatpush1.msra.mxu0 0.0
  %2918 = vmatprep.subr.mxu0 0.0
  %2919 = vmatpush1.msra.mxu0 0.0
  %2920 = vmatprep.subr.mxu0 0.0
  %2921 = vmatpush1.msra.mxu0 0.0
  %2922 = vmatprep.subr.mxu0 0.0
  %2923 = vmatpush1.msra.mxu0 0.0
  %2924 = vmatprep.subr.mxu0 0.0
  %2925 = vmatpush1.msra.mxu0 0.0
  %2926 = vmatprep.subr.mxu0 0.0
  %2927 = vmatpush1.msra.mxu0 0.0
  %2928 = vmatprep.subr.mxu0 0.0
  %2929 = vmatpush1.msra.mxu0 0.0
  %2930 = vmatprep.subr.mxu0 0.0
  %2931 = vmatpush1.msra.mxu0 0.0
  %2932 = vmatprep.subr.mxu0 0.0
  %2933 = vmatpush1.msra.mxu0 0.0
  %2934 = vmatprep.subr.mxu0 0.0
  %2935 = vmatpush1.msra.mxu0 %v2899
  %2936 = vmatprep.subr.mxu0 0.0
  %2937 = vmatpush1.msra.mxu0 %v2898
  %2938 = vmatprep.subr.mxu0 0.0
  %2939 = vmatpush1.msra.mxu0 %v2897
  %2940 = vmatprep.subr.mxu0 0.0
  %2941 = vmatpush1.msra.mxu0 %v2896
  %2942 = vmatprep.subr.mxu0 0.0
  %2943 = vmatpush2.msra.mxu0 0.0
  %2944 = vmatprep.subr.mxu0 0.0
  %2945 = vmatpush2.msra.mxu0 0.0
  %2946 = vmatprep.subr.mxu0 0.0
  %2947 = vmatpush2.msra.mxu0 0.0
  %2948 = vmatprep.subr.mxu0 0.0
  %2949 = vmatpush2.msra.mxu0 0.0
  %2950 = vmatprep.subr.mxu0 0.0
  %2951 = vmatpush2.msra.mxu0 0.0
  %2952 = vmatprep.subr.mxu0 0.0
  %2953 = vmatpush2.msra.mxu0 0.0
  %2954 = vmatprep.subr.mxu0 0.0
  %2955 = vmatpush2.msra.mxu0 0.0
  %2956 = vmatprep.subr.mxu0 0.0
  %2957 = vmatpush2.msra.mxu0 0.0
  %2958 = vmatprep.subr.mxu0 0.0
  %2959 = vmatpush2.msra.mxu0 0.0
  %2960 = vmatprep.subr.mxu0 0.0
  %2961 = vmatpush2.msra.mxu0 0.0
  %2962 = vmatprep.subr.mxu0 0.0
  %2963 = vmatpush2.msra.mxu0 0.0
  %2964 = vmatprep.subr.mxu0 0.0
  %2965 = vmatpush2.msra.mxu0 0.0
  %2966 = vmatprep.subr.mxu0 0.0
  %2967 = vmatpush2.msra.mxu0 0.0
  %2968 = vmatprep.subr.mxu0 0.0
  %2969 = vmatpush2.msra.mxu0 0.0
  %2970 = vmatprep.subr.mxu0 0.0
  %2971 = vmatpush2.msra.mxu0 0.0
  %2972 = vmatprep.subr.mxu0 0.0
  %2973 = vmatpush2.msra.mxu0 0.0
  %2974 = vmatprep.mubr.f32.mxu0 0.0
  %2975 = vmatmul.mubr.f32.gmra.mxu0 %v2908
  %v2976 = vpop.f32.mrf.mxu0
  %v2977 = vadd.f32 %v2905, %v2976
  %v2978 = vpop.f32.mrf.mxu0
  %2979 = vdwg.mxu0
  %vm2980 = vcmask 31744
  %2981 = vst.msk [vmem:[%s12] sm:$0xff] %vm2980, %v2977
  // Predicated region
  $region50: #{textclass_forward.1} parent=0 // pred_check
    _
  $region51: #{textclass_forward.1} parent=0 // pred_check_branch
    %2983 = sbr.rel (0) target = $region53
  $region52: #{textclass_forward.1} parent=0 // pred_region
    _
  $region53: #{textclass_forward.1} parent=0 // pred_fallthru
    _
  // Predicated region
  $region54: #{textclass_forward.1} parent=0 // pred_check
    _
  $region55: #{textclass_forward.1} parent=0 // pred_check_branch
    %2985 = sbr.rel (0) target = $region57
  $region56: #{textclass_forward.1} parent=0 // pred_region
    _
  $region57: #{textclass_forward.1} parent=0 // pred_fallthru
    _

</llo_original>
